<compile_context>
chip_gen: v7x
topology: tpu7x:2x2x1
jax: 0.10.0
libtpu: 0.0.40
codegen_flags: <defaults>
</compile_context>

<pallas_src>
import functools
import math
import numpy as np

import jax
import jax.numpy as jnp
from jax import lax
from jax.experimental import pallas as pl
from jax.experimental.pallas import tpu as pltpu


# ---------------------------------------------------------------------------
# Pallas kernel: one batch; both attentions; all heads fused
# ---------------------------------------------------------------------------
def _local_pair_attn_kernel(key_ref, val_ref, ent_ref, mid_ref, eid_ref,
                            wq_h_ref, wk_h_ref, wv_h_ref,
                            wq_t_ref, wk_t_ref, wv_t_ref,
                            out_h_ref, out_t_ref, *, num_heads, scale):
    k = key_ref[0]      # (M, D)  mention_sen_rep  (attention keys)
    v = val_ref[0]      # (M, D)  mentions         (attention values)
    ents = ent_ref[0]   # (E, D)  unique entity queries
    m_ids = mid_ref[0]  # (1, M)  int32 mention -> entity id   (pad = -1)
    e_ids = eid_ref[0]  # (E, 1)  int32 entity ids              (pad = -2)

    E = ents.shape[0]
    M = k.shape[0]
    D = k.shape[1]
    d = D // num_heads
    P = E * E

    # Mask built in-kernel from ids (1.0 = exclude); avoids DMA-ing the
    # E*E-expanded float mask from HBM.  pair (i, j) sits at row i*E + j.
    maskf = (m_ids != e_ids).astype(jnp.float32)                              # (E, M)
    mask_rows = jnp.broadcast_to(maskf[:, None, :], (E, E, M)).reshape(P, M)  # uses i
    mask_cols = jnp.broadcast_to(maskf[None, :, :], (E, E, M)).reshape(P, M)  # uses j

    def attention(wq, wk, wv, query_is_col, pair_mask, out_ref):
        # Full-D projections: lane-dense MXU matmuls, all heads at once.
        qh = jnp.dot(ents, wq, preferred_element_type=jnp.float32)   # (E, D)
        kh = jnp.dot(k, wk, preferred_element_type=jnp.float32)      # (M, D)
        vh = jnp.dot(v, wv, preferred_element_type=jnp.float32)      # (M, D)

        ctx_heads = []
        for h in range(num_heads):                         # H is small & static
            qs = qh[:, h * d:(h + 1) * d]                  # (E, d)
            ks = kh[:, h * d:(h + 1) * d]                  # (M, d)
            vs = vh[:, h * d:(h + 1) * d]                  # (M, d)
            # Scores for only the E *unique* query entities (contract d directly,
            # no explicit transpose of ks).
            s = lax.dot_general(qs, ks, (((1,), (1,)), ((), ())),
                                preferred_element_type=jnp.float32) * scale  # (E, M)
            if query_is_col:   # pair (i, j): query entity = j
                sp = jnp.broadcast_to(s[None, :, :], (E, E, M)).reshape(P, M)
            else:              # pair (i, j): query entity = i
                sp = jnp.broadcast_to(s[:, None, :], (E, E, M)).reshape(P, M)
            sp = jnp.where(pair_mask > 0.5, jnp.float32(-1e30), sp)
            sp = sp - jnp.max(sp, axis=-1, keepdims=True)
            es = jnp.exp(sp)
            attn = es * pl.reciprocal(jnp.sum(es, axis=-1, keepdims=True),
                                      approx=True)
            ctx_heads.append(jnp.dot(attn, vs,
                                     preferred_element_type=jnp.float32))    # (P, d)
        # Single lane-dense store of the concatenated heads.
        out_ref[0] = jnp.concatenate(ctx_heads, axis=-1)                      # (P, D)

    # head side: query = entity j (column index), mask indexed by row i
    attention(wq_h_ref[...], wk_h_ref[...], wv_h_ref[...], True, mask_rows, out_h_ref)
    # tail side: query = entity i (row index),   mask indexed by column j
    attention(wq_t_ref[...], wk_t_ref[...], wv_t_ref[...], False, mask_cols, out_t_ref)


def local_pair_attention(key, value, ents, m_ids, e_ids, weights, num_heads):
    """key/value: (B, M, D); ents: (B, E, D); m_ids: (B, 1, M) int32;
    e_ids: (B, E, 1) int32; weights: 6 x (D, D) in `x @ W` convention.
    Returns (pair_rep_h, pair_rep_t), each (B, E*E, D)."""
    B, M, D = key.shape
    E = ents.shape[1]
    P = E * E
    scale = 1.0 / math.sqrt(D // num_heads)
    wq_h, wk_h, wv_h, wq_t, wk_t, wv_t = weights

    kernel = functools.partial(_local_pair_attn_kernel,
                               num_heads=num_heads, scale=scale)

    def batch3(r, c):
        return pl.BlockSpec((1, r, c), lambda b: (b, 0, 0))

    wspec = pl.BlockSpec((D, D), lambda b: (0, 0))

    out_h, out_t = pl.pallas_call(
        kernel,
        out_shape=(jax.ShapeDtypeStruct((B, P, D), jnp.float32),
                   jax.ShapeDtypeStruct((B, P, D), jnp.float32)),
        grid_spec=pltpu.PrefetchScalarGridSpec(
            num_scalar_prefetch=0,
            grid=(B,),
            in_specs=[
                batch3(M, D),          # key   (mention_sen_rep)
                batch3(M, D),          # value (mentions)
                batch3(E, D),          # unique entity queries
                batch3(1, M),          # mention entity ids (int32)
                batch3(E, 1),          # entity ids          (int32)
                wspec, wspec, wspec,   # head-side Wq / Wk / Wv
                wspec, wspec, wspec,   # tail-side Wq / Wk / Wv
            ],
            out_specs=(batch3(P, D), batch3(P, D)),
        ),
        compiler_params=pltpu.CompilerParams(
            dimension_semantics=("parallel",)),
    )(key, value, ents, m_ids, e_ids, wq_h, wk_h, wv_h, wq_t, wk_t, wv_t)
    return out_h, out_t


# ---------------------------------------------------------------------------
# Pure-JAX reference MHA (for correctness checking)
# ---------------------------------------------------------------------------
def mha_reference(key, value, query, mask, wq, wk, wv, num_heads):
    B, M, D = key.shape
    P = query.shape[1]
    d = D // num_heads
    q = (query @ wq).reshape(B, P, num_heads, d).transpose(0, 2, 1, 3)
    k = (key @ wk).reshape(B, M, num_heads, d).transpose(0, 2, 1, 3)
    v = (value @ wv).reshape(B, M, num_heads, d).transpose(0, 2, 1, 3)
    scores = jnp.einsum('bhpd,bhmd->bhpm', q, k) / np.sqrt(d)
    scores = jnp.where(mask[:, None, :, :] > 0.5, -1e30, scores)
    attn = jax.nn.softmax(scores, axis=-1)
    ctx = jnp.einsum('bhpm,bhmd->bhpd', attn, v)
    return ctx.transpose(0, 2, 1, 3).reshape(B, P, D)


# ---------------------------------------------------------------------------
# JAX glue mirroring the torch forward
# ---------------------------------------------------------------------------
def split_n_pad_jnp(x, sections, pad_value=0.0):
    sections = [int(s) for s in sections]
    max_len = max(sections)
    chunks, start = [], 0
    for s in sections:
        chunk = x[start:start + s]
        pad_width = [(0, max_len - s)] + [(0, 0)] * (x.ndim - 1)
        chunks.append(jnp.pad(chunk, pad_width, constant_values=pad_value))
        start += s
    return jnp.stack(chunks, axis=0)


def split_n_pad_np(x, sections, pad_value=0):
    sections = [int(s) for s in sections]
    max_len = max(sections)
    chunks, start = [], 0
    for s in sections:
        chunk = x[start:start + s]
        pad_width = [(0, max_len - s)] + [(0, 0)] * (x.ndim - 1)
        chunks.append(np.pad(chunk, pad_width, constant_values=pad_value))
        start += s
    return np.stack(chunks, axis=0)


class LocalRepLayerPallas:
    """Pallas/JAX port of Local_rep_layer."""

    def __init__(self, params, rng_key):
        self.query = params['query']
        self.D = params['rgcn_hidden_dim']
        self.num_heads = params['att_head_num']
        D = self.D
        bound = 1.0 / np.sqrt(D)
        keys = jax.random.split(rng_key, 6)
        u = lambda k: jax.random.uniform(k, (D, D), jnp.float32, -bound, bound)
        # attention over mention_sen_rep/mentions with query_2 (head side)
        self.wq_h, self.wk_h, self.wv_h = u(keys[0]), u(keys[1]), u(keys[2])
        # attention over mention_sen_rep/mentions with query_1 (tail side)
        self.wq_t, self.wk_t, self.wv_t = u(keys[3]), u(keys[4]), u(keys[5])

    def _prep(self, info, section, nodes, global_nodes):
        entities, mentions, sentences = nodes
        section = np.asarray(section)
        info = np.asarray(info)
        entities_p = split_n_pad_jnp(entities, section[:, 0])          # (B, E, D)
        if self.query == 'global':
            entities_p = global_nodes
        E = int(section[:, 0].max())
        mentions_p = split_n_pad_jnp(mentions, section[:, 1])          # (B, M, D)
        mention_sen_rep = jnp.take(sentences, jnp.asarray(info[:, 4]), axis=0)
        mention_sen_rep = split_n_pad_jnp(mention_sen_rep, section[:, 1])  # (B, M, D)
        eid_ranges = split_n_pad_np(np.arange(0, int(info[:, 0].max()) + 1),
                                    section[:, 0], pad_value=-2)       # (B, E)
        info_p = split_n_pad_np(info, section[:, 1], pad_value=-1)     # (B, M, 7)
        return entities_p, mentions_p, mention_sen_rep, eid_ranges, info_p, E

    def __call__(self, info, section, nodes, global_nodes):
        entities_p, mentions_p, mention_sen_rep, eid_ranges, info_p, E = \
            self._prep(info, section, nodes, global_nodes)
        # De-duplicated metadata for the kernel (mask built in-kernel from ids).
        m_ids = jnp.asarray(info_p[:, None, :, 0], jnp.int32)          # (B, 1, M)
        e_ids = jnp.asarray(eid_ranges[:, :, None], jnp.int32)         # (B, E, 1)
        weights = (self.wq_h, self.wk_h, self.wv_h,
                   self.wq_t, self.wk_t, self.wv_t)
        pair_rep_h, pair_rep_t = local_pair_attention(
            mention_sen_rep, mentions_p, entities_p, m_ids, e_ids,
            weights, self.num_heads)
        return pair_rep_h, pair_rep_t

    def reference(self, info, section, nodes, global_nodes):
        """Same forward but with the pure-JAX MHA on the fully expanded
        (E*E) queries/masks (mirrors the torch code) — for verification."""
        entities_p, mentions_p, mention_sen_rep, eid_ranges, info_p, E = \
            self._prep(info, section, nodes, global_nodes)
        B, D = entities_p.shape[0], self.D
        r_idx, c_idx = np.meshgrid(np.arange(E), np.arange(E), indexing='ij')
        query_1 = entities_p[:, r_idx].reshape(B, E * E, D)
        query_2 = entities_p[:, c_idx].reshape(B, E * E, D)
        index_m = (info_p[:, None, :, 0] != eid_ranges[:, :, None])    # (B, E, M)
        Mmax = index_m.shape[-1]
        mask_h = jnp.asarray(
            np.repeat(index_m[:, :, None, :], E, 2).reshape(B, E * E, Mmax), jnp.float32)
        mask_t = jnp.asarray(
            np.repeat(index_m[:, None, :, :], E, 1).reshape(B, E * E, Mmax), jnp.float32)
        h = mha_reference(mention_sen_rep, mentions_p, query_2, mask_h,
                          self.wq_h, self.wk_h, self.wv_h, self.num_heads)
        t = mha_reference(mention_sen_rep, mentions_p, query_1, mask_t,
                          self.wq_t, self.wk_t, self.wv_t, self.num_heads)
        return h, t


# ---------------------------------------------------------------------------
# Demo
# ---------------------------------------------------------------------------
if __name__ == "__main__":
    params = {
        'query': 'init',          # not 'global' -> use split_n_pad entities
        'rgcn_hidden_dim': 32,
        'att_head_num': 4,
        'att_dropout': 0.0,
        'gpu': -1,
    }

    B = 2
    D = params['rgcn_hidden_dim']
    # section: per-document <entity_size, mention_size, sentence_size>
    section = np.array([[3, 4, 3],
                        [3, 5, 3]], dtype=np.int32)
    n_ent = int(section[:, 0].sum())
    n_men = int(section[:, 1].sum())
    n_sen = int(section[:, 2].sum())

    # info: <entity_id, entity_type, start_wid, end_wid, sentence_id, origin_sen_id, node_type>
    info = np.array([
        [0, 1, 0, 2, 0, 0, 1],
        [1, 1, 3, 4, 1, 1, 1],
        [2, 2, 5, 6, 2, 2, 1],
        [0, 1, 7, 8, 0, 0, 1],
        [3, 1, 0, 1, 3, 0, 1],
        [4, 2, 2, 3, 4, 1, 1],
        [5, 1, 4, 5, 5, 2, 1],
        [3, 1, 6, 7, 3, 0, 1],
        [4, 2, 8, 9, 4, 1, 1],
    ], dtype=np.int32)
    assert info.shape[0] == n_men

    root = jax.random.PRNGKey(0)
    k_ent, k_men, k_sen, k_glob, k_params = jax.random.split(root, 5)
    entities = jax.random.normal(k_ent, (n_ent, D), jnp.float32)
    mentions = jax.random.normal(k_men, (n_men, D), jnp.float32)
    sentences = jax.random.normal(k_sen, (n_sen, D), jnp.float32)
    global_nodes = jax.random.normal(k_glob, (B, int(section[:, 0].max()), D), jnp.float32)

    layer = LocalRepLayerPallas(params, k_params)

    rep_h, rep_t = layer(info, section, (entities, mentions, sentences), global_nodes)
    rep_h, rep_t = jax.block_until_ready(rep_h), jax.block_until_ready(rep_t)

    ref_h, ref_t = layer.reference(info, section, (entities, mentions, sentences), global_nodes)
    # Tolerance widened vs. exact f32: the softmax denominator uses the EUP
    # approximate reciprocal (pl.reciprocal(approx=True), ~2^-12 relative).
    np.testing.assert_allclose(np.asarray(rep_h), np.asarray(ref_h), rtol=5e-3, atol=5e-3)
    np.testing.assert_allclose(np.asarray(rep_t), np.asarray(ref_t), rtol=5e-3, atol=5e-3)

    assert rep_h.shape == (B, 3 * 3, D) and rep_t.shape == (B, 3 * 3, D)
    print("KERNEL_OK")
</pallas_src>

<mosaic_0001>
module attributes {stable_mosaic.version = 11 : i64} {
  func.func @_local_pair_attn_kernel(%arg0: i32, %arg1: memref<1x5x32xf32, #tpu.memory_space<vmem>>, %arg2: memref<1x5x32xf32, #tpu.memory_space<vmem>>, %arg3: memref<1x3x32xf32, #tpu.memory_space<vmem>>, %arg4: memref<1x1x5xi32, #tpu.memory_space<vmem>>, %arg5: memref<1x3x1xi32, #tpu.memory_space<vmem>>, %arg6: memref<32x32xf32, #tpu.memory_space<vmem>>, %arg7: memref<32x32xf32, #tpu.memory_space<vmem>>, %arg8: memref<32x32xf32, #tpu.memory_space<vmem>>, %arg9: memref<32x32xf32, #tpu.memory_space<vmem>>, %arg10: memref<32x32xf32, #tpu.memory_space<vmem>>, %arg11: memref<32x32xf32, #tpu.memory_space<vmem>>, %arg12: memref<1x9x32xf32, #tpu.memory_space<vmem>>, %arg13: memref<1x9x32xf32, #tpu.memory_space<vmem>>) attributes {dimension_semantics = [#tpu.dimension_semantics<parallel>], iteration_bounds = array<i64: 2>, scalar_prefetch = 0 : i64, scratch_operands = 0 : i64, tpu.core_type = #tpu.core_type<tc>, window_params = [{transform_indices = @transform_0, window_bounds = array<i64: 1, 5, 32>}, {transform_indices = @transform_1, window_bounds = array<i64: 1, 5, 32>}, {transform_indices = @transform_2, window_bounds = array<i64: 1, 3, 32>}, {transform_indices = @transform_3, window_bounds = array<i64: 1, 1, 5>}, {transform_indices = @transform_4, window_bounds = array<i64: 1, 3, 1>}, {pipeline_mode = #tpu.pipeline_mode<synchronous>, transform_indices = @transform_5, window_bounds = array<i64: 32, 32>}, {pipeline_mode = #tpu.pipeline_mode<synchronous>, transform_indices = @transform_6, window_bounds = array<i64: 32, 32>}, {pipeline_mode = #tpu.pipeline_mode<synchronous>, transform_indices = @transform_7, window_bounds = array<i64: 32, 32>}, {pipeline_mode = #tpu.pipeline_mode<synchronous>, transform_indices = @transform_8, window_bounds = array<i64: 32, 32>}, {pipeline_mode = #tpu.pipeline_mode<synchronous>, transform_indices = @transform_9, window_bounds = array<i64: 32, 32>}, {pipeline_mode = #tpu.pipeline_mode<synchronous>, transform_indices = @transform_10, window_bounds = array<i64: 32, 32>}, {transform_indices = @transform_11, window_bounds = array<i64: 1, 9, 32>}, {transform_indices = @transform_12, window_bounds = array<i64: 1, 9, 32>}]} {
    %c0 = arith.constant 0 : index
    %c0_0 = arith.constant 0 : index
    %c0_1 = arith.constant 0 : index
    %0 = vector.load %arg1[%c0, %c0_0, %c0_1] : memref<1x5x32xf32, #tpu.memory_space<vmem>>, vector<1x5x32xf32>
    %1 = vector.shape_cast %0 : vector<1x5x32xf32> to vector<5x32xf32>
    %c0_2 = arith.constant 0 : index
    %c0_3 = arith.constant 0 : index
    %c0_4 = arith.constant 0 : index
    %2 = vector.load %arg2[%c0_2, %c0_3, %c0_4] : memref<1x5x32xf32, #tpu.memory_space<vmem>>, vector<1x5x32xf32>
    %3 = vector.shape_cast %2 : vector<1x5x32xf32> to vector<5x32xf32>
    %c0_5 = arith.constant 0 : index
    %c0_6 = arith.constant 0 : index
    %c0_7 = arith.constant 0 : index
    %4 = vector.load %arg3[%c0_5, %c0_6, %c0_7] : memref<1x3x32xf32, #tpu.memory_space<vmem>>, vector<1x3x32xf32>
    %5 = vector.shape_cast %4 : vector<1x3x32xf32> to vector<3x32xf32>
    %c0_8 = arith.constant 0 : index
    %c0_9 = arith.constant 0 : index
    %c0_10 = arith.constant 0 : index
    %6 = vector.load %arg4[%c0_8, %c0_9, %c0_10] : memref<1x1x5xi32, #tpu.memory_space<vmem>>, vector<1x1x5xi32>
    %7 = vector.shape_cast %6 : vector<1x1x5xi32> to vector<1x5xi32>
    %c0_11 = arith.constant 0 : index
    %c0_12 = arith.constant 0 : index
    %c0_13 = arith.constant 0 : index
    %8 = vector.load %arg5[%c0_11, %c0_12, %c0_13] : memref<1x3x1xi32, #tpu.memory_space<vmem>>, vector<1x3x1xi32>
    %9 = vector.shape_cast %8 : vector<1x3x1xi32> to vector<3x1xi32>
    %10 = vector.broadcast %7 : vector<1x5xi32> to vector<3x5xi32>
    %11 = vector.broadcast %9 : vector<3x1xi32> to vector<3x5xi32>
    %12 = arith.cmpi ne, %10, %11 : vector<3x5xi32>
    %13 = arith.extui %12 : vector<3x5xi1> to vector<3x5xi32>
    %14 = arith.sitofp %13 : vector<3x5xi32> to vector<3x5xf32>
    %15 = vector.shape_cast %14 : vector<3x5xf32> to vector<3x1x5xf32>
    %16 = vector.shape_cast %15 : vector<3x1x5xf32> to vector<3x1x5xf32>
    %17 = vector.broadcast %16 : vector<3x1x5xf32> to vector<3x3x5xf32>
    %18 = vector.shape_cast %17 : vector<3x3x5xf32> to vector<9x5xf32>
    %19 = vector.shape_cast %14 : vector<3x5xf32> to vector<1x3x5xf32>
    %20 = vector.shape_cast %19 : vector<1x3x5xf32> to vector<1x3x5xf32>
    %21 = vector.broadcast %20 : vector<1x3x5xf32> to vector<3x3x5xf32>
    %22 = vector.shape_cast %21 : vector<3x3x5xf32> to vector<9x5xf32>
    %c0_14 = arith.constant 0 : index
    %c0_15 = arith.constant 0 : index
    %23 = vector.load %arg6[%c0_14, %c0_15] : memref<32x32xf32, #tpu.memory_space<vmem>>, vector<32x32xf32>
    %c0_16 = arith.constant 0 : index
    %c0_17 = arith.constant 0 : index
    %24 = vector.load %arg7[%c0_16, %c0_17] : memref<32x32xf32, #tpu.memory_space<vmem>>, vector<32x32xf32>
    %c0_18 = arith.constant 0 : index
    %c0_19 = arith.constant 0 : index
    %25 = vector.load %arg8[%c0_18, %c0_19] : memref<32x32xf32, #tpu.memory_space<vmem>>, vector<32x32xf32>
    %cst = arith.constant dense<0.000000e+00> : vector<3x32xf32>
    %26 = tpu.matmul %5, %23, %cst {dimension_numbers = #tpu.dot_dimension_numbers<[1], [0], [0], [1], [0, 0, 1, 1], [], []>} : vector<3x32xf32>, vector<32x32xf32>, vector<3x32xf32> -> vector<3x32xf32>
    %cst_20 = arith.constant dense<0.000000e+00> : vector<5x32xf32>
    %27 = tpu.matmul %1, %24, %cst_20 {dimension_numbers = #tpu.dot_dimension_numbers<[1], [0], [0], [1], [0, 0, 1, 1], [], []>} : vector<5x32xf32>, vector<32x32xf32>, vector<5x32xf32> -> vector<5x32xf32>
    %cst_21 = arith.constant dense<0.000000e+00> : vector<5x32xf32>
    %28 = tpu.matmul %3, %25, %cst_21 {dimension_numbers = #tpu.dot_dimension_numbers<[1], [0], [0], [1], [0, 0, 1, 1], [], []>} : vector<5x32xf32>, vector<32x32xf32>, vector<5x32xf32> -> vector<5x32xf32>
    %29 = vector.extract_strided_slice %26 {offsets = [0, 0], sizes = [3, 8], strides = [1, 1]} : vector<3x32xf32> to vector<3x8xf32>
    %30 = vector.extract_strided_slice %27 {offsets = [0, 0], sizes = [5, 8], strides = [1, 1]} : vector<5x32xf32> to vector<5x8xf32>
    %31 = vector.extract_strided_slice %28 {offsets = [0, 0], sizes = [5, 8], strides = [1, 1]} : vector<5x32xf32> to vector<5x8xf32>
    %cst_22 = arith.constant dense<0.000000e+00> : vector<3x5xf32>
    %32 = tpu.matmul %29, %30, %cst_22 {dimension_numbers = #tpu.dot_dimension_numbers<[1], [1], [0], [0], [0, 0, 1, 0], [], []>} : vector<3x8xf32>, vector<5x8xf32>, vector<3x5xf32> -> vector<3x5xf32>
    %cst_23 = arith.constant 0.353553385 : f32
    %33 = vector.broadcast %cst_23 : f32 to vector<3x5xf32>
    %34 = arith.mulf %32, %33 : vector<3x5xf32>
    %35 = vector.shape_cast %34 : vector<3x5xf32> to vector<1x3x5xf32>
    %36 = vector.shape_cast %35 : vector<1x3x5xf32> to vector<1x3x5xf32>
    %37 = vector.broadcast %36 : vector<1x3x5xf32> to vector<3x3x5xf32>
    %38 = vector.shape_cast %37 : vector<3x3x5xf32> to vector<9x5xf32>
    %cst_24 = arith.constant 5.000000e-01 : f32
    %39 = vector.broadcast %cst_24 : f32 to vector<9x5xf32>
    %40 = arith.cmpf ogt, %18, %39 : vector<9x5xf32>
    %cst_25 = arith.constant -1.000000e+30 : f32
    %41 = vector.broadcast %cst_25 : f32 to vector<9x5xf32>
    %42 = arith.select %40, %41, %38 : vector<9x5xi1>, vector<9x5xf32>
    %cst_26 = arith.constant dense<0xFF800000> : vector<9xf32>
    %43 = vector.multi_reduction <maximumf>, %42, %cst_26 [1] : vector<9x5xf32> to vector<9xf32>
    %44 = vector.shape_cast %43 : vector<9xf32> to vector<9x1xf32>
    %45 = vector.broadcast %44 : vector<9x1xf32> to vector<9x5xf32>
    %46 = arith.subf %42, %45 : vector<9x5xf32>
    %47 = math.exp %46 : vector<9x5xf32>
    %cst_27 = arith.constant dense<0.000000e+00> : vector<9xf32>
    %48 = vector.multi_reduction <add>, %47, %cst_27 [1] : vector<9x5xf32> to vector<9xf32>
    %49 = vector.shape_cast %48 : vector<9xf32> to vector<9x1xf32>
    %50 = tpu.reciprocal %49 {approx = true} : vector<9x1xf32> -> vector<9x1xf32>
    %51 = vector.broadcast %50 : vector<9x1xf32> to vector<9x5xf32>
    %52 = arith.mulf %47, %51 : vector<9x5xf32>
    %cst_28 = arith.constant dense<0.000000e+00> : vector<9x8xf32>
    %53 = tpu.matmul %52, %31, %cst_28 {dimension_numbers = #tpu.dot_dimension_numbers<[1], [0], [0], [1], [0, 0, 1, 1], [], []>} : vector<9x5xf32>, vector<5x8xf32>, vector<9x8xf32> -> vector<9x8xf32>
    %54 = vector.extract_strided_slice %26 {offsets = [0, 8], sizes = [3, 8], strides = [1, 1]} : vector<3x32xf32> to vector<3x8xf32>
    %55 = vector.extract_strided_slice %27 {offsets = [0, 8], sizes = [5, 8], strides = [1, 1]} : vector<5x32xf32> to vector<5x8xf32>
    %56 = vector.extract_strided_slice %28 {offsets = [0, 8], sizes = [5, 8], strides = [1, 1]} : vector<5x32xf32> to vector<5x8xf32>
    %cst_29 = arith.constant dense<0.000000e+00> : vector<3x5xf32>
    %57 = tpu.matmul %54, %55, %cst_29 {dimension_numbers = #tpu.dot_dimension_numbers<[1], [1], [0], [0], [0, 0, 1, 0], [], []>} : vector<3x8xf32>, vector<5x8xf32>, vector<3x5xf32> -> vector<3x5xf32>
    %cst_30 = arith.constant 0.353553385 : f32
    %58 = vector.broadcast %cst_30 : f32 to vector<3x5xf32>
    %59 = arith.mulf %57, %58 : vector<3x5xf32>
    %60 = vector.shape_cast %59 : vector<3x5xf32> to vector<1x3x5xf32>
    %61 = vector.shape_cast %60 : vector<1x3x5xf32> to vector<1x3x5xf32>
    %62 = vector.broadcast %61 : vector<1x3x5xf32> to vector<3x3x5xf32>
    %63 = vector.shape_cast %62 : vector<3x3x5xf32> to vector<9x5xf32>
    %cst_31 = arith.constant 5.000000e-01 : f32
    %64 = vector.broadcast %cst_31 : f32 to vector<9x5xf32>
    %65 = arith.cmpf ogt, %18, %64 : vector<9x5xf32>
    %cst_32 = arith.constant -1.000000e+30 : f32
    %66 = vector.broadcast %cst_32 : f32 to vector<9x5xf32>
    %67 = arith.select %65, %66, %63 : vector<9x5xi1>, vector<9x5xf32>
    %cst_33 = arith.constant dense<0xFF800000> : vector<9xf32>
    %68 = vector.multi_reduction <maximumf>, %67, %cst_33 [1] : vector<9x5xf32> to vector<9xf32>
    %69 = vector.shape_cast %68 : vector<9xf32> to vector<9x1xf32>
    %70 = vector.broadcast %69 : vector<9x1xf32> to vector<9x5xf32>
    %71 = arith.subf %67, %70 : vector<9x5xf32>
    %72 = math.exp %71 : vector<9x5xf32>
    %cst_34 = arith.constant dense<0.000000e+00> : vector<9xf32>
    %73 = vector.multi_reduction <add>, %72, %cst_34 [1] : vector<9x5xf32> to vector<9xf32>
    %74 = vector.shape_cast %73 : vector<9xf32> to vector<9x1xf32>
    %75 = tpu.reciprocal %74 {approx = true} : vector<9x1xf32> -> vector<9x1xf32>
    %76 = vector.broadcast %75 : vector<9x1xf32> to vector<9x5xf32>
    %77 = arith.mulf %72, %76 : vector<9x5xf32>
    %cst_35 = arith.constant dense<0.000000e+00> : vector<9x8xf32>
    %78 = tpu.matmul %77, %56, %cst_35 {dimension_numbers = #tpu.dot_dimension_numbers<[1], [0], [0], [1], [0, 0, 1, 1], [], []>} : vector<9x5xf32>, vector<5x8xf32>, vector<9x8xf32> -> vector<9x8xf32>
    %79 = vector.extract_strided_slice %26 {offsets = [0, 16], sizes = [3, 8], strides = [1, 1]} : vector<3x32xf32> to vector<3x8xf32>
    %80 = vector.extract_strided_slice %27 {offsets = [0, 16], sizes = [5, 8], strides = [1, 1]} : vector<5x32xf32> to vector<5x8xf32>
    %81 = vector.extract_strided_slice %28 {offsets = [0, 16], sizes = [5, 8], strides = [1, 1]} : vector<5x32xf32> to vector<5x8xf32>
    %cst_36 = arith.constant dense<0.000000e+00> : vector<3x5xf32>
    %82 = tpu.matmul %79, %80, %cst_36 {dimension_numbers = #tpu.dot_dimension_numbers<[1], [1], [0], [0], [0, 0, 1, 0], [], []>} : vector<3x8xf32>, vector<5x8xf32>, vector<3x5xf32> -> vector<3x5xf32>
    %cst_37 = arith.constant 0.353553385 : f32
    %83 = vector.broadcast %cst_37 : f32 to vector<3x5xf32>
    %84 = arith.mulf %82, %83 : vector<3x5xf32>
    %85 = vector.shape_cast %84 : vector<3x5xf32> to vector<1x3x5xf32>
    %86 = vector.shape_cast %85 : vector<1x3x5xf32> to vector<1x3x5xf32>
    %87 = vector.broadcast %86 : vector<1x3x5xf32> to vector<3x3x5xf32>
    %88 = vector.shape_cast %87 : vector<3x3x5xf32> to vector<9x5xf32>
    %cst_38 = arith.constant 5.000000e-01 : f32
    %89 = vector.broadcast %cst_38 : f32 to vector<9x5xf32>
    %90 = arith.cmpf ogt, %18, %89 : vector<9x5xf32>
    %cst_39 = arith.constant -1.000000e+30 : f32
    %91 = vector.broadcast %cst_39 : f32 to vector<9x5xf32>
    %92 = arith.select %90, %91, %88 : vector<9x5xi1>, vector<9x5xf32>
    %cst_40 = arith.constant dense<0xFF800000> : vector<9xf32>
    %93 = vector.multi_reduction <maximumf>, %92, %cst_40 [1] : vector<9x5xf32> to vector<9xf32>
    %94 = vector.shape_cast %93 : vector<9xf32> to vector<9x1xf32>
    %95 = vector.broadcast %94 : vector<9x1xf32> to vector<9x5xf32>
    %96 = arith.subf %92, %95 : vector<9x5xf32>
    %97 = math.exp %96 : vector<9x5xf32>
    %cst_41 = arith.constant dense<0.000000e+00> : vector<9xf32>
    %98 = vector.multi_reduction <add>, %97, %cst_41 [1] : vector<9x5xf32> to vector<9xf32>
    %99 = vector.shape_cast %98 : vector<9xf32> to vector<9x1xf32>
    %100 = tpu.reciprocal %99 {approx = true} : vector<9x1xf32> -> vector<9x1xf32>
    %101 = vector.broadcast %100 : vector<9x1xf32> to vector<9x5xf32>
    %102 = arith.mulf %97, %101 : vector<9x5xf32>
    %cst_42 = arith.constant dense<0.000000e+00> : vector<9x8xf32>
    %103 = tpu.matmul %102, %81, %cst_42 {dimension_numbers = #tpu.dot_dimension_numbers<[1], [0], [0], [1], [0, 0, 1, 1], [], []>} : vector<9x5xf32>, vector<5x8xf32>, vector<9x8xf32> -> vector<9x8xf32>
    %104 = vector.extract_strided_slice %26 {offsets = [0, 24], sizes = [3, 8], strides = [1, 1]} : vector<3x32xf32> to vector<3x8xf32>
    %105 = vector.extract_strided_slice %27 {offsets = [0, 24], sizes = [5, 8], strides = [1, 1]} : vector<5x32xf32> to vector<5x8xf32>
    %106 = vector.extract_strided_slice %28 {offsets = [0, 24], sizes = [5, 8], strides = [1, 1]} : vector<5x32xf32> to vector<5x8xf32>
    %cst_43 = arith.constant dense<0.000000e+00> : vector<3x5xf32>
    %107 = tpu.matmul %104, %105, %cst_43 {dimension_numbers = #tpu.dot_dimension_numbers<[1], [1], [0], [0], [0, 0, 1, 0], [], []>} : vector<3x8xf32>, vector<5x8xf32>, vector<3x5xf32> -> vector<3x5xf32>
    %cst_44 = arith.constant 0.353553385 : f32
    %108 = vector.broadcast %cst_44 : f32 to vector<3x5xf32>
    %109 = arith.mulf %107, %108 : vector<3x5xf32>
    %110 = vector.shape_cast %109 : vector<3x5xf32> to vector<1x3x5xf32>
    %111 = vector.shape_cast %110 : vector<1x3x5xf32> to vector<1x3x5xf32>
    %112 = vector.broadcast %111 : vector<1x3x5xf32> to vector<3x3x5xf32>
    %113 = vector.shape_cast %112 : vector<3x3x5xf32> to vector<9x5xf32>
    %cst_45 = arith.constant 5.000000e-01 : f32
    %114 = vector.broadcast %cst_45 : f32 to vector<9x5xf32>
    %115 = arith.cmpf ogt, %18, %114 : vector<9x5xf32>
    %cst_46 = arith.constant -1.000000e+30 : f32
    %116 = vector.broadcast %cst_46 : f32 to vector<9x5xf32>
    %117 = arith.select %115, %116, %113 : vector<9x5xi1>, vector<9x5xf32>
    %cst_47 = arith.constant dense<0xFF800000> : vector<9xf32>
    %118 = vector.multi_reduction <maximumf>, %117, %cst_47 [1] : vector<9x5xf32> to vector<9xf32>
    %119 = vector.shape_cast %118 : vector<9xf32> to vector<9x1xf32>
    %120 = vector.broadcast %119 : vector<9x1xf32> to vector<9x5xf32>
    %121 = arith.subf %117, %120 : vector<9x5xf32>
    %122 = math.exp %121 : vector<9x5xf32>
    %cst_48 = arith.constant dense<0.000000e+00> : vector<9xf32>
    %123 = vector.multi_reduction <add>, %122, %cst_48 [1] : vector<9x5xf32> to vector<9xf32>
    %124 = vector.shape_cast %123 : vector<9xf32> to vector<9x1xf32>
    %125 = tpu.reciprocal %124 {approx = true} : vector<9x1xf32> -> vector<9x1xf32>
    %126 = vector.broadcast %125 : vector<9x1xf32> to vector<9x5xf32>
    %127 = arith.mulf %122, %126 : vector<9x5xf32>
    %cst_49 = arith.constant dense<0.000000e+00> : vector<9x8xf32>
    %128 = tpu.matmul %127, %106, %cst_49 {dimension_numbers = #tpu.dot_dimension_numbers<[1], [0], [0], [1], [0, 0, 1, 1], [], []>} : vector<9x5xf32>, vector<5x8xf32>, vector<9x8xf32> -> vector<9x8xf32>
    %129 = tpu.concatenate %53, %78, %103, %128 in 1 : vector<9x8xf32>, vector<9x8xf32>, vector<9x8xf32>, vector<9x8xf32> -> vector<9x32xf32>
    %c0_50 = arith.constant 0 : index
    %c0_51 = arith.constant 0 : index
    %c0_52 = arith.constant 0 : index
    %130 = vector.load %arg12[%c0_50, %c0_51, %c0_52] : memref<1x9x32xf32, #tpu.memory_space<vmem>>, vector<1x9x32xf32>
    %131 = vector.shape_cast %130 : vector<1x9x32xf32> to vector<9x32xf32>
    %132 = vector.shape_cast %129 : vector<9x32xf32> to vector<1x9x32xf32>
    tpu.vector_store %arg12[%c0_50, %c0_51, %c0_52], %132 {strides = array<i32>} : memref<1x9x32xf32, #tpu.memory_space<vmem>>, vector<1x9x32xf32>,
    %c0_53 = arith.constant 0 : index
    %c0_54 = arith.constant 0 : index
    %133 = vector.load %arg9[%c0_53, %c0_54] : memref<32x32xf32, #tpu.memory_space<vmem>>, vector<32x32xf32>
    %c0_55 = arith.constant 0 : index
    %c0_56 = arith.constant 0 : index
    %134 = vector.load %arg10[%c0_55, %c0_56] : memref<32x32xf32, #tpu.memory_space<vmem>>, vector<32x32xf32>
    %c0_57 = arith.constant 0 : index
    %c0_58 = arith.constant 0 : index
    %135 = vector.load %arg11[%c0_57, %c0_58] : memref<32x32xf32, #tpu.memory_space<vmem>>, vector<32x32xf32>
    %cst_59 = arith.constant dense<0.000000e+00> : vector<3x32xf32>
    %136 = tpu.matmul %5, %133, %cst_59 {dimension_numbers = #tpu.dot_dimension_numbers<[1], [0], [0], [1], [0, 0, 1, 1], [], []>} : vector<3x32xf32>, vector<32x32xf32>, vector<3x32xf32> -> vector<3x32xf32>
    %cst_60 = arith.constant dense<0.000000e+00> : vector<5x32xf32>
    %137 = tpu.matmul %1, %134, %cst_60 {dimension_numbers = #tpu.dot_dimension_numbers<[1], [0], [0], [1], [0, 0, 1, 1], [], []>} : vector<5x32xf32>, vector<32x32xf32>, vector<5x32xf32> -> vector<5x32xf32>
    %cst_61 = arith.constant dense<0.000000e+00> : vector<5x32xf32>
    %138 = tpu.matmul %3, %135, %cst_61 {dimension_numbers = #tpu.dot_dimension_numbers<[1], [0], [0], [1], [0, 0, 1, 1], [], []>} : vector<5x32xf32>, vector<32x32xf32>, vector<5x32xf32> -> vector<5x32xf32>
    %139 = vector.extract_strided_slice %136 {offsets = [0, 0], sizes = [3, 8], strides = [1, 1]} : vector<3x32xf32> to vector<3x8xf32>
    %140 = vector.extract_strided_slice %137 {offsets = [0, 0], sizes = [5, 8], strides = [1, 1]} : vector<5x32xf32> to vector<5x8xf32>
    %141 = vector.extract_strided_slice %138 {offsets = [0, 0], sizes = [5, 8], strides = [1, 1]} : vector<5x32xf32> to vector<5x8xf32>
    %cst_62 = arith.constant dense<0.000000e+00> : vector<3x5xf32>
    %142 = tpu.matmul %139, %140, %cst_62 {dimension_numbers = #tpu.dot_dimension_numbers<[1], [1], [0], [0], [0, 0, 1, 0], [], []>} : vector<3x8xf32>, vector<5x8xf32>, vector<3x5xf32> -> vector<3x5xf32>
    %cst_63 = arith.constant 0.353553385 : f32
    %143 = vector.broadcast %cst_63 : f32 to vector<3x5xf32>
    %144 = arith.mulf %142, %143 : vector<3x5xf32>
    %145 = vector.shape_cast %144 : vector<3x5xf32> to vector<3x1x5xf32>
    %146 = vector.shape_cast %145 : vector<3x1x5xf32> to vector<3x1x5xf32>
    %147 = vector.broadcast %146 : vector<3x1x5xf32> to vector<3x3x5xf32>
    %148 = vector.shape_cast %147 : vector<3x3x5xf32> to vector<9x5xf32>
    %cst_64 = arith.constant 5.000000e-01 : f32
    %149 = vector.broadcast %cst_64 : f32 to vector<9x5xf32>
    %150 = arith.cmpf ogt, %22, %149 : vector<9x5xf32>
    %cst_65 = arith.constant -1.000000e+30 : f32
    %151 = vector.broadcast %cst_65 : f32 to vector<9x5xf32>
    %152 = arith.select %150, %151, %148 : vector<9x5xi1>, vector<9x5xf32>
    %cst_66 = arith.constant dense<0xFF800000> : vector<9xf32>
    %153 = vector.multi_reduction <maximumf>, %152, %cst_66 [1] : vector<9x5xf32> to vector<9xf32>
    %154 = vector.shape_cast %153 : vector<9xf32> to vector<9x1xf32>
    %155 = vector.broadcast %154 : vector<9x1xf32> to vector<9x5xf32>
    %156 = arith.subf %152, %155 : vector<9x5xf32>
    %157 = math.exp %156 : vector<9x5xf32>
    %cst_67 = arith.constant dense<0.000000e+00> : vector<9xf32>
    %158 = vector.multi_reduction <add>, %157, %cst_67 [1] : vector<9x5xf32> to vector<9xf32>
    %159 = vector.shape_cast %158 : vector<9xf32> to vector<9x1xf32>
    %160 = tpu.reciprocal %159 {approx = true} : vector<9x1xf32> -> vector<9x1xf32>
    %161 = vector.broadcast %160 : vector<9x1xf32> to vector<9x5xf32>
    %162 = arith.mulf %157, %161 : vector<9x5xf32>
    %cst_68 = arith.constant dense<0.000000e+00> : vector<9x8xf32>
    %163 = tpu.matmul %162, %141, %cst_68 {dimension_numbers = #tpu.dot_dimension_numbers<[1], [0], [0], [1], [0, 0, 1, 1], [], []>} : vector<9x5xf32>, vector<5x8xf32>, vector<9x8xf32> -> vector<9x8xf32>
    %164 = vector.extract_strided_slice %136 {offsets = [0, 8], sizes = [3, 8], strides = [1, 1]} : vector<3x32xf32> to vector<3x8xf32>
    %165 = vector.extract_strided_slice %137 {offsets = [0, 8], sizes = [5, 8], strides = [1, 1]} : vector<5x32xf32> to vector<5x8xf32>
    %166 = vector.extract_strided_slice %138 {offsets = [0, 8], sizes = [5, 8], strides = [1, 1]} : vector<5x32xf32> to vector<5x8xf32>
    %cst_69 = arith.constant dense<0.000000e+00> : vector<3x5xf32>
    %167 = tpu.matmul %164, %165, %cst_69 {dimension_numbers = #tpu.dot_dimension_numbers<[1], [1], [0], [0], [0, 0, 1, 0], [], []>} : vector<3x8xf32>, vector<5x8xf32>, vector<3x5xf32> -> vector<3x5xf32>
    %cst_70 = arith.constant 0.353553385 : f32
    %168 = vector.broadcast %cst_70 : f32 to vector<3x5xf32>
    %169 = arith.mulf %167, %168 : vector<3x5xf32>
    %170 = vector.shape_cast %169 : vector<3x5xf32> to vector<3x1x5xf32>
    %171 = vector.shape_cast %170 : vector<3x1x5xf32> to vector<3x1x5xf32>
    %172 = vector.broadcast %171 : vector<3x1x5xf32> to vector<3x3x5xf32>
    %173 = vector.shape_cast %172 : vector<3x3x5xf32> to vector<9x5xf32>
    %cst_71 = arith.constant 5.000000e-01 : f32
    %174 = vector.broadcast %cst_71 : f32 to vector<9x5xf32>
    %175 = arith.cmpf ogt, %22, %174 : vector<9x5xf32>
    %cst_72 = arith.constant -1.000000e+30 : f32
    %176 = vector.broadcast %cst_72 : f32 to vector<9x5xf32>
    %177 = arith.select %175, %176, %173 : vector<9x5xi1>, vector<9x5xf32>
    %cst_73 = arith.constant dense<0xFF800000> : vector<9xf32>
    %178 = vector.multi_reduction <maximumf>, %177, %cst_73 [1] : vector<9x5xf32> to vector<9xf32>
    %179 = vector.shape_cast %178 : vector<9xf32> to vector<9x1xf32>
    %180 = vector.broadcast %179 : vector<9x1xf32> to vector<9x5xf32>
    %181 = arith.subf %177, %180 : vector<9x5xf32>
    %182 = math.exp %181 : vector<9x5xf32>
    %cst_74 = arith.constant dense<0.000000e+00> : vector<9xf32>
    %183 = vector.multi_reduction <add>, %182, %cst_74 [1] : vector<9x5xf32> to vector<9xf32>
    %184 = vector.shape_cast %183 : vector<9xf32> to vector<9x1xf32>
    %185 = tpu.reciprocal %184 {approx = true} : vector<9x1xf32> -> vector<9x1xf32>
    %186 = vector.broadcast %185 : vector<9x1xf32> to vector<9x5xf32>
    %187 = arith.mulf %182, %186 : vector<9x5xf32>
    %cst_75 = arith.constant dense<0.000000e+00> : vector<9x8xf32>
    %188 = tpu.matmul %187, %166, %cst_75 {dimension_numbers = #tpu.dot_dimension_numbers<[1], [0], [0], [1], [0, 0, 1, 1], [], []>} : vector<9x5xf32>, vector<5x8xf32>, vector<9x8xf32> -> vector<9x8xf32>
    %189 = vector.extract_strided_slice %136 {offsets = [0, 16], sizes = [3, 8], strides = [1, 1]} : vector<3x32xf32> to vector<3x8xf32>
    %190 = vector.extract_strided_slice %137 {offsets = [0, 16], sizes = [5, 8], strides = [1, 1]} : vector<5x32xf32> to vector<5x8xf32>
    %191 = vector.extract_strided_slice %138 {offsets = [0, 16], sizes = [5, 8], strides = [1, 1]} : vector<5x32xf32> to vector<5x8xf32>
    %cst_76 = arith.constant dense<0.000000e+00> : vector<3x5xf32>
    %192 = tpu.matmul %189, %190, %cst_76 {dimension_numbers = #tpu.dot_dimension_numbers<[1], [1], [0], [0], [0, 0, 1, 0], [], []>} : vector<3x8xf32>, vector<5x8xf32>, vector<3x5xf32> -> vector<3x5xf32>
    %cst_77 = arith.constant 0.353553385 : f32
    %193 = vector.broadcast %cst_77 : f32 to vector<3x5xf32>
    %194 = arith.mulf %192, %193 : vector<3x5xf32>
    %195 = vector.shape_cast %194 : vector<3x5xf32> to vector<3x1x5xf32>
    %196 = vector.shape_cast %195 : vector<3x1x5xf32> to vector<3x1x5xf32>
    %197 = vector.broadcast %196 : vector<3x1x5xf32> to vector<3x3x5xf32>
    %198 = vector.shape_cast %197 : vector<3x3x5xf32> to vector<9x5xf32>
    %cst_78 = arith.constant 5.000000e-01 : f32
    %199 = vector.broadcast %cst_78 : f32 to vector<9x5xf32>
    %200 = arith.cmpf ogt, %22, %199 : vector<9x5xf32>
    %cst_79 = arith.constant -1.000000e+30 : f32
    %201 = vector.broadcast %cst_79 : f32 to vector<9x5xf32>
    %202 = arith.select %200, %201, %198 : vector<9x5xi1>, vector<9x5xf32>
    %cst_80 = arith.constant dense<0xFF800000> : vector<9xf32>
    %203 = vector.multi_reduction <maximumf>, %202, %cst_80 [1] : vector<9x5xf32> to vector<9xf32>
    %204 = vector.shape_cast %203 : vector<9xf32> to vector<9x1xf32>
    %205 = vector.broadcast %204 : vector<9x1xf32> to vector<9x5xf32>
    %206 = arith.subf %202, %205 : vector<9x5xf32>
    %207 = math.exp %206 : vector<9x5xf32>
    %cst_81 = arith.constant dense<0.000000e+00> : vector<9xf32>
    %208 = vector.multi_reduction <add>, %207, %cst_81 [1] : vector<9x5xf32> to vector<9xf32>
    %209 = vector.shape_cast %208 : vector<9xf32> to vector<9x1xf32>
    %210 = tpu.reciprocal %209 {approx = true} : vector<9x1xf32> -> vector<9x1xf32>
    %211 = vector.broadcast %210 : vector<9x1xf32> to vector<9x5xf32>
    %212 = arith.mulf %207, %211 : vector<9x5xf32>
    %cst_82 = arith.constant dense<0.000000e+00> : vector<9x8xf32>
    %213 = tpu.matmul %212, %191, %cst_82 {dimension_numbers = #tpu.dot_dimension_numbers<[1], [0], [0], [1], [0, 0, 1, 1], [], []>} : vector<9x5xf32>, vector<5x8xf32>, vector<9x8xf32> -> vector<9x8xf32>
    %214 = vector.extract_strided_slice %136 {offsets = [0, 24], sizes = [3, 8], strides = [1, 1]} : vector<3x32xf32> to vector<3x8xf32>
    %215 = vector.extract_strided_slice %137 {offsets = [0, 24], sizes = [5, 8], strides = [1, 1]} : vector<5x32xf32> to vector<5x8xf32>
    %216 = vector.extract_strided_slice %138 {offsets = [0, 24], sizes = [5, 8], strides = [1, 1]} : vector<5x32xf32> to vector<5x8xf32>
    %cst_83 = arith.constant dense<0.000000e+00> : vector<3x5xf32>
    %217 = tpu.matmul %214, %215, %cst_83 {dimension_numbers = #tpu.dot_dimension_numbers<[1], [1], [0], [0], [0, 0, 1, 0], [], []>} : vector<3x8xf32>, vector<5x8xf32>, vector<3x5xf32> -> vector<3x5xf32>
    %cst_84 = arith.constant 0.353553385 : f32
    %218 = vector.broadcast %cst_84 : f32 to vector<3x5xf32>
    %219 = arith.mulf %217, %218 : vector<3x5xf32>
    %220 = vector.shape_cast %219 : vector<3x5xf32> to vector<3x1x5xf32>
    %221 = vector.shape_cast %220 : vector<3x1x5xf32> to vector<3x1x5xf32>
    %222 = vector.broadcast %221 : vector<3x1x5xf32> to vector<3x3x5xf32>
    %223 = vector.shape_cast %222 : vector<3x3x5xf32> to vector<9x5xf32>
    %cst_85 = arith.constant 5.000000e-01 : f32
    %224 = vector.broadcast %cst_85 : f32 to vector<9x5xf32>
    %225 = arith.cmpf ogt, %22, %224 : vector<9x5xf32>
    %cst_86 = arith.constant -1.000000e+30 : f32
    %226 = vector.broadcast %cst_86 : f32 to vector<9x5xf32>
    %227 = arith.select %225, %226, %223 : vector<9x5xi1>, vector<9x5xf32>
    %cst_87 = arith.constant dense<0xFF800000> : vector<9xf32>
    %228 = vector.multi_reduction <maximumf>, %227, %cst_87 [1] : vector<9x5xf32> to vector<9xf32>
    %229 = vector.shape_cast %228 : vector<9xf32> to vector<9x1xf32>
    %230 = vector.broadcast %229 : vector<9x1xf32> to vector<9x5xf32>
    %231 = arith.subf %227, %230 : vector<9x5xf32>
    %232 = math.exp %231 : vector<9x5xf32>
    %cst_88 = arith.constant dense<0.000000e+00> : vector<9xf32>
    %233 = vector.multi_reduction <add>, %232, %cst_88 [1] : vector<9x5xf32> to vector<9xf32>
    %234 = vector.shape_cast %233 : vector<9xf32> to vector<9x1xf32>
    %235 = tpu.reciprocal %234 {approx = true} : vector<9x1xf32> -> vector<9x1xf32>
    %236 = vector.broadcast %235 : vector<9x1xf32> to vector<9x5xf32>
    %237 = arith.mulf %232, %236 : vector<9x5xf32>
    %cst_89 = arith.constant dense<0.000000e+00> : vector<9x8xf32>
    %238 = tpu.matmul %237, %216, %cst_89 {dimension_numbers = #tpu.dot_dimension_numbers<[1], [0], [0], [1], [0, 0, 1, 1], [], []>} : vector<9x5xf32>, vector<5x8xf32>, vector<9x8xf32> -> vector<9x8xf32>
    %239 = tpu.concatenate %163, %188, %213, %238 in 1 : vector<9x8xf32>, vector<9x8xf32>, vector<9x8xf32>, vector<9x8xf32> -> vector<9x32xf32>
    %c0_90 = arith.constant 0 : index
    %c0_91 = arith.constant 0 : index
    %c0_92 = arith.constant 0 : index
    %240 = vector.load %arg13[%c0_90, %c0_91, %c0_92] : memref<1x9x32xf32, #tpu.memory_space<vmem>>, vector<1x9x32xf32>
    %241 = vector.shape_cast %240 : vector<1x9x32xf32> to vector<9x32xf32>
    %242 = vector.shape_cast %239 : vector<9x32xf32> to vector<1x9x32xf32>
    tpu.vector_store %arg13[%c0_90, %c0_91, %c0_92], %242 {strides = array<i32>} : memref<1x9x32xf32, #tpu.memory_space<vmem>>, vector<1x9x32xf32>,
    return
  }
  func.func @transform_0(%arg0: i32) -> (i32, i32, i32) {
    %c0_i32 = arith.constant 0 : i32
    %c0_i32_0 = arith.constant 0 : i32
    %c0_i32_1 = arith.constant 0 : i32
    return %arg0, %c0_i32, %c0_i32_0 : i32, i32, i32
  }
  func.func @transform_1(%arg0: i32) -> (i32, i32, i32) {
    %c0_i32 = arith.constant 0 : i32
    %c0_i32_0 = arith.constant 0 : i32
    %c0_i32_1 = arith.constant 0 : i32
    return %arg0, %c0_i32, %c0_i32_0 : i32, i32, i32
  }
  func.func @transform_2(%arg0: i32) -> (i32, i32, i32) {
    %c0_i32 = arith.constant 0 : i32
    %c0_i32_0 = arith.constant 0 : i32
    %c0_i32_1 = arith.constant 0 : i32
    return %arg0, %c0_i32, %c0_i32_0 : i32, i32, i32
  }
  func.func @transform_3(%arg0: i32) -> (i32, i32, i32) {
    %c0_i32 = arith.constant 0 : i32
    %c0_i32_0 = arith.constant 0 : i32
    %c0_i32_1 = arith.constant 0 : i32
    return %arg0, %c0_i32, %c0_i32_0 : i32, i32, i32
  }
  func.func @transform_4(%arg0: i32) -> (i32, i32, i32) {
    %c0_i32 = arith.constant 0 : i32
    %c0_i32_0 = arith.constant 0 : i32
    %c0_i32_1 = arith.constant 0 : i32
    return %arg0, %c0_i32, %c0_i32_0 : i32, i32, i32
  }
  func.func @transform_5(%arg0: i32) -> (i32, i32) {
    %c0_i32 = arith.constant 0 : i32
    %c0_i32_0 = arith.constant 0 : i32
    %c0_i32_1 = arith.constant 0 : i32
    return %c0_i32, %c0_i32_0 : i32, i32
  }
  func.func @transform_6(%arg0: i32) -> (i32, i32) {
    %c0_i32 = arith.constant 0 : i32
    %c0_i32_0 = arith.constant 0 : i32
    %c0_i32_1 = arith.constant 0 : i32
    return %c0_i32, %c0_i32_0 : i32, i32
  }
  func.func @transform_7(%arg0: i32) -> (i32, i32) {
    %c0_i32 = arith.constant 0 : i32
    %c0_i32_0 = arith.constant 0 : i32
    %c0_i32_1 = arith.constant 0 : i32
    return %c0_i32, %c0_i32_0 : i32, i32
  }
  func.func @transform_8(%arg0: i32) -> (i32, i32) {
    %c0_i32 = arith.constant 0 : i32
    %c0_i32_0 = arith.constant 0 : i32
    %c0_i32_1 = arith.constant 0 : i32
    return %c0_i32, %c0_i32_0 : i32, i32
  }
  func.func @transform_9(%arg0: i32) -> (i32, i32) {
    %c0_i32 = arith.constant 0 : i32
    %c0_i32_0 = arith.constant 0 : i32
    %c0_i32_1 = arith.constant 0 : i32
    return %c0_i32, %c0_i32_0 : i32, i32
  }
  func.func @transform_10(%arg0: i32) -> (i32, i32) {
    %c0_i32 = arith.constant 0 : i32
    %c0_i32_0 = arith.constant 0 : i32
    %c0_i32_1 = arith.constant 0 : i32
    return %c0_i32, %c0_i32_0 : i32, i32
  }
  func.func @transform_11(%arg0: i32) -> (i32, i32, i32) {
    %c0_i32 = arith.constant 0 : i32
    %c0_i32_0 = arith.constant 0 : i32
    %c0_i32_1 = arith.constant 0 : i32
    return %arg0, %c0_i32, %c0_i32_0 : i32, i32, i32
  }
  func.func @transform_12(%arg0: i32) -> (i32, i32, i32) {
    %c0_i32 = arith.constant 0 : i32
    %c0_i32_0 = arith.constant 0 : i32
    %c0_i32_1 = arith.constant 0 : i32
    return %arg0, %c0_i32, %c0_i32_0 : i32, i32, i32
  }
}

</mosaic_0001>

<llo_original>
// kernel: tpu_custom_call.1
$region0: #{tpu_custom_call.1}
  #allocation0 [shape = 'u32[]', space=smem, size = 0x4, offset = 0x4, fixed_abs, tag = 'smem constant byte address 0x4 - core index']
  #allocation1 [shape = 'u32[144,128]{1,0:T(1,128)}', space=vmem, size = 0x12000, scoped, tag = 'internal scratch']
  %s0 = inlined_call_operand.vmem [shape: f32[2,5,32], index: 0, kind: input, shape index: {}]
  %s1 = inlined_call_operand.vmem [shape: f32[2,5,32], index: 1, kind: input, shape index: {}]
  %s2 = inlined_call_operand.vmem [shape: f32[2,3,32], index: 2, kind: input, shape index: {}]
  %s3 = inlined_call_operand.vmem [shape: s32[2,1,5], index: 3, kind: input, shape index: {}]
  %s4 = inlined_call_operand.vmem [shape: s32[2,3,1], index: 4, kind: input, shape index: {}]
  %s5 = inlined_call_operand.vmem [shape: f32[32,32], index: 5, kind: input, shape index: {}]
  %s6 = inlined_call_operand.vmem [shape: f32[32,32], index: 6, kind: input, shape index: {}]
  %s7 = inlined_call_operand.vmem [shape: f32[32,32], index: 7, kind: input, shape index: {}]
  %s8 = inlined_call_operand.hbm [shape: f32[32,32], index: 8, kind: input, shape index: {}]
  %s9 = inlined_call_operand.hbm [shape: f32[32,32], index: 9, kind: input, shape index: {}]
  %s10 = inlined_call_operand.hbm [shape: f32[32,32], index: 10, kind: input, shape index: {}]
  %s11 = inlined_call_operand.vmem [shape: f32[2,9,32], index: 11, kind: output, shape index: {0}]
  %s12 = inlined_call_operand.vmem [shape: f32[2,9,32], index: 12, kind: output, shape index: {1}]
  %13 = xla_tuple %s11, %s12
  %s14 = sld [smem:[#allocation0]]
  $region97: #{tpu_custom_call.1} parent=0
    _
  %s16 = ssub.s32 1, %s14
  %s17 = scalar_select 0, %s16, %s14
  $region1: #{tpu_custom_call.1} parent=0
    #allocation2 [shape = 'u8[16384]{0}', space=vmem, size = 0x4000, scoped, tag = 'input window, operand 8, single buffered']
    #allocation3 [shape = 's32[2]{0}', space=sflag, size = 0x8, scoped, tag = 'scoped memory for tpu_custom_call.1']
    #allocation4 [shape = 'u8[16384]{0}', space=vmem, size = 0x4000, scoped, tag = 'input window, operand 9, single buffered']
    #allocation5 [shape = 's32[1]{0}', space=sflag, size = 0x4, scoped, tag = 'scoped memory for tpu_custom_call.1']
    #allocation6 [shape = 'u8[16384]{0}', space=vmem, size = 0x4000, scoped, tag = 'input window, operand 10, single buffered']
    %18 = vsyncpa [#allocation3], 0
    %19 = vsyncpa [#allocation5], 0
    loop: start=0, step=1, limit=4
    $region2: #{tpu_custom_call.1} parent=1 // loop_pre_header
      _
    $region3: #{tpu_custom_call.1} parent=1 // loop_header
      %s21 = sphi 0, %s25
      %p22 = scmp.ge.s32.totalorder %s21, 4
      %s31 = sphi 0, %s33
      %s34 = sphi 0, %s31
      %s35 = sphi 0, %s34
      %s51 = sphi 0, %s35
      %s57 = sphi 0, %s59
      %s60 = sphi 0, %s57
      %s61 = sphi 0, %s60
      %s77 = sphi 0, %s61
      %s83 = sphi 0, %s85
      %s86 = sphi 0, %s83
      %s87 = sphi 0, %s86
      %s103 = sphi 0, %s87
      %s109 = sphi 0, %s111
      %s112 = sphi 0, %s109
      %s113 = sphi 0, %s112
      %s129 = sphi 0, %s113
      %s135 = sphi 0, %s137
      %s138 = sphi 0, %s135
      %s139 = sphi 0, %s138
      %s155 = sphi 0, %s139
      %s159 = sphi 0, %s159
      %s161 = sphi 0, %s159
      %s162 = sphi 0, %s161
      %s176 = sphi 0, %s162
      %s180 = sphi 0, %s180
      %s182 = sphi 0, %s180
      %s183 = sphi 0, %s182
      %s197 = sphi 0, %s183
      %s201 = sphi 0, %s201
      %s203 = sphi 0, %s201
      %s204 = sphi 0, %s203
      %s218 = sphi 0, %s204
      %s222 = sphi 0, %s222
      %s224 = sphi 0, %s222
      %s225 = sphi 0, %s224
      %s239 = sphi 0, %s225
      %s243 = sphi 0, %s243
      %s245 = sphi 0, %s243
      %s246 = sphi 0, %s245
      %s260 = sphi 0, %s246
      %s264 = sphi 0, %s264
      %s266 = sphi 0, %s264
      %s267 = sphi 0, %s266
      %s281 = sphi 0, %s267
      %s287 = sphi 0, %s289
      %s290 = sphi 0, %s287
      %s291 = sphi 0, %s290
      %s307 = sphi 0, %s291
      %s313 = sphi 0, %s315
      %s316 = sphi 0, %s313
      %s317 = sphi 0, %s316
      %s333 = sphi 0, %s317
    $region4: #{tpu_custom_call.1} parent=1 // loop_header_branch
      %24 = sbr.rel (%p22) target = $region8
    $region5: #{tpu_custom_call.1} parent=1 // loop_body
      %s26 = ssub.s32 %s21, 1
      %s27 = ssub.s32 %s21, 2
      %s28 = sadd.s32 %s21, 1
      %s29 = ssub.s32 %s21, %s28
      %p30 = scmp.eq.s32.totalorder %s29, 0
      %s32 = sadd.s32 %s31, 1
      %s33 = scalar_select %p30, %s31, %s32
      %p36 = pneg %p30
      %p37 = scmp.eq.s32.totalorder %s21, 1
      %p38 = por %p36, %p37
      %p39 = scmp.ne.s32.totalorder %s31, %s34
      %p40 = scmp.eq.s32.totalorder %s21, 0
      %p41 = por %p39, %p40
      %p42 = scmp.ne.s32.totalorder %s31, %s34
      %p43 = scmp.eq.s32.totalorder %s26, 1
      %p44 = por %p42, %p43
      %p45 = scmp.ne.s32.totalorder %s34, %s35
      %p46 = scmp.eq.s32.totalorder %s26, 0
      %p47 = por %p45, %p46
      %p48 = scmp.ne.s32.totalorder %s34, %s35
      %p49 = scmp.eq.s32.totalorder %s27, 1
      %p50 = por %p48, %p49
      %p52 = scmp.ne.s32.totalorder %s35, %s51
      %p53 = scmp.eq.s32.totalorder %s27, 0
      %p54 = por %p52, %p53
      %s55 = ssub.s32 %s21, %s28
      %p56 = scmp.eq.s32.totalorder %s55, 0
      %s58 = sadd.s32 %s57, 1
      %s59 = scalar_select %p56, %s57, %s58
      %p62 = pneg %p56
      %p63 = scmp.eq.s32.totalorder %s21, 1
      %p64 = por %p62, %p63
      %p65 = scmp.ne.s32.totalorder %s57, %s60
      %p66 = scmp.eq.s32.totalorder %s21, 0
      %p67 = por %p65, %p66
      %p68 = scmp.ne.s32.totalorder %s57, %s60
      %p69 = scmp.eq.s32.totalorder %s26, 1
      %p70 = por %p68, %p69
      %p71 = scmp.ne.s32.totalorder %s60, %s61
      %p72 = scmp.eq.s32.totalorder %s26, 0
      %p73 = por %p71, %p72
      %p74 = scmp.ne.s32.totalorder %s60, %s61
      %p75 = scmp.eq.s32.totalorder %s27, 1
      %p76 = por %p74, %p75
      %p78 = scmp.ne.s32.totalorder %s61, %s77
      %p79 = scmp.eq.s32.totalorder %s27, 0
      %p80 = por %p78, %p79
      %s81 = ssub.s32 %s21, %s28
      %p82 = scmp.eq.s32.totalorder %s81, 0
      %s84 = sadd.s32 %s83, 1
      %s85 = scalar_select %p82, %s83, %s84
      %p88 = pneg %p82
      %p89 = scmp.eq.s32.totalorder %s21, 1
      %p90 = por %p88, %p89
      %p91 = scmp.ne.s32.totalorder %s83, %s86
      %p92 = scmp.eq.s32.totalorder %s21, 0
      %p93 = por %p91, %p92
      %p94 = scmp.ne.s32.totalorder %s83, %s86
      %p95 = scmp.eq.s32.totalorder %s26, 1
      %p96 = por %p94, %p95
      %p97 = scmp.ne.s32.totalorder %s86, %s87
      %p98 = scmp.eq.s32.totalorder %s26, 0
      %p99 = por %p97, %p98
      %p100 = scmp.ne.s32.totalorder %s86, %s87
      %p101 = scmp.eq.s32.totalorder %s27, 1
      %p102 = por %p100, %p101
      %p104 = scmp.ne.s32.totalorder %s87, %s103
      %p105 = scmp.eq.s32.totalorder %s27, 0
      %p106 = por %p104, %p105
      %s107 = ssub.s32 %s21, %s28
      %p108 = scmp.eq.s32.totalorder %s107, 0
      %s110 = sadd.s32 %s109, 1
      %s111 = scalar_select %p108, %s109, %s110
      %p114 = pneg %p108
      %p115 = scmp.eq.s32.totalorder %s21, 1
      %p116 = por %p114, %p115
      %p117 = scmp.ne.s32.totalorder %s109, %s112
      %p118 = scmp.eq.s32.totalorder %s21, 0
      %p119 = por %p117, %p118
      %p120 = scmp.ne.s32.totalorder %s109, %s112
      %p121 = scmp.eq.s32.totalorder %s26, 1
      %p122 = por %p120, %p121
      %p123 = scmp.ne.s32.totalorder %s112, %s113
      %p124 = scmp.eq.s32.totalorder %s26, 0
      %p125 = por %p123, %p124
      %p126 = scmp.ne.s32.totalorder %s112, %s113
      %p127 = scmp.eq.s32.totalorder %s27, 1
      %p128 = por %p126, %p127
      %p130 = scmp.ne.s32.totalorder %s113, %s129
      %p131 = scmp.eq.s32.totalorder %s27, 0
      %p132 = por %p130, %p131
      %s133 = ssub.s32 %s21, %s28
      %p134 = scmp.eq.s32.totalorder %s133, 0
      %s136 = sadd.s32 %s135, 1
      %s137 = scalar_select %p134, %s135, %s136
      %p140 = pneg %p134
      %p141 = scmp.eq.s32.totalorder %s21, 1
      %p142 = por %p140, %p141
      %p143 = scmp.ne.s32.totalorder %s135, %s138
      %p144 = scmp.eq.s32.totalorder %s21, 0
      %p145 = por %p143, %p144
      %p146 = scmp.ne.s32.totalorder %s135, %s138
      %p147 = scmp.eq.s32.totalorder %s26, 1
      %p148 = por %p146, %p147
      %p149 = scmp.ne.s32.totalorder %s138, %s139
      %p150 = scmp.eq.s32.totalorder %s26, 0
      %p151 = por %p149, %p150
      %p152 = scmp.ne.s32.totalorder %s138, %s139
      %p153 = scmp.eq.s32.totalorder %s27, 1
      %p154 = por %p152, %p153
      %p156 = scmp.ne.s32.totalorder %s139, %s155
      %p157 = scmp.eq.s32.totalorder %s27, 0
      %p158 = por %p156, %p157
      %s160 = sadd.s32 %s159, 1
      %p163 = scmp.eq.s32.totalorder %s21, 1
      %p164 = scmp.ne.s32.totalorder %s159, %s161
      %p165 = scmp.eq.s32.totalorder %s21, 0
      %p166 = por %p164, %p165
      %p167 = scmp.ne.s32.totalorder %s159, %s161
      %p168 = scmp.eq.s32.totalorder %s26, 1
      %p169 = por %p167, %p168
      %p170 = scmp.ne.s32.totalorder %s161, %s162
      %p171 = scmp.eq.s32.totalorder %s26, 0
      %p172 = por %p170, %p171
      %p173 = scmp.ne.s32.totalorder %s161, %s162
      %p174 = scmp.eq.s32.totalorder %s27, 1
      %p175 = por %p173, %p174
      %p177 = scmp.ne.s32.totalorder %s162, %s176
      %p178 = scmp.eq.s32.totalorder %s27, 0
      %p179 = por %p177, %p178
      %s181 = sadd.s32 %s180, 1
      %p184 = scmp.eq.s32.totalorder %s21, 1
      %p185 = scmp.ne.s32.totalorder %s180, %s182
      %p186 = scmp.eq.s32.totalorder %s21, 0
      %p187 = por %p185, %p186
      %p188 = scmp.ne.s32.totalorder %s180, %s182
      %p189 = scmp.eq.s32.totalorder %s26, 1
      %p190 = por %p188, %p189
      %p191 = scmp.ne.s32.totalorder %s182, %s183
      %p192 = scmp.eq.s32.totalorder %s26, 0
      %p193 = por %p191, %p192
      %p194 = scmp.ne.s32.totalorder %s182, %s183
      %p195 = scmp.eq.s32.totalorder %s27, 1
      %p196 = por %p194, %p195
      %p198 = scmp.ne.s32.totalorder %s183, %s197
      %p199 = scmp.eq.s32.totalorder %s27, 0
      %p200 = por %p198, %p199
      %s202 = sadd.s32 %s201, 1
      %p205 = scmp.eq.s32.totalorder %s21, 1
      %p206 = scmp.ne.s32.totalorder %s201, %s203
      %p207 = scmp.eq.s32.totalorder %s21, 0
      %p208 = por %p206, %p207
      %p209 = scmp.ne.s32.totalorder %s201, %s203
      %p210 = scmp.eq.s32.totalorder %s26, 1
      %p211 = por %p209, %p210
      %p212 = scmp.ne.s32.totalorder %s203, %s204
      %p213 = scmp.eq.s32.totalorder %s26, 0
      %p214 = por %p212, %p213
      %p215 = scmp.ne.s32.totalorder %s203, %s204
      %p216 = scmp.eq.s32.totalorder %s27, 1
      %p217 = por %p215, %p216
      %p219 = scmp.ne.s32.totalorder %s204, %s218
      %p220 = scmp.eq.s32.totalorder %s27, 0
      %p221 = por %p219, %p220
      %s223 = sadd.s32 %s222, 1
      %p226 = scmp.eq.s32.totalorder %s21, 1
      %p227 = scmp.ne.s32.totalorder %s222, %s224
      %p228 = scmp.eq.s32.totalorder %s21, 0
      %p229 = por %p227, %p228
      %p230 = scmp.ne.s32.totalorder %s222, %s224
      %p231 = scmp.eq.s32.totalorder %s26, 1
      %p232 = por %p230, %p231
      %p233 = scmp.ne.s32.totalorder %s224, %s225
      %p234 = scmp.eq.s32.totalorder %s26, 0
      %p235 = por %p233, %p234
      %p236 = scmp.ne.s32.totalorder %s224, %s225
      %p237 = scmp.eq.s32.totalorder %s27, 1
      %p238 = por %p236, %p237
      %p240 = scmp.ne.s32.totalorder %s225, %s239
      %p241 = scmp.eq.s32.totalorder %s27, 0
      %p242 = por %p240, %p241
      %s244 = sadd.s32 %s243, 1
      %p247 = scmp.eq.s32.totalorder %s21, 1
      %p248 = scmp.ne.s32.totalorder %s243, %s245
      %p249 = scmp.eq.s32.totalorder %s21, 0
      %p250 = por %p248, %p249
      %p251 = scmp.ne.s32.totalorder %s243, %s245
      %p252 = scmp.eq.s32.totalorder %s26, 1
      %p253 = por %p251, %p252
      %p254 = scmp.ne.s32.totalorder %s245, %s246
      %p255 = scmp.eq.s32.totalorder %s26, 0
      %p256 = por %p254, %p255
      %p257 = scmp.ne.s32.totalorder %s245, %s246
      %p258 = scmp.eq.s32.totalorder %s27, 1
      %p259 = por %p257, %p258
      %p261 = scmp.ne.s32.totalorder %s246, %s260
      %p262 = scmp.eq.s32.totalorder %s27, 0
      %p263 = por %p261, %p262
      %s265 = sadd.s32 %s264, 1
      %p268 = scmp.eq.s32.totalorder %s21, 1
      %p269 = scmp.ne.s32.totalorder %s264, %s266
      %p270 = scmp.eq.s32.totalorder %s21, 0
      %p271 = por %p269, %p270
      %p272 = scmp.ne.s32.totalorder %s264, %s266
      %p273 = scmp.eq.s32.totalorder %s26, 1
      %p274 = por %p272, %p273
      %p275 = scmp.ne.s32.totalorder %s266, %s267
      %p276 = scmp.eq.s32.totalorder %s26, 0
      %p277 = por %p275, %p276
      %p278 = scmp.ne.s32.totalorder %s266, %s267
      %p279 = scmp.eq.s32.totalorder %s27, 1
      %p280 = por %p278, %p279
      %p282 = scmp.ne.s32.totalorder %s267, %s281
      %p283 = scmp.eq.s32.totalorder %s27, 0
      %p284 = por %p282, %p283
      %s285 = ssub.s32 %s21, %s28
      %p286 = scmp.eq.s32.totalorder %s285, 0
      %s288 = sadd.s32 %s287, 1
      %s289 = scalar_select %p286, %s287, %s288
      %p292 = pneg %p286
      %p293 = scmp.eq.s32.totalorder %s21, 1
      %p294 = por %p292, %p293
      %p295 = scmp.ne.s32.totalorder %s287, %s290
      %p296 = scmp.eq.s32.totalorder %s21, 0
      %p297 = por %p295, %p296
      %p298 = scmp.ne.s32.totalorder %s287, %s290
      %p299 = scmp.eq.s32.totalorder %s26, 1
      %p300 = por %p298, %p299
      %p301 = scmp.ne.s32.totalorder %s290, %s291
      %p302 = scmp.eq.s32.totalorder %s26, 0
      %p303 = por %p301, %p302
      %p304 = scmp.ne.s32.totalorder %s290, %s291
      %p305 = scmp.eq.s32.totalorder %s27, 1
      %p306 = por %p304, %p305
      %p308 = scmp.ne.s32.totalorder %s291, %s307
      %p309 = scmp.eq.s32.totalorder %s27, 0
      %p310 = por %p308, %p309
      %s311 = ssub.s32 %s21, %s28
      %p312 = scmp.eq.s32.totalorder %s311, 0
      %s314 = sadd.s32 %s313, 1
      %s315 = scalar_select %p312, %s313, %s314
      %p318 = pneg %p312
      %p319 = scmp.eq.s32.totalorder %s21, 1
      %p320 = por %p318, %p319
      %p321 = scmp.ne.s32.totalorder %s313, %s316
      %p322 = scmp.eq.s32.totalorder %s21, 0
      %p323 = por %p321, %p322
      %p324 = scmp.ne.s32.totalorder %s313, %s316
      %p325 = scmp.eq.s32.totalorder %s26, 1
      %p326 = por %p324, %p325
      %p327 = scmp.ne.s32.totalorder %s316, %s317
      %p328 = scmp.eq.s32.totalorder %s26, 0
      %p329 = por %p327, %p328
      %p330 = scmp.ne.s32.totalorder %s316, %s317
      %p331 = scmp.eq.s32.totalorder %s27, 1
      %p332 = por %p330, %p331
      %p334 = scmp.ne.s32.totalorder %s317, %s333
      %p335 = scmp.eq.s32.totalorder %s27, 0
      %p336 = por %p334, %p335
      %p337 = scmp.le.s32.totalorder 1, %s21
      %p338 = scmp.lt.s32.totalorder %s21, 3
      %p339 = pnand %p337, %p338
      %p340 = pneg %p339
      // Predicated region
      $region9: #{tpu_custom_call.1} parent=5 // pred_check
        _
      $region10: #{tpu_custom_call.1} parent=5 // pred_check_branch
        %342 = sbr.rel (%p339) target = $region12
      $region11: #{tpu_custom_call.1} parent=5 // pred_region
        %s343 = ssub.s32 %s21, 1
        // Predicated region
        $region13: #{tpu_custom_call.1} parent=11 // pred_check
          %p344 = pneg %p172
        $region14: #{tpu_custom_call.1} parent=11 // pred_check_branch
          %346 = sbr.rel (%p344) target = $region16
        $region15: #{tpu_custom_call.1} parent=11 // pred_region
          _
        $region16: #{tpu_custom_call.1} parent=11 // pred_fallthru
          _
        // Predicated region
        $region17: #{tpu_custom_call.1} parent=11 // pred_check
          %p347 = pneg %p193
        $region18: #{tpu_custom_call.1} parent=11 // pred_check_branch
          %349 = sbr.rel (%p347) target = $region20
        $region19: #{tpu_custom_call.1} parent=11 // pred_region
          _
        $region20: #{tpu_custom_call.1} parent=11 // pred_fallthru
          _
        // Predicated region
        $region21: #{tpu_custom_call.1} parent=11 // pred_check
          %p350 = pneg %p214
        $region22: #{tpu_custom_call.1} parent=11 // pred_check_branch
          %352 = sbr.rel (%p350) target = $region24
        $region23: #{tpu_custom_call.1} parent=11 // pred_region
          _
        $region24: #{tpu_custom_call.1} parent=11 // pred_fallthru
          _
        // Predicated region
        $region25: #{tpu_custom_call.1} parent=11 // pred_check
          %p353 = pneg %p235
        $region26: #{tpu_custom_call.1} parent=11 // pred_check_branch
          %355 = sbr.rel (%p353) target = $region28
        $region27: #{tpu_custom_call.1} parent=11 // pred_region
          %s357 = ssub.s32 512, 512
          %358 = vsyncadd [#allocation3], %s357
          %s359 = sshll.u32 [#allocation2], 4
          %s360 = int_to_ptr.vmem [resolvable:$true] %s359
          %365 = dma.hbm_to_vmem [thread:$0]  %s8, 512, %s360, [#allocation3], 128, 128, 8
        $region28: #{tpu_custom_call.1} parent=11 // pred_fallthru
          _
        // Predicated region
        $region29: #{tpu_custom_call.1} parent=11 // pred_check
          %p366 = pneg %p256
        $region30: #{tpu_custom_call.1} parent=11 // pred_check_branch
          %368 = sbr.rel (%p366) target = $region32
        $region31: #{tpu_custom_call.1} parent=11 // pred_region
          %s370 = ssub.s32 512, 512
          %371 = vsyncadd [#allocation5], %s370
          %s372 = sshll.u32 [#allocation4], 4
          %s373 = int_to_ptr.vmem [resolvable:$true] %s372
          %378 = dma.hbm_to_vmem [thread:$0]  %s9, 512, %s373, [#allocation5], 128, 128, 8
        $region32: #{tpu_custom_call.1} parent=11 // pred_fallthru
          _
        // Predicated region
        $region33: #{tpu_custom_call.1} parent=11 // pred_check
          %p379 = pneg %p277
        $region34: #{tpu_custom_call.1} parent=11 // pred_check_branch
          %381 = sbr.rel (%p379) target = $region36
        $region35: #{tpu_custom_call.1} parent=11 // pred_region
          %s383 = ssub.s32 512, 512
          %384 = vsyncadd [#allocation5], %s383
          %s385 = sshll.u32 [#allocation6], 4
          %s386 = int_to_ptr.vmem [resolvable:$true] %s385
          %391 = dma.hbm_to_vmem [thread:$0]  %s10, 512, %s386, [#allocation5], 128, 128, 8
        $region36: #{tpu_custom_call.1} parent=11 // pred_fallthru
          _
      $region12: #{tpu_custom_call.1} parent=5 // pred_fallthru
        _
      %p392 = scmp.lt.s32.totalorder %s21, 2
      // Predicated region
      $region37: #{tpu_custom_call.1} parent=5 // pred_check
        %p393 = pneg %p392
      $region38: #{tpu_custom_call.1} parent=5 // pred_check_branch
        %395 = sbr.rel (%p393) target = $region40
      $region39: #{tpu_custom_call.1} parent=5 // pred_region
        // Predicated region
        $region41: #{tpu_custom_call.1} parent=39 // pred_check
          %p396 = pneg %p41
        $region42: #{tpu_custom_call.1} parent=39 // pred_check_branch
          %398 = sbr.rel (%p396) target = $region44
        $region43: #{tpu_custom_call.1} parent=39 // pred_region
          %p399 = scmp.lt.s32.totalorder %s21, 1
          %s400 = scalar_select %p399, %s21, 1
          %s401 = smul.addr %s400, 8
          %s402 = scalar_lea.vmem %s0, %s401
        $region44: #{tpu_custom_call.1} parent=39 // pred_fallthru
          _
        // Predicated region
        $region45: #{tpu_custom_call.1} parent=39 // pred_check
          %p403 = pneg %p67
        $region46: #{tpu_custom_call.1} parent=39 // pred_check_branch
          %405 = sbr.rel (%p403) target = $region48
        $region47: #{tpu_custom_call.1} parent=39 // pred_region
          %p406 = scmp.lt.s32.totalorder %s21, 1
          %s407 = scalar_select %p406, %s21, 1
          %s408 = smul.addr %s407, 8
          %s409 = scalar_lea.vmem %s1, %s408
        $region48: #{tpu_custom_call.1} parent=39 // pred_fallthru
          _
        // Predicated region
        $region49: #{tpu_custom_call.1} parent=39 // pred_check
          %p410 = pneg %p93
        $region50: #{tpu_custom_call.1} parent=39 // pred_check_branch
          %412 = sbr.rel (%p410) target = $region52
        $region51: #{tpu_custom_call.1} parent=39 // pred_region
          %p413 = scmp.lt.s32.totalorder %s21, 1
          %s414 = scalar_select %p413, %s21, 1
          %s415 = smul.addr %s414, 4
          %s416 = scalar_lea.vmem %s2, %s415
        $region52: #{tpu_custom_call.1} parent=39 // pred_fallthru
          _
        // Predicated region
        $region53: #{tpu_custom_call.1} parent=39 // pred_check
          %p417 = pneg %p119
        $region54: #{tpu_custom_call.1} parent=39 // pred_check_branch
          %419 = sbr.rel (%p417) target = $region56
        $region55: #{tpu_custom_call.1} parent=39 // pred_region
          %p420 = scmp.lt.s32.totalorder %s21, 1
          %s421 = scalar_select %p420, %s21, 1
          %s422 = scalar_lea.vmem %s3, %s421
        $region56: #{tpu_custom_call.1} parent=39 // pred_fallthru
          _
        // Predicated region
        $region57: #{tpu_custom_call.1} parent=39 // pred_check
          %p423 = pneg %p145
        $region58: #{tpu_custom_call.1} parent=39 // pred_check_branch
          %425 = sbr.rel (%p423) target = $region60
        $region59: #{tpu_custom_call.1} parent=39 // pred_region
          %p426 = scmp.lt.s32.totalorder %s21, 1
          %s427 = scalar_select %p426, %s21, 1
          %s428 = smul.addr %s427, 4
          %s429 = scalar_lea.vmem %s4, %s428
        $region60: #{tpu_custom_call.1} parent=39 // pred_fallthru
          _
      $region40: #{tpu_custom_call.1} parent=5 // pred_fallthru
        _
      %p430 = scmp.le.s32.totalorder 1, %s21
      %p431 = scmp.lt.s32.totalorder %s21, 3
      %p432 = pnand %p430, %p431
      %p433 = pneg %p432
      // Predicated region
      $region61: #{tpu_custom_call.1} parent=5 // pred_check
        _
      $region62: #{tpu_custom_call.1} parent=5 // pred_check_branch
        %435 = sbr.rel (%p432) target = $region64
      $region63: #{tpu_custom_call.1} parent=5 // pred_region
        %s436 = ssub.s32 %s21, 1
        // Predicated region
        $region65: #{tpu_custom_call.1} parent=63 // pred_check
          %p437 = pneg %p235
        $region66: #{tpu_custom_call.1} parent=63 // pred_check_branch
          %439 = sbr.rel (%p437) target = $region68
        $region67: #{tpu_custom_call.1} parent=63 // pred_region
          %440 = dma.done [#allocation3], 512
        $region68: #{tpu_custom_call.1} parent=63 // pred_fallthru
          _
        // Predicated region
        $region69: #{tpu_custom_call.1} parent=63 // pred_check
          %p441 = pneg %p256
        $region70: #{tpu_custom_call.1} parent=63 // pred_check_branch
          %443 = sbr.rel (%p441) target = $region72
        $region71: #{tpu_custom_call.1} parent=63 // pred_region
          %444 = dma.done [#allocation5], 512
        $region72: #{tpu_custom_call.1} parent=63 // pred_fallthru
          _
        // Predicated region
        $region73: #{tpu_custom_call.1} parent=63 // pred_check
          %p445 = pneg %p277
        $region74: #{tpu_custom_call.1} parent=63 // pred_check_branch
          %447 = sbr.rel (%p445) target = $region76
        $region75: #{tpu_custom_call.1} parent=63 // pred_region
          %448 = dma.done [#allocation5], 512
        $region76: #{tpu_custom_call.1} parent=63 // pred_fallthru
          _
        %p449 = scmp.lt.s32.totalorder %s26, 1
        %s450 = scalar_select %p449, %s26, 1
        %s451 = smul.addr %s450, 8
        %s452 = scalar_lea.vmem %s0, %s451
        %p453 = pneg %p47
        %p454 = pneg %p44
        %p455 = scmp.lt.s32.totalorder %s26, 1
        %s456 = scalar_select %p455, %s26, 1
        %s457 = smul.addr %s456, 8
        %s458 = scalar_lea.vmem %s1, %s457
        %p459 = pneg %p73
        %p460 = pneg %p70
        %p461 = scmp.lt.s32.totalorder %s26, 1
        %s462 = scalar_select %p461, %s26, 1
        %s463 = smul.addr %s462, 4
        %s464 = scalar_lea.vmem %s2, %s463
        %p465 = pneg %p99
        %p466 = pneg %p96
        %p467 = scmp.lt.s32.totalorder %s26, 1
        %s468 = scalar_select %p467, %s26, 1
        %s469 = scalar_lea.vmem %s3, %s468
        %p470 = pneg %p125
        %p471 = pneg %p122
        %p472 = scmp.lt.s32.totalorder %s26, 1
        %s473 = scalar_select %p472, %s26, 1
        %s474 = smul.addr %s473, 4
        %s475 = scalar_lea.vmem %s4, %s474
        %p476 = pneg %p151
        %p477 = pneg %p148
        %p478 = pneg %p172
        %p479 = pneg %p169
        %p480 = pneg %p193
        %p481 = pneg %p190
        %p482 = pneg %p214
        %p483 = pneg %p211
        %p484 = pneg %p235
        %p485 = pneg %p232
        %p486 = pneg %p256
        %p487 = pneg %p253
        %p488 = pneg %p277
        %p489 = pneg %p274
        %p490 = pneg %p303
        %p491 = pneg %p300
        %p492 = scmp.lt.s32.totalorder %s26, 1
        %s493 = scalar_select %p492, %s26, 1
        %s494 = smul.addr %s493, 2
        %s495 = smul.addr %s494, 8
        %s496 = scalar_lea.vmem %s11, %s495
        %p497 = pneg %p329
        %p498 = pneg %p326
        %p499 = scmp.lt.s32.totalorder %s26, 1
        %s500 = scalar_select %p499, %s26, 1
        %s501 = smul.addr %s500, 2
        %s502 = smul.addr %s501, 8
        %s503 = scalar_lea.vmem %s12, %s502
        %p504 = scmp.lt.s32.totalorder %s26, 1
        %s505 = scalar_select %p504, %s26, 1
        %s506 = smul.addr %s505, 8
        %s507 = scalar_lea.vmem %s0, %s506
        %p508 = scmp.lt.s32.totalorder %s26, 1
        %s509 = scalar_select %p508, %s26, 1
        %s510 = smul.addr %s509, 8
        %s511 = scalar_lea.vmem %s1, %s510
        %p512 = scmp.lt.s32.totalorder %s26, 1
        %s513 = scalar_select %p512, %s26, 1
        %s514 = smul.addr %s513, 4
        %s515 = scalar_lea.vmem %s2, %s514
        %p516 = scmp.lt.s32.totalorder %s26, 1
        %s517 = scalar_select %p516, %s26, 1
        %s518 = scalar_lea.vmem %s3, %s517
        %p519 = scmp.lt.s32.totalorder %s26, 1
        %s520 = scalar_select %p519, %s26, 1
        %s521 = smul.addr %s520, 4
        %s522 = scalar_lea.vmem %s4, %s521
        %p523 = scmp.lt.s32.totalorder %s26, 1
        %s524 = scalar_select %p523, %s26, 1
        %s525 = smul.addr %s524, 2
        %s526 = smul.addr %s525, 8
        %s527 = scalar_lea.vmem %s11, %s526
        %p528 = scmp.lt.s32.totalorder %s26, 1
        %s529 = scalar_select %p528, %s26, 1
        %s530 = smul.addr %s529, 2
        %s531 = smul.addr %s530, 8
        %s532 = scalar_lea.vmem %s12, %s531
        %v533 = vld [vmem:[%s507] sm:$0x1f]
        %v534 = vld [vmem:[%s511] sm:$0x1f]
        %v535 = vld [vmem:[%s515] sm:$0x7]
        %v536 = vld [vmem:[%s518] sm:$0x1]
        %v537 = vld [vmem:[%s522] sm:$0x7]
        %v538 = vlaneseq
        %v539 = vshrl.u32 %v538, 7
        %v540 = vsub.s32 0, %v539
        %v541 = vrot.slane %v536, %v540
        %542 = vset.pattern.permute.xlu0 0
        %543 = vperm.xlu0 %542, %v537
        %v544 = vpop.permute.xlu0 %543
        %vm545 = vcmp.ne.s32.totalorder %v541, %v544
        %v546 = vsel %vm545, 1, 0
        %v547 = vcvt.s32.f32 %v546
        %v550 = vunpack.c.l.s4 1966171168
        %v551 = vunpack.c.0.s8 %v550
        %v552 = vlaneseq
        %v553 = vshrl.u32 %v552, 7
        %v554 = vsub.s32 %v551, %v553
        %v555 = vrot.slane %v547, %v554
        %v556 = vcombine.high %v555, %v555
        %v558 = vunpack.c.l.s4 1966171168
        %v559 = vunpack.c.0.s8 %v558
        %v560 = vlaneseq
        %v561 = vshrl.u32 %v560, 7
        %v562 = vsub.s32 %v559, %v561
        %v563 = vrot.slane %v555, %v562
        %v565 = vunpack.c.l.s4 1966171168
        %v566 = vunpack.c.0.s8 %v565
        %v567 = vlaneseq
        %v568 = vshrl.u32 %v567, 7
        %v569 = vsub.s32 %v566, %v568
        %v570 = vrot.slane %v556, %v569
        %v571 = vcombine.high %v563, %v563
        %v572 = vlaneseq
        %v573 = vshrl.u32 %v572, 7
        %v574 = vsub.s32 0, %v573
        %v575 = vrot.slane %v563, %v574
        %v576 = vlaneseq
        %v577 = vshrl.u32 %v576, 7
        %v578 = vsub.s32 0, %v577
        %v579 = vrot.slane %v570, %v578
        %v580 = vlaneseq
        %v581 = vshrl.u32 %v580, 7
        %v582 = vsub.s32 0, %v581
        %v583 = vrot.slane %v571, %v582
        %v585 = vunpack.c.l.s4 1966171168
        %v586 = vunpack.c.0.s8 %v585
        %v587 = vlaneseq
        %v588 = vshrl.u32 %v587, 7
        %v589 = vsub.s32 %v586, %v588
        %v590 = vrot.slane %v575, %v589
        %v591 = vcombine.high %v590, %v590
        %v593 = vunpack.c.l.s4 1966171168
        %v594 = vunpack.c.0.s8 %v593
        %v595 = vlaneseq
        %v596 = vshrl.u32 %v595, 7
        %v597 = vsub.s32 %v594, %v596
        %v598 = vrot.slane %v590, %v597
        %v600 = vunpack.c.l.s4 1966171168
        %v601 = vunpack.c.0.s8 %v600
        %v602 = vlaneseq
        %v603 = vshrl.u32 %v602, 7
        %v604 = vsub.s32 %v601, %v603
        %v605 = vrot.slane %v591, %v604
        %v606 = vcombine.high %v598, %v598
        %v608 = vunpack.c.l.s4 1966171168
        %v609 = vunpack.c.0.s8 %v608
        %v610 = vlaneseq
        %v611 = vshrl.u32 %v610, 7
        %v612 = vsub.s32 %v609, %v611
        %v613 = vrot.slane %v579, %v612
        %v614 = vcombine.high %v613, %v613
        %v616 = vunpack.c.l.s4 1966171168
        %v617 = vunpack.c.0.s8 %v616
        %v618 = vlaneseq
        %v619 = vshrl.u32 %v618, 7
        %v620 = vsub.s32 %v617, %v619
        %v621 = vrot.slane %v613, %v620
        %v623 = vunpack.c.l.s4 1966171168
        %v624 = vunpack.c.0.s8 %v623
        %v625 = vlaneseq
        %v626 = vshrl.u32 %v625, 7
        %v627 = vsub.s32 %v624, %v626
        %v628 = vrot.slane %v614, %v627
        %v629 = vcombine.high %v621, %v621
        %v631 = vunpack.c.l.s4 1966171168
        %v632 = vunpack.c.0.s8 %v631
        %v633 = vlaneseq
        %v634 = vshrl.u32 %v633, 7
        %v635 = vsub.s32 %v632, %v634
        %v636 = vrot.slane %v583, %v635
        %v637 = vcombine.high %v636, %v636
        %v639 = vunpack.c.l.s4 1966171168
        %v640 = vunpack.c.0.s8 %v639
        %v641 = vlaneseq
        %v642 = vshrl.u32 %v641, 7
        %v643 = vsub.s32 %v640, %v642
        %v644 = vrot.slane %v636, %v643
        %v646 = vunpack.c.l.s4 1966171168
        %v647 = vunpack.c.0.s8 %v646
        %v648 = vlaneseq
        %v649 = vshrl.u32 %v648, 7
        %v650 = vsub.s32 %v647, %v649
        %v651 = vrot.slane %v637, %v650
        %v652 = vcombine.high %v644, %v644
        %v665 = vld [vmem:[%s5] sm:$0xff]
        %v666 = vld [vmem:[%s5 + $0x8] sm:$0xff]
        %v667 = vld [vmem:[%s5 + $0x10] sm:$0xff]
        %v668 = vld [vmem:[%s5 + $0x18] sm:$0xff]
        %v669 = vld [vmem:[%s6] sm:$0xff]
        %v670 = vld [vmem:[%s6 + $0x8] sm:$0xff]
        %v671 = vld [vmem:[%s6 + $0x10] sm:$0xff]
        %v672 = vld [vmem:[%s6 + $0x18] sm:$0xff]
        %v673 = vld [vmem:[%s7] sm:$0xff]
        %v674 = vld [vmem:[%s7 + $0x8] sm:$0xff]
        %v675 = vld [vmem:[%s7 + $0x10] sm:$0xff]
        %v676 = vld [vmem:[%s7 + $0x18] sm:$0xff]
        %vm677 = vcmask 261120
        %v679 = vsel %vm677, %v535, 0
        %681 = vmatprep.subr.mxu0 0.0
        %682 = vmatpush1.msra.mxu0 %v665
        %683 = vmatprep.subr.mxu0 0.0
        %684 = vmatpush1.msra.mxu0 %v666
        %685 = vmatprep.subr.mxu0 0.0
        %686 = vmatpush1.msra.mxu0 %v667
        %687 = vmatprep.subr.mxu0 0.0
        %688 = vmatpush1.msra.mxu0 %v668
        %689 = vmatprep.subr.mxu0 0.0
        %690 = vmatpush1.msra.mxu0 0.0
        %691 = vmatprep.subr.mxu0 0.0
        %692 = vmatpush1.msra.mxu0 0.0
        %693 = vmatprep.subr.mxu0 0.0
        %694 = vmatpush1.msra.mxu0 0.0
        %695 = vmatprep.subr.mxu0 0.0
        %696 = vmatpush1.msra.mxu0 0.0
        %697 = vmatprep.subr.mxu0 0.0
        %698 = vmatpush1.msra.mxu0 0.0
        %699 = vmatprep.subr.mxu0 0.0
        %700 = vmatpush1.msra.mxu0 0.0
        %701 = vmatprep.subr.mxu0 0.0
        %702 = vmatpush1.msra.mxu0 0.0
        %703 = vmatprep.subr.mxu0 0.0
        %704 = vmatpush1.msra.mxu0 0.0
        %705 = vmatprep.subr.mxu0 0.0
        %706 = vmatpush1.msra.mxu0 0.0
        %707 = vmatprep.subr.mxu0 0.0
        %708 = vmatpush1.msra.mxu0 0.0
        %709 = vmatprep.subr.mxu0 0.0
        %710 = vmatpush1.msra.mxu0 0.0
        %711 = vmatprep.subr.mxu0 0.0
        %712 = vmatpush1.msra.mxu0 0.0
        %713 = vmatprep.subr.mxu0 0.0
        %714 = vmatpush1.msra.mxu0 0.0
        %715 = vmatprep.subr.mxu0 0.0
        %716 = vmatpush1.msra.mxu0 0.0
        %717 = vmatprep.subr.mxu0 0.0
        %718 = vmatpush1.msra.mxu0 0.0
        %719 = vmatprep.subr.mxu0 0.0
        %720 = vmatpush1.msra.mxu0 0.0
        %721 = vmatprep.subr.mxu0 0.0
        %722 = vmatpush1.msra.mxu0 0.0
        %723 = vmatprep.subr.mxu0 0.0
        %724 = vmatpush1.msra.mxu0 0.0
        %725 = vmatprep.subr.mxu0 0.0
        %726 = vmatpush1.msra.mxu0 0.0
        %727 = vmatprep.subr.mxu0 0.0
        %728 = vmatpush1.msra.mxu0 0.0
        %729 = vmatprep.subr.mxu0 0.0
        %730 = vmatpush1.msra.mxu0 0.0
        %731 = vmatprep.subr.mxu0 0.0
        %732 = vmatpush1.msra.mxu0 0.0
        %733 = vmatprep.subr.mxu0 0.0
        %734 = vmatpush1.msra.mxu0 0.0
        %735 = vmatprep.subr.mxu0 0.0
        %736 = vmatpush1.msra.mxu0 0.0
        %737 = vmatprep.subr.mxu0 0.0
        %738 = vmatpush1.msra.mxu0 0.0
        %739 = vmatprep.subr.mxu0 0.0
        %740 = vmatpush1.msra.mxu0 0.0
        %741 = vmatprep.subr.mxu0 0.0
        %742 = vmatpush1.msra.mxu0 0.0
        %743 = vmatprep.subr.mxu0 0.0
        %744 = vmatpush1.msra.mxu0 0.0
        %745 = vmatprep.mubr.f32.mxu0 0.0
        %746 = vmatmul.mubr.f32.gmra.mrb[0].mxu0 %v679
        %v747 = vpop.f32.mrb[0].mxu0
        %v748 = vadd.f32 0.0, %v747
        %v749 = vpop.f32.mrb[0].mxu0
        %750 = vdwg.mxu0
        %v752 = vsel %vm677, %v533, 0
        %754 = vmatprep.subr.mxu0 0.0
        %755 = vmatpush1.msra.mxu0 %v669
        %756 = vmatprep.subr.mxu0 0.0
        %757 = vmatpush1.msra.mxu0 %v670
        %758 = vmatprep.subr.mxu0 0.0
        %759 = vmatpush1.msra.mxu0 %v671
        %760 = vmatprep.subr.mxu0 0.0
        %761 = vmatpush1.msra.mxu0 %v672
        %762 = vmatprep.subr.mxu0 0.0
        %763 = vmatpush1.msra.mxu0 0.0
        %764 = vmatprep.subr.mxu0 0.0
        %765 = vmatpush1.msra.mxu0 0.0
        %766 = vmatprep.subr.mxu0 0.0
        %767 = vmatpush1.msra.mxu0 0.0
        %768 = vmatprep.subr.mxu0 0.0
        %769 = vmatpush1.msra.mxu0 0.0
        %770 = vmatprep.subr.mxu0 0.0
        %771 = vmatpush1.msra.mxu0 0.0
        %772 = vmatprep.subr.mxu0 0.0
        %773 = vmatpush1.msra.mxu0 0.0
        %774 = vmatprep.subr.mxu0 0.0
        %775 = vmatpush1.msra.mxu0 0.0
        %776 = vmatprep.subr.mxu0 0.0
        %777 = vmatpush1.msra.mxu0 0.0
        %778 = vmatprep.subr.mxu0 0.0
        %779 = vmatpush1.msra.mxu0 0.0
        %780 = vmatprep.subr.mxu0 0.0
        %781 = vmatpush1.msra.mxu0 0.0
        %782 = vmatprep.subr.mxu0 0.0
        %783 = vmatpush1.msra.mxu0 0.0
        %784 = vmatprep.subr.mxu0 0.0
        %785 = vmatpush1.msra.mxu0 0.0
        %786 = vmatprep.subr.mxu0 0.0
        %787 = vmatpush1.msra.mxu0 0.0
        %788 = vmatprep.subr.mxu0 0.0
        %789 = vmatpush1.msra.mxu0 0.0
        %790 = vmatprep.subr.mxu0 0.0
        %791 = vmatpush1.msra.mxu0 0.0
        %792 = vmatprep.subr.mxu0 0.0
        %793 = vmatpush1.msra.mxu0 0.0
        %794 = vmatprep.subr.mxu0 0.0
        %795 = vmatpush1.msra.mxu0 0.0
        %796 = vmatprep.subr.mxu0 0.0
        %797 = vmatpush1.msra.mxu0 0.0
        %798 = vmatprep.subr.mxu0 0.0
        %799 = vmatpush1.msra.mxu0 0.0
        %800 = vmatprep.subr.mxu0 0.0
        %801 = vmatpush1.msra.mxu0 0.0
        %802 = vmatprep.subr.mxu0 0.0
        %803 = vmatpush1.msra.mxu0 0.0
        %804 = vmatprep.subr.mxu0 0.0
        %805 = vmatpush1.msra.mxu0 0.0
        %806 = vmatprep.subr.mxu0 0.0
        %807 = vmatpush1.msra.mxu0 0.0
        %808 = vmatprep.subr.mxu0 0.0
        %809 = vmatpush1.msra.mxu0 0.0
        %810 = vmatprep.subr.mxu0 0.0
        %811 = vmatpush1.msra.mxu0 0.0
        %812 = vmatprep.subr.mxu0 0.0
        %813 = vmatpush1.msra.mxu0 0.0
        %814 = vmatprep.subr.mxu0 0.0
        %815 = vmatpush1.msra.mxu0 0.0
        %816 = vmatprep.subr.mxu0 0.0
        %817 = vmatpush1.msra.mxu0 0.0
        %818 = vmatprep.mubr.f32.mxu0 0.0
        %819 = vmatmul.mubr.f32.gmra.mrb[0].mxu0 %v752
        %v820 = vpop.f32.mrb[0].mxu0
        %v821 = vadd.f32 0.0, %v820
        %v822 = vpop.f32.mrb[0].mxu0
        %823 = vdwg.mxu0
        %v825 = vsel %vm677, %v534, 0
        %827 = vmatprep.subr.mxu0 0.0
        %828 = vmatpush1.msra.mxu0 %v673
        %829 = vmatprep.subr.mxu0 0.0
        %830 = vmatpush1.msra.mxu0 %v674
        %831 = vmatprep.subr.mxu0 0.0
        %832 = vmatpush1.msra.mxu0 %v675
        %833 = vmatprep.subr.mxu0 0.0
        %834 = vmatpush1.msra.mxu0 %v676
        %835 = vmatprep.subr.mxu0 0.0
        %836 = vmatpush1.msra.mxu0 0.0
        %837 = vmatprep.subr.mxu0 0.0
        %838 = vmatpush1.msra.mxu0 0.0
        %839 = vmatprep.subr.mxu0 0.0
        %840 = vmatpush1.msra.mxu0 0.0
        %841 = vmatprep.subr.mxu0 0.0
        %842 = vmatpush1.msra.mxu0 0.0
        %843 = vmatprep.subr.mxu0 0.0
        %844 = vmatpush1.msra.mxu0 0.0
        %845 = vmatprep.subr.mxu0 0.0
        %846 = vmatpush1.msra.mxu0 0.0
        %847 = vmatprep.subr.mxu0 0.0
        %848 = vmatpush1.msra.mxu0 0.0
        %849 = vmatprep.subr.mxu0 0.0
        %850 = vmatpush1.msra.mxu0 0.0
        %851 = vmatprep.subr.mxu0 0.0
        %852 = vmatpush1.msra.mxu0 0.0
        %853 = vmatprep.subr.mxu0 0.0
        %854 = vmatpush1.msra.mxu0 0.0
        %855 = vmatprep.subr.mxu0 0.0
        %856 = vmatpush1.msra.mxu0 0.0
        %857 = vmatprep.subr.mxu0 0.0
        %858 = vmatpush1.msra.mxu0 0.0
        %859 = vmatprep.subr.mxu0 0.0
        %860 = vmatpush1.msra.mxu0 0.0
        %861 = vmatprep.subr.mxu0 0.0
        %862 = vmatpush1.msra.mxu0 0.0
        %863 = vmatprep.subr.mxu0 0.0
        %864 = vmatpush1.msra.mxu0 0.0
        %865 = vmatprep.subr.mxu0 0.0
        %866 = vmatpush1.msra.mxu0 0.0
        %867 = vmatprep.subr.mxu0 0.0
        %868 = vmatpush1.msra.mxu0 0.0
        %869 = vmatprep.subr.mxu0 0.0
        %870 = vmatpush1.msra.mxu0 0.0
        %871 = vmatprep.subr.mxu0 0.0
        %872 = vmatpush1.msra.mxu0 0.0
        %873 = vmatprep.subr.mxu0 0.0
        %874 = vmatpush1.msra.mxu0 0.0
        %875 = vmatprep.subr.mxu0 0.0
        %876 = vmatpush1.msra.mxu0 0.0
        %877 = vmatprep.subr.mxu0 0.0
        %878 = vmatpush1.msra.mxu0 0.0
        %879 = vmatprep.subr.mxu0 0.0
        %880 = vmatpush1.msra.mxu0 0.0
        %881 = vmatprep.subr.mxu0 0.0
        %882 = vmatpush1.msra.mxu0 0.0
        %883 = vmatprep.subr.mxu0 0.0
        %884 = vmatpush1.msra.mxu0 0.0
        %885 = vmatprep.subr.mxu0 0.0
        %886 = vmatpush1.msra.mxu0 0.0
        %887 = vmatprep.subr.mxu0 0.0
        %888 = vmatpush1.msra.mxu0 0.0
        %889 = vmatprep.subr.mxu0 0.0
        %890 = vmatpush1.msra.mxu0 0.0
        %891 = vmatprep.mubr.f32.mxu0 0.0
        %892 = vmatmul.mubr.f32.gmra.mrb[0].mxu0 %v825
        %v893 = vpop.f32.mrb[0].mxu0
        %v894 = vadd.f32 0.0, %v893
        %v895 = vpop.f32.mrb[0].mxu0
        %896 = vdwg.mxu0
        %vm897 = vcmask 64512
        %v899 = vsel %vm897, %v748, 0
        %v902 = vsel %vm897, %v821, 0
        %904 = vmatprep.subr.mxu0 0.0
        %905 = vmatpush1.xpose.msra.mxu0 %v902
        %906 = vmatprep.subr.mxu0 0.0
        %907 = vmatpush1.xpose.msra.mxu0 0.0
        %908 = vmatprep.subr.mxu0 0.0
        %909 = vmatpush1.xpose.msra.mxu0 0.0
        %910 = vmatprep.subr.mxu0 0.0
        %911 = vmatpush1.xpose.msra.mxu0 0.0
        %912 = vmatprep.subr.mxu0 0.0
        %913 = vmatpush1.xpose.msra.mxu0 0.0
        %914 = vmatprep.subr.mxu0 0.0
        %915 = vmatpush1.xpose.msra.mxu0 0.0
        %916 = vmatprep.subr.mxu0 0.0
        %917 = vmatpush1.xpose.msra.mxu0 0.0
        %918 = vmatprep.subr.mxu0 0.0
        %919 = vmatpush1.xpose.msra.mxu0 0.0
        %920 = vmatprep.subr.mxu0 0.0
        %921 = vmatpush1.xpose.msra.mxu0 0.0
        %922 = vmatprep.subr.mxu0 0.0
        %923 = vmatpush1.xpose.msra.mxu0 0.0
        %924 = vmatprep.subr.mxu0 0.0
        %925 = vmatpush1.xpose.msra.mxu0 0.0
        %926 = vmatprep.subr.mxu0 0.0
        %927 = vmatpush1.xpose.msra.mxu0 0.0
        %928 = vmatprep.subr.mxu0 0.0
        %929 = vmatpush1.xpose.msra.mxu0 0.0
        %930 = vmatprep.subr.mxu0 0.0
        %931 = vmatpush1.xpose.msra.mxu0 0.0
        %932 = vmatprep.subr.mxu0 0.0
        %933 = vmatpush1.xpose.msra.mxu0 0.0
        %934 = vmatprep.subr.mxu0 0.0
        %935 = vmatpush1.xpose.msra.mxu0 0.0
        %936 = vmatprep.subr.mxu0 0.0
        %937 = vmatpush1.xpose.msra.mxu0 0.0
        %938 = vmatprep.subr.mxu0 0.0
        %939 = vmatpush1.xpose.msra.mxu0 0.0
        %940 = vmatprep.subr.mxu0 0.0
        %941 = vmatpush1.xpose.msra.mxu0 0.0
        %942 = vmatprep.subr.mxu0 0.0
        %943 = vmatpush1.xpose.msra.mxu0 0.0
        %944 = vmatprep.subr.mxu0 0.0
        %945 = vmatpush1.xpose.msra.mxu0 0.0
        %946 = vmatprep.subr.mxu0 0.0
        %947 = vmatpush1.xpose.msra.mxu0 0.0
        %948 = vmatprep.subr.mxu0 0.0
        %949 = vmatpush1.xpose.msra.mxu0 0.0
        %950 = vmatprep.subr.mxu0 0.0
        %951 = vmatpush1.xpose.msra.mxu0 0.0
        %952 = vmatprep.subr.mxu0 0.0
        %953 = vmatpush1.xpose.msra.mxu0 0.0
        %954 = vmatprep.subr.mxu0 0.0
        %955 = vmatpush1.xpose.msra.mxu0 0.0
        %956 = vmatprep.subr.mxu0 0.0
        %957 = vmatpush1.xpose.msra.mxu0 0.0
        %958 = vmatprep.subr.mxu0 0.0
        %959 = vmatpush1.xpose.msra.mxu0 0.0
        %960 = vmatprep.subr.mxu0 0.0
        %961 = vmatpush1.xpose.msra.mxu0 0.0
        %962 = vmatprep.subr.mxu0 0.0
        %963 = vmatpush1.xpose.msra.mxu0 0.0
        %964 = vmatprep.subr.mxu0 0.0
        %965 = vmatpush1.xpose.msra.mxu0 0.0
        %966 = vmatprep.subr.mxu0 0.0
        %967 = vmatpush1.xpose.msra.mxu0 0.0
        %968 = vmatprep.mubr.f32.mxu0 0.0
        %969 = vmatmul.mubr.f32.gmra.mrb[0].mxu0 %v899
        %v970 = vpop.f32.mrb[0].mxu0
        %v971 = vadd.f32 0.0, %v970
        %v972 = vpop.f32.mrb[0].mxu0
        %973 = vdwg.mxu0
        %v974 = vmul.f32 %v971, 0.35355338
        %v977 = vunpack.c.l.s4 1966171168
        %v978 = vunpack.c.0.s8 %v977
        %v979 = vlaneseq
        %v980 = vshrl.u32 %v979, 7
        %v981 = vsub.s32 %v978, %v980
        %v982 = vrot.slane %v974, %v981
        %v983 = vcombine.high %v982, %v982
        %v985 = vunpack.c.l.s4 1966171168
        %v986 = vunpack.c.0.s8 %v985
        %v987 = vlaneseq
        %v988 = vshrl.u32 %v987, 7
        %v989 = vsub.s32 %v986, %v988
        %v990 = vrot.slane %v982, %v989
        %v992 = vunpack.c.l.s4 1966171168
        %v993 = vunpack.c.0.s8 %v992
        %v994 = vlaneseq
        %v995 = vshrl.u32 %v994, 7
        %v996 = vsub.s32 %v993, %v995
        %v997 = vrot.slane %v983, %v996
        %v998 = vcombine.high %v990, %v990
        %vm1002 = vcmp.gt.f32.partialorder %v598, 0.5
        %vm1003 = vcmp.gt.f32.partialorder %v605, 0.5
        %vm1004 = vcmp.gt.f32.partialorder %v606, 0.5
        %vm1005 = vcmp.gt.f32.partialorder %v621, 0.5
        %vm1006 = vcmp.gt.f32.partialorder %v628, 0.5
        %vm1007 = vcmp.gt.f32.partialorder %v629, 0.5
        %vm1008 = vcmp.gt.f32.partialorder %v644, 0.5
        %vm1009 = vcmp.gt.f32.partialorder %v651, 0.5
        %vm1010 = vcmp.gt.f32.partialorder %v652, 0.5
        %v1011 = vsel %vm1002, -1e+30, %v990
        %v1012 = vsel %vm1003, -1e+30, %v997
        %v1013 = vsel %vm1004, -1e+30, %v998
        %v1014 = vsel %vm1005, -1e+30, %v990
        %v1015 = vsel %vm1006, -1e+30, %v997
        %v1016 = vsel %vm1007, -1e+30, %v998
        %v1017 = vsel %vm1008, -1e+30, %v990
        %v1018 = vsel %vm1009, -1e+30, %v997
        %v1019 = vsel %vm1010, -1e+30, %v998
        %v1029 = vcombine.low %v1011, %v1012
        %v1030 = vcombine.low %v1013, %v1014
        %v1031 = vcombine.low %v1015, %v1016
        %v1032 = vcombine.low %v1017, %v1018
        %v1034 = vunpack.c.l.s4 1966171168
        %v1035 = vunpack.c.0.s8 %v1034
        %v1036 = vlaneseq
        %v1037 = vshrl.u32 %v1036, 7
        %v1038 = vsub.s32 %v1035, %v1037
        %v1039 = vrot.slane %v1029, %v1038
        %v1041 = vunpack.c.l.s4 1966171168
        %v1042 = vunpack.c.0.s8 %v1041
        %v1043 = vlaneseq
        %v1044 = vshrl.u32 %v1043, 7
        %v1045 = vsub.s32 %v1042, %v1044
        %v1046 = vrot.slane %v1030, %v1045
        %v1048 = vunpack.c.l.s4 1966171168
        %v1049 = vunpack.c.0.s8 %v1048
        %v1050 = vlaneseq
        %v1051 = vshrl.u32 %v1050, 7
        %v1052 = vsub.s32 %v1049, %v1051
        %v1053 = vrot.slane %v1031, %v1052
        %v1055 = vunpack.c.l.s4 1966171168
        %v1056 = vunpack.c.0.s8 %v1055
        %v1057 = vlaneseq
        %v1058 = vshrl.u32 %v1057, 7
        %v1059 = vsub.s32 %v1056, %v1058
        %v1060 = vrot.slane %v1032, %v1059
        %v1061 = vcombine.low %v1039, %v1046
        %v1062 = vcombine.low %v1053, %v1060
        %v1064 = vunpack.c.l.s4 1966171168
        %v1065 = vunpack.c.0.s8 %v1064
        %v1066 = vlaneseq
        %v1067 = vshrl.u32 %v1066, 7
        %v1068 = vsub.s32 %v1065, %v1067
        %v1069 = vrot.slane %v1061, %v1068
        %v1071 = vunpack.c.l.s4 1966171168
        %v1072 = vunpack.c.0.s8 %v1071
        %v1073 = vlaneseq
        %v1074 = vshrl.u32 %v1073, 7
        %v1075 = vsub.s32 %v1072, %v1074
        %v1076 = vrot.slane %v1062, %v1075
        %v1077 = vcombine.low %v1069, %v1076
        %v1079 = vunpack.c.l.s4 1966171168
        %v1080 = vunpack.c.0.s8 %v1079
        %v1081 = vlaneseq
        %v1082 = vshrl.u32 %v1081, 7
        %v1083 = vsub.s32 %v1080, %v1082
        %v1084 = vrot.slane %v1019, %v1083
        %v1086 = vunpack.c.l.s4 1966171168
        %v1087 = vunpack.c.0.s8 %v1086
        %v1088 = vlaneseq
        %v1089 = vshrl.u32 %v1088, 7
        %v1090 = vsub.s32 %v1087, %v1089
        %v1091 = vrot.slane %v1084, %v1090
        %vm1094 = vcmask 39936
        %v1095 = vsel %vm1094, %v1077, -inf
        %1096 = vmax.xlane.f32.xlu0 %v1095
        %v1097 = vpop.xlane.xlu0 %1096
        %vm1098 = vcmask 32768
        %v1099 = vsel %vm1098, %v1091, -inf
        %1100 = vmax.xlane.f32.xlu0 %v1099
        %v1101 = vpop.xlane.xlu0 %1100
        %v1104 = vlaneseq
        %v1105 = vshrl.u32 %v1104, 7
        %v1106 = vsub.s32 0, %v1105
        %v1107 = vrot.slane %v1097, %v1106
        %v1108 = vlaneseq
        %v1109 = vshrl.u32 %v1108, 7
        %v1110 = vsub.s32 1, %v1109
        %v1111 = vrot.slane %v1097, %v1110
        %v1112 = vlaneseq
        %v1113 = vshrl.u32 %v1112, 7
        %v1114 = vsub.s32 2, %v1113
        %v1115 = vrot.slane %v1097, %v1114
        %v1116 = vlaneseq
        %v1117 = vshrl.u32 %v1116, 7
        %v1118 = vsub.s32 3, %v1117
        %v1119 = vrot.slane %v1097, %v1118
        %v1120 = vlaneseq
        %v1121 = vshrl.u32 %v1120, 7
        %v1122 = vsub.s32 4, %v1121
        %v1123 = vrot.slane %v1097, %v1122
        %v1124 = vlaneseq
        %v1125 = vshrl.u32 %v1124, 7
        %v1126 = vsub.s32 5, %v1125
        %v1127 = vrot.slane %v1097, %v1126
        %v1128 = vlaneseq
        %v1129 = vshrl.u32 %v1128, 7
        %v1130 = vsub.s32 6, %v1129
        %v1131 = vrot.slane %v1097, %v1130
        %v1132 = vlaneseq
        %v1133 = vshrl.u32 %v1132, 7
        %v1134 = vsub.s32 7, %v1133
        %v1135 = vrot.slane %v1097, %v1134
        %v1136 = vlaneseq
        %v1137 = vshrl.u32 %v1136, 7
        %v1138 = vsub.s32 0, %v1137
        %v1139 = vrot.slane %v1101, %v1138
        %v1149 = vsub.f32 %v1011, %v1107
        %v1150 = vsub.f32 %v1012, %v1111
        %v1151 = vsub.f32 %v1013, %v1115
        %v1152 = vsub.f32 %v1014, %v1119
        %v1153 = vsub.f32 %v1015, %v1123
        %v1154 = vsub.f32 %v1016, %v1127
        %v1155 = vsub.f32 %v1017, %v1131
        %v1156 = vsub.f32 %v1018, %v1135
        %v1157 = vsub.f32 %v1019, %v1139
        %v1158 = vmul.f32 %v1149, 1.442695
        %v1159 = vpow.pop %v1158
        %v1160 = vmul.f32 %v1150, 1.442695
        %v1161 = vpow.pop %v1160
        %v1162 = vmul.f32 %v1151, 1.442695
        %v1163 = vpow.pop %v1162
        %v1164 = vmul.f32 %v1152, 1.442695
        %v1165 = vpow.pop %v1164
        %v1166 = vmul.f32 %v1153, 1.442695
        %v1167 = vpow.pop %v1166
        %v1168 = vmul.f32 %v1154, 1.442695
        %v1169 = vpow.pop %v1168
        %v1170 = vmul.f32 %v1155, 1.442695
        %v1171 = vpow.pop %v1170
        %v1172 = vmul.f32 %v1156, 1.442695
        %v1173 = vpow.pop %v1172
        %v1174 = vmul.f32 %v1157, 1.442695
        %v1175 = vpow.pop %v1174
        %v1185 = vcombine.low %v1159, %v1161
        %v1186 = vcombine.low %v1163, %v1165
        %v1187 = vcombine.low %v1167, %v1169
        %v1188 = vcombine.low %v1171, %v1173
        %v1190 = vunpack.c.l.s4 1966171168
        %v1191 = vunpack.c.0.s8 %v1190
        %v1192 = vlaneseq
        %v1193 = vshrl.u32 %v1192, 7
        %v1194 = vsub.s32 %v1191, %v1193
        %v1195 = vrot.slane %v1185, %v1194
        %v1197 = vunpack.c.l.s4 1966171168
        %v1198 = vunpack.c.0.s8 %v1197
        %v1199 = vlaneseq
        %v1200 = vshrl.u32 %v1199, 7
        %v1201 = vsub.s32 %v1198, %v1200
        %v1202 = vrot.slane %v1186, %v1201
        %v1204 = vunpack.c.l.s4 1966171168
        %v1205 = vunpack.c.0.s8 %v1204
        %v1206 = vlaneseq
        %v1207 = vshrl.u32 %v1206, 7
        %v1208 = vsub.s32 %v1205, %v1207
        %v1209 = vrot.slane %v1187, %v1208
        %v1211 = vunpack.c.l.s4 1966171168
        %v1212 = vunpack.c.0.s8 %v1211
        %v1213 = vlaneseq
        %v1214 = vshrl.u32 %v1213, 7
        %v1215 = vsub.s32 %v1212, %v1214
        %v1216 = vrot.slane %v1188, %v1215
        %v1217 = vcombine.low %v1195, %v1202
        %v1218 = vcombine.low %v1209, %v1216
        %v1220 = vunpack.c.l.s4 1966171168
        %v1221 = vunpack.c.0.s8 %v1220
        %v1222 = vlaneseq
        %v1223 = vshrl.u32 %v1222, 7
        %v1224 = vsub.s32 %v1221, %v1223
        %v1225 = vrot.slane %v1217, %v1224
        %v1227 = vunpack.c.l.s4 1966171168
        %v1228 = vunpack.c.0.s8 %v1227
        %v1229 = vlaneseq
        %v1230 = vshrl.u32 %v1229, 7
        %v1231 = vsub.s32 %v1228, %v1230
        %v1232 = vrot.slane %v1218, %v1231
        %v1233 = vcombine.low %v1225, %v1232
        %v1235 = vunpack.c.l.s4 1966171168
        %v1236 = vunpack.c.0.s8 %v1235
        %v1237 = vlaneseq
        %v1238 = vshrl.u32 %v1237, 7
        %v1239 = vsub.s32 %v1236, %v1238
        %v1240 = vrot.slane %v1175, %v1239
        %v1242 = vunpack.c.l.s4 1966171168
        %v1243 = vunpack.c.0.s8 %v1242
        %v1244 = vlaneseq
        %v1245 = vshrl.u32 %v1244, 7
        %v1246 = vsub.s32 %v1243, %v1245
        %v1247 = vrot.slane %v1240, %v1246
        %v1250 = vsel %vm1094, %v1233, 0.0
        %1251 = vadd.xlane.f32.xlu0 %v1250
        %v1252 = vpop.xlane.xlu0 %1251
        %v1253 = vsel %vm1098, %v1247, 0.0
        %1254 = vadd.xlane.f32.xlu0 %v1253
        %v1255 = vpop.xlane.xlu0 %1254
        %v1256 = vrcp.pop %v1252
        %v1257 = vrcp.pop %v1255
        %v1260 = vlaneseq
        %v1261 = vshrl.u32 %v1260, 7
        %v1262 = vsub.s32 0, %v1261
        %v1263 = vrot.slane %v1256, %v1262
        %v1264 = vlaneseq
        %v1265 = vshrl.u32 %v1264, 7
        %v1266 = vsub.s32 1, %v1265
        %v1267 = vrot.slane %v1256, %v1266
        %v1268 = vlaneseq
        %v1269 = vshrl.u32 %v1268, 7
        %v1270 = vsub.s32 2, %v1269
        %v1271 = vrot.slane %v1256, %v1270
        %v1272 = vlaneseq
        %v1273 = vshrl.u32 %v1272, 7
        %v1274 = vsub.s32 3, %v1273
        %v1275 = vrot.slane %v1256, %v1274
        %v1276 = vlaneseq
        %v1277 = vshrl.u32 %v1276, 7
        %v1278 = vsub.s32 4, %v1277
        %v1279 = vrot.slane %v1256, %v1278
        %v1280 = vlaneseq
        %v1281 = vshrl.u32 %v1280, 7
        %v1282 = vsub.s32 5, %v1281
        %v1283 = vrot.slane %v1256, %v1282
        %v1284 = vlaneseq
        %v1285 = vshrl.u32 %v1284, 7
        %v1286 = vsub.s32 6, %v1285
        %v1287 = vrot.slane %v1256, %v1286
        %v1288 = vlaneseq
        %v1289 = vshrl.u32 %v1288, 7
        %v1290 = vsub.s32 7, %v1289
        %v1291 = vrot.slane %v1256, %v1290
        %v1292 = vlaneseq
        %v1293 = vshrl.u32 %v1292, 7
        %v1294 = vsub.s32 0, %v1293
        %v1295 = vrot.slane %v1257, %v1294
        %v1305 = vmul.f32 %v1159, %v1263
        %v1306 = vmul.f32 %v1161, %v1267
        %v1307 = vmul.f32 %v1163, %v1271
        %v1308 = vmul.f32 %v1165, %v1275
        %v1309 = vmul.f32 %v1167, %v1279
        %v1310 = vmul.f32 %v1169, %v1283
        %v1311 = vmul.f32 %v1171, %v1287
        %v1312 = vmul.f32 %v1173, %v1291
        %v1313 = vmul.f32 %v1175, %v1295
        %v1323 = vcombine.low %v1305, %v1306
        %v1324 = vcombine.low %v1307, %v1308
        %v1325 = vcombine.low %v1309, %v1310
        %v1326 = vcombine.low %v1311, %v1312
        %v1328 = vunpack.c.l.s4 1966171168
        %v1329 = vunpack.c.0.s8 %v1328
        %v1330 = vlaneseq
        %v1331 = vshrl.u32 %v1330, 7
        %v1332 = vsub.s32 %v1329, %v1331
        %v1333 = vrot.slane %v1323, %v1332
        %v1335 = vunpack.c.l.s4 1966171168
        %v1336 = vunpack.c.0.s8 %v1335
        %v1337 = vlaneseq
        %v1338 = vshrl.u32 %v1337, 7
        %v1339 = vsub.s32 %v1336, %v1338
        %v1340 = vrot.slane %v1324, %v1339
        %v1342 = vunpack.c.l.s4 1966171168
        %v1343 = vunpack.c.0.s8 %v1342
        %v1344 = vlaneseq
        %v1345 = vshrl.u32 %v1344, 7
        %v1346 = vsub.s32 %v1343, %v1345
        %v1347 = vrot.slane %v1325, %v1346
        %v1349 = vunpack.c.l.s4 1966171168
        %v1350 = vunpack.c.0.s8 %v1349
        %v1351 = vlaneseq
        %v1352 = vshrl.u32 %v1351, 7
        %v1353 = vsub.s32 %v1350, %v1352
        %v1354 = vrot.slane %v1326, %v1353
        %v1355 = vcombine.low %v1333, %v1340
        %v1356 = vcombine.low %v1347, %v1354
        %v1358 = vunpack.c.l.s4 1966171168
        %v1359 = vunpack.c.0.s8 %v1358
        %v1360 = vlaneseq
        %v1361 = vshrl.u32 %v1360, 7
        %v1362 = vsub.s32 %v1359, %v1361
        %v1363 = vrot.slane %v1355, %v1362
        %v1365 = vunpack.c.l.s4 1966171168
        %v1366 = vunpack.c.0.s8 %v1365
        %v1367 = vlaneseq
        %v1368 = vshrl.u32 %v1367, 7
        %v1369 = vsub.s32 %v1366, %v1368
        %v1370 = vrot.slane %v1356, %v1369
        %v1371 = vcombine.low %v1363, %v1370
        %v1373 = vunpack.c.l.s4 1966171168
        %v1374 = vunpack.c.0.s8 %v1373
        %v1375 = vlaneseq
        %v1376 = vshrl.u32 %v1375, 7
        %v1377 = vsub.s32 %v1374, %v1376
        %v1378 = vrot.slane %v1313, %v1377
        %v1380 = vunpack.c.l.s4 1966171168
        %v1381 = vunpack.c.0.s8 %v1380
        %v1382 = vlaneseq
        %v1383 = vshrl.u32 %v1382, 7
        %v1384 = vsub.s32 %v1381, %v1383
        %v1385 = vrot.slane %v1378, %v1384
        %v1386 = vsel %vm1094, %v1371, 0
        %v1388 = vsel %vm1094, %v1385, 0
        %vm1390 = vcmask 1044480
        %v1392 = vsel %vm1390, %v894, 0
        %1394 = vmatprep.subr.mxu0 0.0
        %1395 = vmatpush1.msra.mxu0 %v1392
        %1396 = vmatprep.subr.mxu0 0.0
        %1397 = vmatpush1.msra.mxu0 0.0
        %1398 = vmatprep.subr.mxu0 0.0
        %1399 = vmatpush1.msra.mxu0 0.0
        %1400 = vmatprep.subr.mxu0 0.0
        %1401 = vmatpush1.msra.mxu0 0.0
        %1402 = vmatprep.subr.mxu0 0.0
        %1403 = vmatpush1.msra.mxu0 0.0
        %1404 = vmatprep.subr.mxu0 0.0
        %1405 = vmatpush1.msra.mxu0 0.0
        %1406 = vmatprep.subr.mxu0 0.0
        %1407 = vmatpush1.msra.mxu0 0.0
        %1408 = vmatprep.subr.mxu0 0.0
        %1409 = vmatpush1.msra.mxu0 0.0
        %1410 = vmatprep.subr.mxu0 0.0
        %1411 = vmatpush1.msra.mxu0 0.0
        %1412 = vmatprep.subr.mxu0 0.0
        %1413 = vmatpush1.msra.mxu0 0.0
        %1414 = vmatprep.subr.mxu0 0.0
        %1415 = vmatpush1.msra.mxu0 0.0
        %1416 = vmatprep.subr.mxu0 0.0
        %1417 = vmatpush1.msra.mxu0 0.0
        %1418 = vmatprep.subr.mxu0 0.0
        %1419 = vmatpush1.msra.mxu0 0.0
        %1420 = vmatprep.subr.mxu0 0.0
        %1421 = vmatpush1.msra.mxu0 0.0
        %1422 = vmatprep.subr.mxu0 0.0
        %1423 = vmatpush1.msra.mxu0 0.0
        %1424 = vmatprep.subr.mxu0 0.0
        %1425 = vmatpush1.msra.mxu0 0.0
        %1426 = vmatprep.subr.mxu0 0.0
        %1427 = vmatpush1.msra.mxu0 0.0
        %1428 = vmatprep.subr.mxu0 0.0
        %1429 = vmatpush1.msra.mxu0 0.0
        %1430 = vmatprep.subr.mxu0 0.0
        %1431 = vmatpush1.msra.mxu0 0.0
        %1432 = vmatprep.subr.mxu0 0.0
        %1433 = vmatpush1.msra.mxu0 0.0
        %1434 = vmatprep.subr.mxu0 0.0
        %1435 = vmatpush1.msra.mxu0 0.0
        %1436 = vmatprep.subr.mxu0 0.0
        %1437 = vmatpush1.msra.mxu0 0.0
        %1438 = vmatprep.subr.mxu0 0.0
        %1439 = vmatpush1.msra.mxu0 0.0
        %1440 = vmatprep.subr.mxu0 0.0
        %1441 = vmatpush1.msra.mxu0 0.0
        %1442 = vmatprep.subr.mxu0 0.0
        %1443 = vmatpush1.msra.mxu0 0.0
        %1444 = vmatprep.subr.mxu0 0.0
        %1445 = vmatpush1.msra.mxu0 0.0
        %1446 = vmatprep.subr.mxu0 0.0
        %1447 = vmatpush1.msra.mxu0 0.0
        %1448 = vmatprep.subr.mxu0 0.0
        %1449 = vmatpush1.msra.mxu0 0.0
        %1450 = vmatprep.subr.mxu0 0.0
        %1451 = vmatpush1.msra.mxu0 0.0
        %1452 = vmatprep.subr.mxu0 0.0
        %1453 = vmatpush1.msra.mxu0 0.0
        %1454 = vmatprep.subr.mxu0 0.0
        %1455 = vmatpush1.msra.mxu0 0.0
        %1456 = vmatprep.subr.mxu0 0.0
        %1457 = vmatpush1.msra.mxu0 0.0
        %1458 = vmatprep.mubr.f32.mxu0 0.0
        %1459 = vmatmul.mubr.f32.gmra.mrb[0].mxu0 %v1386
        %v1460 = vpop.f32.mrb[0].mxu0
        %v1461 = vadd.f32 0.0, %v1460
        %v1462 = vpop.f32.mrb[0].mxu0
        %1463 = vmatprep.mubr.f32.mxu0 0.0
        %1464 = vmatmul.mubr.f32.gmra.mrb[0].mxu0 %v1388
        %v1465 = vpop.f32.mrb[0].mxu0
        %v1466 = vadd.f32 0.0, %v1465
        %v1467 = vpop.f32.mrb[0].mxu0
        %1468 = vdwg.mxu0
        %1469 = vrot.lane.b32.xlu0 %v748, 120
        %v1470 = vpop.permute.xlu0 %1469
        %1471 = vrot.lane.b32.xlu0 %v821, 120
        %v1472 = vpop.permute.xlu0 %1471
        %v1473 = vsel %vm897, %v1470, 0
        %v1475 = vsel %vm897, %v1472, 0
        %1477 = vmatprep.subr.mxu0 0.0
        %1478 = vmatpush1.xpose.msra.mxu0 %v1475
        %1479 = vmatprep.subr.mxu0 0.0
        %1480 = vmatpush1.xpose.msra.mxu0 0.0
        %1481 = vmatprep.subr.mxu0 0.0
        %1482 = vmatpush1.xpose.msra.mxu0 0.0
        %1483 = vmatprep.subr.mxu0 0.0
        %1484 = vmatpush1.xpose.msra.mxu0 0.0
        %1485 = vmatprep.subr.mxu0 0.0
        %1486 = vmatpush1.xpose.msra.mxu0 0.0
        %1487 = vmatprep.subr.mxu0 0.0
        %1488 = vmatpush1.xpose.msra.mxu0 0.0
        %1489 = vmatprep.subr.mxu0 0.0
        %1490 = vmatpush1.xpose.msra.mxu0 0.0
        %1491 = vmatprep.subr.mxu0 0.0
        %1492 = vmatpush1.xpose.msra.mxu0 0.0
        %1493 = vmatprep.subr.mxu0 0.0
        %1494 = vmatpush1.xpose.msra.mxu0 0.0
        %1495 = vmatprep.subr.mxu0 0.0
        %1496 = vmatpush1.xpose.msra.mxu0 0.0
        %1497 = vmatprep.subr.mxu0 0.0
        %1498 = vmatpush1.xpose.msra.mxu0 0.0
        %1499 = vmatprep.subr.mxu0 0.0
        %1500 = vmatpush1.xpose.msra.mxu0 0.0
        %1501 = vmatprep.subr.mxu0 0.0
        %1502 = vmatpush1.xpose.msra.mxu0 0.0
        %1503 = vmatprep.subr.mxu0 0.0
        %1504 = vmatpush1.xpose.msra.mxu0 0.0
        %1505 = vmatprep.subr.mxu0 0.0
        %1506 = vmatpush1.xpose.msra.mxu0 0.0
        %1507 = vmatprep.subr.mxu0 0.0
        %1508 = vmatpush1.xpose.msra.mxu0 0.0
        %1509 = vmatprep.subr.mxu0 0.0
        %1510 = vmatpush1.xpose.msra.mxu0 0.0
        %1511 = vmatprep.subr.mxu0 0.0
        %1512 = vmatpush1.xpose.msra.mxu0 0.0
        %1513 = vmatprep.subr.mxu0 0.0
        %1514 = vmatpush1.xpose.msra.mxu0 0.0
        %1515 = vmatprep.subr.mxu0 0.0
        %1516 = vmatpush1.xpose.msra.mxu0 0.0
        %1517 = vmatprep.subr.mxu0 0.0
        %1518 = vmatpush1.xpose.msra.mxu0 0.0
        %1519 = vmatprep.subr.mxu0 0.0
        %1520 = vmatpush1.xpose.msra.mxu0 0.0
        %1521 = vmatprep.subr.mxu0 0.0
        %1522 = vmatpush1.xpose.msra.mxu0 0.0
        %1523 = vmatprep.subr.mxu0 0.0
        %1524 = vmatpush1.xpose.msra.mxu0 0.0
        %1525 = vmatprep.subr.mxu0 0.0
        %1526 = vmatpush1.xpose.msra.mxu0 0.0
        %1527 = vmatprep.subr.mxu0 0.0
        %1528 = vmatpush1.xpose.msra.mxu0 0.0
        %1529 = vmatprep.subr.mxu0 0.0
        %1530 = vmatpush1.xpose.msra.mxu0 0.0
        %1531 = vmatprep.subr.mxu0 0.0
        %1532 = vmatpush1.xpose.msra.mxu0 0.0
        %1533 = vmatprep.subr.mxu0 0.0
        %1534 = vmatpush1.xpose.msra.mxu0 0.0
        %1535 = vmatprep.subr.mxu0 0.0
        %1536 = vmatpush1.xpose.msra.mxu0 0.0
        %1537 = vmatprep.subr.mxu0 0.0
        %1538 = vmatpush1.xpose.msra.mxu0 0.0
        %1539 = vmatprep.subr.mxu0 0.0
        %1540 = vmatpush1.xpose.msra.mxu0 0.0
        %1541 = vmatprep.mubr.f32.mxu0 0.0
        %1542 = vmatmul.mubr.f32.gmra.mrb[0].mxu0 %v1473
        %v1543 = vpop.f32.mrb[0].mxu0
        %v1544 = vadd.f32 0.0, %v1543
        %v1545 = vpop.f32.mrb[0].mxu0
        %1546 = vdwg.mxu0
        %v1547 = vmul.f32 %v1544, 0.35355338
        %v1550 = vunpack.c.l.s4 1966171168
        %v1551 = vunpack.c.0.s8 %v1550
        %v1552 = vlaneseq
        %v1553 = vshrl.u32 %v1552, 7
        %v1554 = vsub.s32 %v1551, %v1553
        %v1555 = vrot.slane %v1547, %v1554
        %v1556 = vcombine.high %v1555, %v1555
        %v1558 = vunpack.c.l.s4 1966171168
        %v1559 = vunpack.c.0.s8 %v1558
        %v1560 = vlaneseq
        %v1561 = vshrl.u32 %v1560, 7
        %v1562 = vsub.s32 %v1559, %v1561
        %v1563 = vrot.slane %v1555, %v1562
        %v1565 = vunpack.c.l.s4 1966171168
        %v1566 = vunpack.c.0.s8 %v1565
        %v1567 = vlaneseq
        %v1568 = vshrl.u32 %v1567, 7
        %v1569 = vsub.s32 %v1566, %v1568
        %v1570 = vrot.slane %v1556, %v1569
        %v1571 = vcombine.high %v1563, %v1563
        %v1575 = vsel %vm1002, -1e+30, %v1563
        %v1576 = vsel %vm1003, -1e+30, %v1570
        %v1577 = vsel %vm1004, -1e+30, %v1571
        %v1578 = vsel %vm1005, -1e+30, %v1563
        %v1579 = vsel %vm1006, -1e+30, %v1570
        %v1580 = vsel %vm1007, -1e+30, %v1571
        %v1581 = vsel %vm1008, -1e+30, %v1563
        %v1582 = vsel %vm1009, -1e+30, %v1570
        %v1583 = vsel %vm1010, -1e+30, %v1571
        %v1593 = vcombine.low %v1575, %v1576
        %v1594 = vcombine.low %v1577, %v1578
        %v1595 = vcombine.low %v1579, %v1580
        %v1596 = vcombine.low %v1581, %v1582
        %v1598 = vunpack.c.l.s4 1966171168
        %v1599 = vunpack.c.0.s8 %v1598
        %v1600 = vlaneseq
        %v1601 = vshrl.u32 %v1600, 7
        %v1602 = vsub.s32 %v1599, %v1601
        %v1603 = vrot.slane %v1593, %v1602
        %v1605 = vunpack.c.l.s4 1966171168
        %v1606 = vunpack.c.0.s8 %v1605
        %v1607 = vlaneseq
        %v1608 = vshrl.u32 %v1607, 7
        %v1609 = vsub.s32 %v1606, %v1608
        %v1610 = vrot.slane %v1594, %v1609
        %v1612 = vunpack.c.l.s4 1966171168
        %v1613 = vunpack.c.0.s8 %v1612
        %v1614 = vlaneseq
        %v1615 = vshrl.u32 %v1614, 7
        %v1616 = vsub.s32 %v1613, %v1615
        %v1617 = vrot.slane %v1595, %v1616
        %v1619 = vunpack.c.l.s4 1966171168
        %v1620 = vunpack.c.0.s8 %v1619
        %v1621 = vlaneseq
        %v1622 = vshrl.u32 %v1621, 7
        %v1623 = vsub.s32 %v1620, %v1622
        %v1624 = vrot.slane %v1596, %v1623
        %v1625 = vcombine.low %v1603, %v1610
        %v1626 = vcombine.low %v1617, %v1624
        %v1628 = vunpack.c.l.s4 1966171168
        %v1629 = vunpack.c.0.s8 %v1628
        %v1630 = vlaneseq
        %v1631 = vshrl.u32 %v1630, 7
        %v1632 = vsub.s32 %v1629, %v1631
        %v1633 = vrot.slane %v1625, %v1632
        %v1635 = vunpack.c.l.s4 1966171168
        %v1636 = vunpack.c.0.s8 %v1635
        %v1637 = vlaneseq
        %v1638 = vshrl.u32 %v1637, 7
        %v1639 = vsub.s32 %v1636, %v1638
        %v1640 = vrot.slane %v1626, %v1639
        %v1641 = vcombine.low %v1633, %v1640
        %v1643 = vunpack.c.l.s4 1966171168
        %v1644 = vunpack.c.0.s8 %v1643
        %v1645 = vlaneseq
        %v1646 = vshrl.u32 %v1645, 7
        %v1647 = vsub.s32 %v1644, %v1646
        %v1648 = vrot.slane %v1583, %v1647
        %v1650 = vunpack.c.l.s4 1966171168
        %v1651 = vunpack.c.0.s8 %v1650
        %v1652 = vlaneseq
        %v1653 = vshrl.u32 %v1652, 7
        %v1654 = vsub.s32 %v1651, %v1653
        %v1655 = vrot.slane %v1648, %v1654
        %v1658 = vsel %vm1094, %v1641, -inf
        %1659 = vmax.xlane.f32.xlu0 %v1658
        %v1660 = vpop.xlane.xlu0 %1659
        %v1661 = vsel %vm1098, %v1655, -inf
        %1662 = vmax.xlane.f32.xlu0 %v1661
        %v1663 = vpop.xlane.xlu0 %1662
        %v1666 = vlaneseq
        %v1667 = vshrl.u32 %v1666, 7
        %v1668 = vsub.s32 0, %v1667
        %v1669 = vrot.slane %v1660, %v1668
        %v1670 = vlaneseq
        %v1671 = vshrl.u32 %v1670, 7
        %v1672 = vsub.s32 1, %v1671
        %v1673 = vrot.slane %v1660, %v1672
        %v1674 = vlaneseq
        %v1675 = vshrl.u32 %v1674, 7
        %v1676 = vsub.s32 2, %v1675
        %v1677 = vrot.slane %v1660, %v1676
        %v1678 = vlaneseq
        %v1679 = vshrl.u32 %v1678, 7
        %v1680 = vsub.s32 3, %v1679
        %v1681 = vrot.slane %v1660, %v1680
        %v1682 = vlaneseq
        %v1683 = vshrl.u32 %v1682, 7
        %v1684 = vsub.s32 4, %v1683
        %v1685 = vrot.slane %v1660, %v1684
        %v1686 = vlaneseq
        %v1687 = vshrl.u32 %v1686, 7
        %v1688 = vsub.s32 5, %v1687
        %v1689 = vrot.slane %v1660, %v1688
        %v1690 = vlaneseq
        %v1691 = vshrl.u32 %v1690, 7
        %v1692 = vsub.s32 6, %v1691
        %v1693 = vrot.slane %v1660, %v1692
        %v1694 = vlaneseq
        %v1695 = vshrl.u32 %v1694, 7
        %v1696 = vsub.s32 7, %v1695
        %v1697 = vrot.slane %v1660, %v1696
        %v1698 = vlaneseq
        %v1699 = vshrl.u32 %v1698, 7
        %v1700 = vsub.s32 0, %v1699
        %v1701 = vrot.slane %v1663, %v1700
        %v1711 = vsub.f32 %v1575, %v1669
        %v1712 = vsub.f32 %v1576, %v1673
        %v1713 = vsub.f32 %v1577, %v1677
        %v1714 = vsub.f32 %v1578, %v1681
        %v1715 = vsub.f32 %v1579, %v1685
        %v1716 = vsub.f32 %v1580, %v1689
        %v1717 = vsub.f32 %v1581, %v1693
        %v1718 = vsub.f32 %v1582, %v1697
        %v1719 = vsub.f32 %v1583, %v1701
        %v1720 = vmul.f32 %v1711, 1.442695
        %v1721 = vpow.pop %v1720
        %v1722 = vmul.f32 %v1712, 1.442695
        %v1723 = vpow.pop %v1722
        %v1724 = vmul.f32 %v1713, 1.442695
        %v1725 = vpow.pop %v1724
        %v1726 = vmul.f32 %v1714, 1.442695
        %v1727 = vpow.pop %v1726
        %v1728 = vmul.f32 %v1715, 1.442695
        %v1729 = vpow.pop %v1728
        %v1730 = vmul.f32 %v1716, 1.442695
        %v1731 = vpow.pop %v1730
        %v1732 = vmul.f32 %v1717, 1.442695
        %v1733 = vpow.pop %v1732
        %v1734 = vmul.f32 %v1718, 1.442695
        %v1735 = vpow.pop %v1734
        %v1736 = vmul.f32 %v1719, 1.442695
        %v1737 = vpow.pop %v1736
        %v1747 = vcombine.low %v1721, %v1723
        %v1748 = vcombine.low %v1725, %v1727
        %v1749 = vcombine.low %v1729, %v1731
        %v1750 = vcombine.low %v1733, %v1735
        %v1752 = vunpack.c.l.s4 1966171168
        %v1753 = vunpack.c.0.s8 %v1752
        %v1754 = vlaneseq
        %v1755 = vshrl.u32 %v1754, 7
        %v1756 = vsub.s32 %v1753, %v1755
        %v1757 = vrot.slane %v1747, %v1756
        %v1759 = vunpack.c.l.s4 1966171168
        %v1760 = vunpack.c.0.s8 %v1759
        %v1761 = vlaneseq
        %v1762 = vshrl.u32 %v1761, 7
        %v1763 = vsub.s32 %v1760, %v1762
        %v1764 = vrot.slane %v1748, %v1763
        %v1766 = vunpack.c.l.s4 1966171168
        %v1767 = vunpack.c.0.s8 %v1766
        %v1768 = vlaneseq
        %v1769 = vshrl.u32 %v1768, 7
        %v1770 = vsub.s32 %v1767, %v1769
        %v1771 = vrot.slane %v1749, %v1770
        %v1773 = vunpack.c.l.s4 1966171168
        %v1774 = vunpack.c.0.s8 %v1773
        %v1775 = vlaneseq
        %v1776 = vshrl.u32 %v1775, 7
        %v1777 = vsub.s32 %v1774, %v1776
        %v1778 = vrot.slane %v1750, %v1777
        %v1779 = vcombine.low %v1757, %v1764
        %v1780 = vcombine.low %v1771, %v1778
        %v1782 = vunpack.c.l.s4 1966171168
        %v1783 = vunpack.c.0.s8 %v1782
        %v1784 = vlaneseq
        %v1785 = vshrl.u32 %v1784, 7
        %v1786 = vsub.s32 %v1783, %v1785
        %v1787 = vrot.slane %v1779, %v1786
        %v1789 = vunpack.c.l.s4 1966171168
        %v1790 = vunpack.c.0.s8 %v1789
        %v1791 = vlaneseq
        %v1792 = vshrl.u32 %v1791, 7
        %v1793 = vsub.s32 %v1790, %v1792
        %v1794 = vrot.slane %v1780, %v1793
        %v1795 = vcombine.low %v1787, %v1794
        %v1797 = vunpack.c.l.s4 1966171168
        %v1798 = vunpack.c.0.s8 %v1797
        %v1799 = vlaneseq
        %v1800 = vshrl.u32 %v1799, 7
        %v1801 = vsub.s32 %v1798, %v1800
        %v1802 = vrot.slane %v1737, %v1801
        %v1804 = vunpack.c.l.s4 1966171168
        %v1805 = vunpack.c.0.s8 %v1804
        %v1806 = vlaneseq
        %v1807 = vshrl.u32 %v1806, 7
        %v1808 = vsub.s32 %v1805, %v1807
        %v1809 = vrot.slane %v1802, %v1808
        %v1812 = vsel %vm1094, %v1795, 0.0
        %1813 = vadd.xlane.f32.xlu0 %v1812
        %v1814 = vpop.xlane.xlu0 %1813
        %v1815 = vsel %vm1098, %v1809, 0.0
        %1816 = vadd.xlane.f32.xlu0 %v1815
        %v1817 = vpop.xlane.xlu0 %1816
        %v1818 = vrcp.pop %v1814
        %v1819 = vrcp.pop %v1817
        %v1822 = vlaneseq
        %v1823 = vshrl.u32 %v1822, 7
        %v1824 = vsub.s32 0, %v1823
        %v1825 = vrot.slane %v1818, %v1824
        %v1826 = vlaneseq
        %v1827 = vshrl.u32 %v1826, 7
        %v1828 = vsub.s32 1, %v1827
        %v1829 = vrot.slane %v1818, %v1828
        %v1830 = vlaneseq
        %v1831 = vshrl.u32 %v1830, 7
        %v1832 = vsub.s32 2, %v1831
        %v1833 = vrot.slane %v1818, %v1832
        %v1834 = vlaneseq
        %v1835 = vshrl.u32 %v1834, 7
        %v1836 = vsub.s32 3, %v1835
        %v1837 = vrot.slane %v1818, %v1836
        %v1838 = vlaneseq
        %v1839 = vshrl.u32 %v1838, 7
        %v1840 = vsub.s32 4, %v1839
        %v1841 = vrot.slane %v1818, %v1840
        %v1842 = vlaneseq
        %v1843 = vshrl.u32 %v1842, 7
        %v1844 = vsub.s32 5, %v1843
        %v1845 = vrot.slane %v1818, %v1844
        %v1846 = vlaneseq
        %v1847 = vshrl.u32 %v1846, 7
        %v1848 = vsub.s32 6, %v1847
        %v1849 = vrot.slane %v1818, %v1848
        %v1850 = vlaneseq
        %v1851 = vshrl.u32 %v1850, 7
        %v1852 = vsub.s32 7, %v1851
        %v1853 = vrot.slane %v1818, %v1852
        %v1854 = vlaneseq
        %v1855 = vshrl.u32 %v1854, 7
        %v1856 = vsub.s32 0, %v1855
        %v1857 = vrot.slane %v1819, %v1856
        %v1867 = vmul.f32 %v1721, %v1825
        %v1868 = vmul.f32 %v1723, %v1829
        %v1869 = vmul.f32 %v1725, %v1833
        %v1870 = vmul.f32 %v1727, %v1837
        %v1871 = vmul.f32 %v1729, %v1841
        %v1872 = vmul.f32 %v1731, %v1845
        %v1873 = vmul.f32 %v1733, %v1849
        %v1874 = vmul.f32 %v1735, %v1853
        %v1875 = vmul.f32 %v1737, %v1857
        %v1885 = vcombine.low %v1867, %v1868
        %v1886 = vcombine.low %v1869, %v1870
        %v1887 = vcombine.low %v1871, %v1872
        %v1888 = vcombine.low %v1873, %v1874
        %v1890 = vunpack.c.l.s4 1966171168
        %v1891 = vunpack.c.0.s8 %v1890
        %v1892 = vlaneseq
        %v1893 = vshrl.u32 %v1892, 7
        %v1894 = vsub.s32 %v1891, %v1893
        %v1895 = vrot.slane %v1885, %v1894
        %v1897 = vunpack.c.l.s4 1966171168
        %v1898 = vunpack.c.0.s8 %v1897
        %v1899 = vlaneseq
        %v1900 = vshrl.u32 %v1899, 7
        %v1901 = vsub.s32 %v1898, %v1900
        %v1902 = vrot.slane %v1886, %v1901
        %v1904 = vunpack.c.l.s4 1966171168
        %v1905 = vunpack.c.0.s8 %v1904
        %v1906 = vlaneseq
        %v1907 = vshrl.u32 %v1906, 7
        %v1908 = vsub.s32 %v1905, %v1907
        %v1909 = vrot.slane %v1887, %v1908
        %v1911 = vunpack.c.l.s4 1966171168
        %v1912 = vunpack.c.0.s8 %v1911
        %v1913 = vlaneseq
        %v1914 = vshrl.u32 %v1913, 7
        %v1915 = vsub.s32 %v1912, %v1914
        %v1916 = vrot.slane %v1888, %v1915
        %v1917 = vcombine.low %v1895, %v1902
        %v1918 = vcombine.low %v1909, %v1916
        %v1920 = vunpack.c.l.s4 1966171168
        %v1921 = vunpack.c.0.s8 %v1920
        %v1922 = vlaneseq
        %v1923 = vshrl.u32 %v1922, 7
        %v1924 = vsub.s32 %v1921, %v1923
        %v1925 = vrot.slane %v1917, %v1924
        %v1927 = vunpack.c.l.s4 1966171168
        %v1928 = vunpack.c.0.s8 %v1927
        %v1929 = vlaneseq
        %v1930 = vshrl.u32 %v1929, 7
        %v1931 = vsub.s32 %v1928, %v1930
        %v1932 = vrot.slane %v1918, %v1931
        %v1933 = vcombine.low %v1925, %v1932
        %v1935 = vunpack.c.l.s4 1966171168
        %v1936 = vunpack.c.0.s8 %v1935
        %v1937 = vlaneseq
        %v1938 = vshrl.u32 %v1937, 7
        %v1939 = vsub.s32 %v1936, %v1938
        %v1940 = vrot.slane %v1875, %v1939
        %v1942 = vunpack.c.l.s4 1966171168
        %v1943 = vunpack.c.0.s8 %v1942
        %v1944 = vlaneseq
        %v1945 = vshrl.u32 %v1944, 7
        %v1946 = vsub.s32 %v1943, %v1945
        %v1947 = vrot.slane %v1940, %v1946
        %1948 = vrot.lane.b32.xlu0 %v894, 120
        %v1949 = vpop.permute.xlu0 %1948
        %v1950 = vsel %vm1094, %v1933, 0
        %v1952 = vsel %vm1094, %v1947, 0
        %v1954 = vsel %vm1390, %v1949, 0
        %1956 = vmatprep.subr.mxu0 0.0
        %1957 = vmatpush1.msra.mxu0 %v1954
        %1958 = vmatprep.subr.mxu0 0.0
        %1959 = vmatpush1.msra.mxu0 0.0
        %1960 = vmatprep.subr.mxu0 0.0
        %1961 = vmatpush1.msra.mxu0 0.0
        %1962 = vmatprep.subr.mxu0 0.0
        %1963 = vmatpush1.msra.mxu0 0.0
        %1964 = vmatprep.subr.mxu0 0.0
        %1965 = vmatpush1.msra.mxu0 0.0
        %1966 = vmatprep.subr.mxu0 0.0
        %1967 = vmatpush1.msra.mxu0 0.0
        %1968 = vmatprep.subr.mxu0 0.0
        %1969 = vmatpush1.msra.mxu0 0.0
        %1970 = vmatprep.subr.mxu0 0.0
        %1971 = vmatpush1.msra.mxu0 0.0
        %1972 = vmatprep.subr.mxu0 0.0
        %1973 = vmatpush1.msra.mxu0 0.0
        %1974 = vmatprep.subr.mxu0 0.0
        %1975 = vmatpush1.msra.mxu0 0.0
        %1976 = vmatprep.subr.mxu0 0.0
        %1977 = vmatpush1.msra.mxu0 0.0
        %1978 = vmatprep.subr.mxu0 0.0
        %1979 = vmatpush1.msra.mxu0 0.0
        %1980 = vmatprep.subr.mxu0 0.0
        %1981 = vmatpush1.msra.mxu0 0.0
        %1982 = vmatprep.subr.mxu0 0.0
        %1983 = vmatpush1.msra.mxu0 0.0
        %1984 = vmatprep.subr.mxu0 0.0
        %1985 = vmatpush1.msra.mxu0 0.0
        %1986 = vmatprep.subr.mxu0 0.0
        %1987 = vmatpush1.msra.mxu0 0.0
        %1988 = vmatprep.subr.mxu0 0.0
        %1989 = vmatpush1.msra.mxu0 0.0
        %1990 = vmatprep.subr.mxu0 0.0
        %1991 = vmatpush1.msra.mxu0 0.0
        %1992 = vmatprep.subr.mxu0 0.0
        %1993 = vmatpush1.msra.mxu0 0.0
        %1994 = vmatprep.subr.mxu0 0.0
        %1995 = vmatpush1.msra.mxu0 0.0
        %1996 = vmatprep.subr.mxu0 0.0
        %1997 = vmatpush1.msra.mxu0 0.0
        %1998 = vmatprep.subr.mxu0 0.0
        %1999 = vmatpush1.msra.mxu0 0.0
        %2000 = vmatprep.subr.mxu0 0.0
        %2001 = vmatpush1.msra.mxu0 0.0
        %2002 = vmatprep.subr.mxu0 0.0
        %2003 = vmatpush1.msra.mxu0 0.0
        %2004 = vmatprep.subr.mxu0 0.0
        %2005 = vmatpush1.msra.mxu0 0.0
        %2006 = vmatprep.subr.mxu0 0.0
        %2007 = vmatpush1.msra.mxu0 0.0
        %2008 = vmatprep.subr.mxu0 0.0
        %2009 = vmatpush1.msra.mxu0 0.0
        %2010 = vmatprep.subr.mxu0 0.0
        %2011 = vmatpush1.msra.mxu0 0.0
        %2012 = vmatprep.subr.mxu0 0.0
        %2013 = vmatpush1.msra.mxu0 0.0
        %2014 = vmatprep.subr.mxu0 0.0
        %2015 = vmatpush1.msra.mxu0 0.0
        %2016 = vmatprep.subr.mxu0 0.0
        %2017 = vmatpush1.msra.mxu0 0.0
        %2018 = vmatprep.subr.mxu0 0.0
        %2019 = vmatpush1.msra.mxu0 0.0
        %2020 = vmatprep.mubr.f32.mxu0 0.0
        %2021 = vmatmul.mubr.f32.gmra.mrb[0].mxu0 %v1950
        %v2022 = vpop.f32.mrb[0].mxu0
        %v2023 = vadd.f32 0.0, %v2022
        %v2024 = vpop.f32.mrb[0].mxu0
        %2025 = vmatprep.mubr.f32.mxu0 0.0
        %2026 = vmatmul.mubr.f32.gmra.mrb[0].mxu0 %v1952
        %v2027 = vpop.f32.mrb[0].mxu0
        %v2028 = vadd.f32 0.0, %v2027
        %v2029 = vpop.f32.mrb[0].mxu0
        %2030 = vdwg.mxu0
        %2031 = vrot.lane.b32.xlu0 %v748, 112
        %v2032 = vpop.permute.xlu0 %2031
        %2033 = vrot.lane.b32.xlu0 %v821, 112
        %v2034 = vpop.permute.xlu0 %2033
        %v2035 = vsel %vm897, %v2032, 0
        %v2037 = vsel %vm897, %v2034, 0
        %2039 = vmatprep.subr.mxu0 0.0
        %2040 = vmatpush1.xpose.msra.mxu0 %v2037
        %2041 = vmatprep.subr.mxu0 0.0
        %2042 = vmatpush1.xpose.msra.mxu0 0.0
        %2043 = vmatprep.subr.mxu0 0.0
        %2044 = vmatpush1.xpose.msra.mxu0 0.0
        %2045 = vmatprep.subr.mxu0 0.0
        %2046 = vmatpush1.xpose.msra.mxu0 0.0
        %2047 = vmatprep.subr.mxu0 0.0
        %2048 = vmatpush1.xpose.msra.mxu0 0.0
        %2049 = vmatprep.subr.mxu0 0.0
        %2050 = vmatpush1.xpose.msra.mxu0 0.0
        %2051 = vmatprep.subr.mxu0 0.0
        %2052 = vmatpush1.xpose.msra.mxu0 0.0
        %2053 = vmatprep.subr.mxu0 0.0
        %2054 = vmatpush1.xpose.msra.mxu0 0.0
        %2055 = vmatprep.subr.mxu0 0.0
        %2056 = vmatpush1.xpose.msra.mxu0 0.0
        %2057 = vmatprep.subr.mxu0 0.0
        %2058 = vmatpush1.xpose.msra.mxu0 0.0
        %2059 = vmatprep.subr.mxu0 0.0
        %2060 = vmatpush1.xpose.msra.mxu0 0.0
        %2061 = vmatprep.subr.mxu0 0.0
        %2062 = vmatpush1.xpose.msra.mxu0 0.0
        %2063 = vmatprep.subr.mxu0 0.0
        %2064 = vmatpush1.xpose.msra.mxu0 0.0
        %2065 = vmatprep.subr.mxu0 0.0
        %2066 = vmatpush1.xpose.msra.mxu0 0.0
        %2067 = vmatprep.subr.mxu0 0.0
        %2068 = vmatpush1.xpose.msra.mxu0 0.0
        %2069 = vmatprep.subr.mxu0 0.0
        %2070 = vmatpush1.xpose.msra.mxu0 0.0
        %2071 = vmatprep.subr.mxu0 0.0
        %2072 = vmatpush1.xpose.msra.mxu0 0.0
        %2073 = vmatprep.subr.mxu0 0.0
        %2074 = vmatpush1.xpose.msra.mxu0 0.0
        %2075 = vmatprep.subr.mxu0 0.0
        %2076 = vmatpush1.xpose.msra.mxu0 0.0
        %2077 = vmatprep.subr.mxu0 0.0
        %2078 = vmatpush1.xpose.msra.mxu0 0.0
        %2079 = vmatprep.subr.mxu0 0.0
        %2080 = vmatpush1.xpose.msra.mxu0 0.0
        %2081 = vmatprep.subr.mxu0 0.0
        %2082 = vmatpush1.xpose.msra.mxu0 0.0
        %2083 = vmatprep.subr.mxu0 0.0
        %2084 = vmatpush1.xpose.msra.mxu0 0.0
        %2085 = vmatprep.subr.mxu0 0.0
        %2086 = vmatpush1.xpose.msra.mxu0 0.0
        %2087 = vmatprep.subr.mxu0 0.0
        %2088 = vmatpush1.xpose.msra.mxu0 0.0
        %2089 = vmatprep.subr.mxu0 0.0
        %2090 = vmatpush1.xpose.msra.mxu0 0.0
        %2091 = vmatprep.subr.mxu0 0.0
        %2092 = vmatpush1.xpose.msra.mxu0 0.0
        %2093 = vmatprep.subr.mxu0 0.0
        %2094 = vmatpush1.xpose.msra.mxu0 0.0
        %2095 = vmatprep.subr.mxu0 0.0
        %2096 = vmatpush1.xpose.msra.mxu0 0.0
        %2097 = vmatprep.subr.mxu0 0.0
        %2098 = vmatpush1.xpose.msra.mxu0 0.0
        %2099 = vmatprep.subr.mxu0 0.0
        %2100 = vmatpush1.xpose.msra.mxu0 0.0
        %2101 = vmatprep.subr.mxu0 0.0
        %2102 = vmatpush1.xpose.msra.mxu0 0.0
        %2103 = vmatprep.mubr.f32.mxu0 0.0
        %2104 = vmatmul.mubr.f32.gmra.mrb[0].mxu0 %v2035
        %v2105 = vpop.f32.mrb[0].mxu0
        %v2106 = vadd.f32 0.0, %v2105
        %v2107 = vpop.f32.mrb[0].mxu0
        %2108 = vdwg.mxu0
        %v2109 = vmul.f32 %v2106, 0.35355338
        %v2112 = vunpack.c.l.s4 1966171168
        %v2113 = vunpack.c.0.s8 %v2112
        %v2114 = vlaneseq
        %v2115 = vshrl.u32 %v2114, 7
        %v2116 = vsub.s32 %v2113, %v2115
        %v2117 = vrot.slane %v2109, %v2116
        %v2118 = vcombine.high %v2117, %v2117
        %v2120 = vunpack.c.l.s4 1966171168
        %v2121 = vunpack.c.0.s8 %v2120
        %v2122 = vlaneseq
        %v2123 = vshrl.u32 %v2122, 7
        %v2124 = vsub.s32 %v2121, %v2123
        %v2125 = vrot.slane %v2117, %v2124
        %v2127 = vunpack.c.l.s4 1966171168
        %v2128 = vunpack.c.0.s8 %v2127
        %v2129 = vlaneseq
        %v2130 = vshrl.u32 %v2129, 7
        %v2131 = vsub.s32 %v2128, %v2130
        %v2132 = vrot.slane %v2118, %v2131
        %v2133 = vcombine.high %v2125, %v2125
        %v2137 = vsel %vm1002, -1e+30, %v2125
        %v2138 = vsel %vm1003, -1e+30, %v2132
        %v2139 = vsel %vm1004, -1e+30, %v2133
        %v2140 = vsel %vm1005, -1e+30, %v2125
        %v2141 = vsel %vm1006, -1e+30, %v2132
        %v2142 = vsel %vm1007, -1e+30, %v2133
        %v2143 = vsel %vm1008, -1e+30, %v2125
        %v2144 = vsel %vm1009, -1e+30, %v2132
        %v2145 = vsel %vm1010, -1e+30, %v2133
        %v2155 = vcombine.low %v2137, %v2138
        %v2156 = vcombine.low %v2139, %v2140
        %v2157 = vcombine.low %v2141, %v2142
        %v2158 = vcombine.low %v2143, %v2144
        %v2160 = vunpack.c.l.s4 1966171168
        %v2161 = vunpack.c.0.s8 %v2160
        %v2162 = vlaneseq
        %v2163 = vshrl.u32 %v2162, 7
        %v2164 = vsub.s32 %v2161, %v2163
        %v2165 = vrot.slane %v2155, %v2164
        %v2167 = vunpack.c.l.s4 1966171168
        %v2168 = vunpack.c.0.s8 %v2167
        %v2169 = vlaneseq
        %v2170 = vshrl.u32 %v2169, 7
        %v2171 = vsub.s32 %v2168, %v2170
        %v2172 = vrot.slane %v2156, %v2171
        %v2174 = vunpack.c.l.s4 1966171168
        %v2175 = vunpack.c.0.s8 %v2174
        %v2176 = vlaneseq
        %v2177 = vshrl.u32 %v2176, 7
        %v2178 = vsub.s32 %v2175, %v2177
        %v2179 = vrot.slane %v2157, %v2178
        %v2181 = vunpack.c.l.s4 1966171168
        %v2182 = vunpack.c.0.s8 %v2181
        %v2183 = vlaneseq
        %v2184 = vshrl.u32 %v2183, 7
        %v2185 = vsub.s32 %v2182, %v2184
        %v2186 = vrot.slane %v2158, %v2185
        %v2187 = vcombine.low %v2165, %v2172
        %v2188 = vcombine.low %v2179, %v2186
        %v2190 = vunpack.c.l.s4 1966171168
        %v2191 = vunpack.c.0.s8 %v2190
        %v2192 = vlaneseq
        %v2193 = vshrl.u32 %v2192, 7
        %v2194 = vsub.s32 %v2191, %v2193
        %v2195 = vrot.slane %v2187, %v2194
        %v2197 = vunpack.c.l.s4 1966171168
        %v2198 = vunpack.c.0.s8 %v2197
        %v2199 = vlaneseq
        %v2200 = vshrl.u32 %v2199, 7
        %v2201 = vsub.s32 %v2198, %v2200
        %v2202 = vrot.slane %v2188, %v2201
        %v2203 = vcombine.low %v2195, %v2202
        %v2205 = vunpack.c.l.s4 1966171168
        %v2206 = vunpack.c.0.s8 %v2205
        %v2207 = vlaneseq
        %v2208 = vshrl.u32 %v2207, 7
        %v2209 = vsub.s32 %v2206, %v2208
        %v2210 = vrot.slane %v2145, %v2209
        %v2212 = vunpack.c.l.s4 1966171168
        %v2213 = vunpack.c.0.s8 %v2212
        %v2214 = vlaneseq
        %v2215 = vshrl.u32 %v2214, 7
        %v2216 = vsub.s32 %v2213, %v2215
        %v2217 = vrot.slane %v2210, %v2216
        %v2220 = vsel %vm1094, %v2203, -inf
        %2221 = vmax.xlane.f32.xlu0 %v2220
        %v2222 = vpop.xlane.xlu0 %2221
        %v2223 = vsel %vm1098, %v2217, -inf
        %2224 = vmax.xlane.f32.xlu0 %v2223
        %v2225 = vpop.xlane.xlu0 %2224
        %v2228 = vlaneseq
        %v2229 = vshrl.u32 %v2228, 7
        %v2230 = vsub.s32 0, %v2229
        %v2231 = vrot.slane %v2222, %v2230
        %v2232 = vlaneseq
        %v2233 = vshrl.u32 %v2232, 7
        %v2234 = vsub.s32 1, %v2233
        %v2235 = vrot.slane %v2222, %v2234
        %v2236 = vlaneseq
        %v2237 = vshrl.u32 %v2236, 7
        %v2238 = vsub.s32 2, %v2237
        %v2239 = vrot.slane %v2222, %v2238
        %v2240 = vlaneseq
        %v2241 = vshrl.u32 %v2240, 7
        %v2242 = vsub.s32 3, %v2241
        %v2243 = vrot.slane %v2222, %v2242
        %v2244 = vlaneseq
        %v2245 = vshrl.u32 %v2244, 7
        %v2246 = vsub.s32 4, %v2245
        %v2247 = vrot.slane %v2222, %v2246
        %v2248 = vlaneseq
        %v2249 = vshrl.u32 %v2248, 7
        %v2250 = vsub.s32 5, %v2249
        %v2251 = vrot.slane %v2222, %v2250
        %v2252 = vlaneseq
        %v2253 = vshrl.u32 %v2252, 7
        %v2254 = vsub.s32 6, %v2253
        %v2255 = vrot.slane %v2222, %v2254
        %v2256 = vlaneseq
        %v2257 = vshrl.u32 %v2256, 7
        %v2258 = vsub.s32 7, %v2257
        %v2259 = vrot.slane %v2222, %v2258
        %v2260 = vlaneseq
        %v2261 = vshrl.u32 %v2260, 7
        %v2262 = vsub.s32 0, %v2261
        %v2263 = vrot.slane %v2225, %v2262
        %v2273 = vsub.f32 %v2137, %v2231
        %v2274 = vsub.f32 %v2138, %v2235
        %v2275 = vsub.f32 %v2139, %v2239
        %v2276 = vsub.f32 %v2140, %v2243
        %v2277 = vsub.f32 %v2141, %v2247
        %v2278 = vsub.f32 %v2142, %v2251
        %v2279 = vsub.f32 %v2143, %v2255
        %v2280 = vsub.f32 %v2144, %v2259
        %v2281 = vsub.f32 %v2145, %v2263
        %v2282 = vmul.f32 %v2273, 1.442695
        %v2283 = vpow.pop %v2282
        %v2284 = vmul.f32 %v2274, 1.442695
        %v2285 = vpow.pop %v2284
        %v2286 = vmul.f32 %v2275, 1.442695
        %v2287 = vpow.pop %v2286
        %v2288 = vmul.f32 %v2276, 1.442695
        %v2289 = vpow.pop %v2288
        %v2290 = vmul.f32 %v2277, 1.442695
        %v2291 = vpow.pop %v2290
        %v2292 = vmul.f32 %v2278, 1.442695
        %v2293 = vpow.pop %v2292
        %v2294 = vmul.f32 %v2279, 1.442695
        %v2295 = vpow.pop %v2294
        %v2296 = vmul.f32 %v2280, 1.442695
        %v2297 = vpow.pop %v2296
        %v2298 = vmul.f32 %v2281, 1.442695
        %v2299 = vpow.pop %v2298
        %v2309 = vcombine.low %v2283, %v2285
        %v2310 = vcombine.low %v2287, %v2289
        %v2311 = vcombine.low %v2291, %v2293
        %v2312 = vcombine.low %v2295, %v2297
        %v2314 = vunpack.c.l.s4 1966171168
        %v2315 = vunpack.c.0.s8 %v2314
        %v2316 = vlaneseq
        %v2317 = vshrl.u32 %v2316, 7
        %v2318 = vsub.s32 %v2315, %v2317
        %v2319 = vrot.slane %v2309, %v2318
        %v2321 = vunpack.c.l.s4 1966171168
        %v2322 = vunpack.c.0.s8 %v2321
        %v2323 = vlaneseq
        %v2324 = vshrl.u32 %v2323, 7
        %v2325 = vsub.s32 %v2322, %v2324
        %v2326 = vrot.slane %v2310, %v2325
        %v2328 = vunpack.c.l.s4 1966171168
        %v2329 = vunpack.c.0.s8 %v2328
        %v2330 = vlaneseq
        %v2331 = vshrl.u32 %v2330, 7
        %v2332 = vsub.s32 %v2329, %v2331
        %v2333 = vrot.slane %v2311, %v2332
        %v2335 = vunpack.c.l.s4 1966171168
        %v2336 = vunpack.c.0.s8 %v2335
        %v2337 = vlaneseq
        %v2338 = vshrl.u32 %v2337, 7
        %v2339 = vsub.s32 %v2336, %v2338
        %v2340 = vrot.slane %v2312, %v2339
        %v2341 = vcombine.low %v2319, %v2326
        %v2342 = vcombine.low %v2333, %v2340
        %v2344 = vunpack.c.l.s4 1966171168
        %v2345 = vunpack.c.0.s8 %v2344
        %v2346 = vlaneseq
        %v2347 = vshrl.u32 %v2346, 7
        %v2348 = vsub.s32 %v2345, %v2347
        %v2349 = vrot.slane %v2341, %v2348
        %v2351 = vunpack.c.l.s4 1966171168
        %v2352 = vunpack.c.0.s8 %v2351
        %v2353 = vlaneseq
        %v2354 = vshrl.u32 %v2353, 7
        %v2355 = vsub.s32 %v2352, %v2354
        %v2356 = vrot.slane %v2342, %v2355
        %v2357 = vcombine.low %v2349, %v2356
        %v2359 = vunpack.c.l.s4 1966171168
        %v2360 = vunpack.c.0.s8 %v2359
        %v2361 = vlaneseq
        %v2362 = vshrl.u32 %v2361, 7
        %v2363 = vsub.s32 %v2360, %v2362
        %v2364 = vrot.slane %v2299, %v2363
        %v2366 = vunpack.c.l.s4 1966171168
        %v2367 = vunpack.c.0.s8 %v2366
        %v2368 = vlaneseq
        %v2369 = vshrl.u32 %v2368, 7
        %v2370 = vsub.s32 %v2367, %v2369
        %v2371 = vrot.slane %v2364, %v2370
        %v2374 = vsel %vm1094, %v2357, 0.0
        %2375 = vadd.xlane.f32.xlu0 %v2374
        %v2376 = vpop.xlane.xlu0 %2375
        %v2377 = vsel %vm1098, %v2371, 0.0
        %2378 = vadd.xlane.f32.xlu0 %v2377
        %v2379 = vpop.xlane.xlu0 %2378
        %v2380 = vrcp.pop %v2376
        %v2381 = vrcp.pop %v2379
        %v2384 = vlaneseq
        %v2385 = vshrl.u32 %v2384, 7
        %v2386 = vsub.s32 0, %v2385
        %v2387 = vrot.slane %v2380, %v2386
        %v2388 = vlaneseq
        %v2389 = vshrl.u32 %v2388, 7
        %v2390 = vsub.s32 1, %v2389
        %v2391 = vrot.slane %v2380, %v2390
        %v2392 = vlaneseq
        %v2393 = vshrl.u32 %v2392, 7
        %v2394 = vsub.s32 2, %v2393
        %v2395 = vrot.slane %v2380, %v2394
        %v2396 = vlaneseq
        %v2397 = vshrl.u32 %v2396, 7
        %v2398 = vsub.s32 3, %v2397
        %v2399 = vrot.slane %v2380, %v2398
        %v2400 = vlaneseq
        %v2401 = vshrl.u32 %v2400, 7
        %v2402 = vsub.s32 4, %v2401
        %v2403 = vrot.slane %v2380, %v2402
        %v2404 = vlaneseq
        %v2405 = vshrl.u32 %v2404, 7
        %v2406 = vsub.s32 5, %v2405
        %v2407 = vrot.slane %v2380, %v2406
        %v2408 = vlaneseq
        %v2409 = vshrl.u32 %v2408, 7
        %v2410 = vsub.s32 6, %v2409
        %v2411 = vrot.slane %v2380, %v2410
        %v2412 = vlaneseq
        %v2413 = vshrl.u32 %v2412, 7
        %v2414 = vsub.s32 7, %v2413
        %v2415 = vrot.slane %v2380, %v2414
        %v2416 = vlaneseq
        %v2417 = vshrl.u32 %v2416, 7
        %v2418 = vsub.s32 0, %v2417
        %v2419 = vrot.slane %v2381, %v2418
        %v2429 = vmul.f32 %v2283, %v2387
        %v2430 = vmul.f32 %v2285, %v2391
        %v2431 = vmul.f32 %v2287, %v2395
        %v2432 = vmul.f32 %v2289, %v2399
        %v2433 = vmul.f32 %v2291, %v2403
        %v2434 = vmul.f32 %v2293, %v2407
        %v2435 = vmul.f32 %v2295, %v2411
        %v2436 = vmul.f32 %v2297, %v2415
        %v2437 = vmul.f32 %v2299, %v2419
        %v2447 = vcombine.low %v2429, %v2430
        %v2448 = vcombine.low %v2431, %v2432
        %v2449 = vcombine.low %v2433, %v2434
        %v2450 = vcombine.low %v2435, %v2436
        %v2452 = vunpack.c.l.s4 1966171168
        %v2453 = vunpack.c.0.s8 %v2452
        %v2454 = vlaneseq
        %v2455 = vshrl.u32 %v2454, 7
        %v2456 = vsub.s32 %v2453, %v2455
        %v2457 = vrot.slane %v2447, %v2456
        %v2459 = vunpack.c.l.s4 1966171168
        %v2460 = vunpack.c.0.s8 %v2459
        %v2461 = vlaneseq
        %v2462 = vshrl.u32 %v2461, 7
        %v2463 = vsub.s32 %v2460, %v2462
        %v2464 = vrot.slane %v2448, %v2463
        %v2466 = vunpack.c.l.s4 1966171168
        %v2467 = vunpack.c.0.s8 %v2466
        %v2468 = vlaneseq
        %v2469 = vshrl.u32 %v2468, 7
        %v2470 = vsub.s32 %v2467, %v2469
        %v2471 = vrot.slane %v2449, %v2470
        %v2473 = vunpack.c.l.s4 1966171168
        %v2474 = vunpack.c.0.s8 %v2473
        %v2475 = vlaneseq
        %v2476 = vshrl.u32 %v2475, 7
        %v2477 = vsub.s32 %v2474, %v2476
        %v2478 = vrot.slane %v2450, %v2477
        %v2479 = vcombine.low %v2457, %v2464
        %v2480 = vcombine.low %v2471, %v2478
        %v2482 = vunpack.c.l.s4 1966171168
        %v2483 = vunpack.c.0.s8 %v2482
        %v2484 = vlaneseq
        %v2485 = vshrl.u32 %v2484, 7
        %v2486 = vsub.s32 %v2483, %v2485
        %v2487 = vrot.slane %v2479, %v2486
        %v2489 = vunpack.c.l.s4 1966171168
        %v2490 = vunpack.c.0.s8 %v2489
        %v2491 = vlaneseq
        %v2492 = vshrl.u32 %v2491, 7
        %v2493 = vsub.s32 %v2490, %v2492
        %v2494 = vrot.slane %v2480, %v2493
        %v2495 = vcombine.low %v2487, %v2494
        %v2497 = vunpack.c.l.s4 1966171168
        %v2498 = vunpack.c.0.s8 %v2497
        %v2499 = vlaneseq
        %v2500 = vshrl.u32 %v2499, 7
        %v2501 = vsub.s32 %v2498, %v2500
        %v2502 = vrot.slane %v2437, %v2501
        %v2504 = vunpack.c.l.s4 1966171168
        %v2505 = vunpack.c.0.s8 %v2504
        %v2506 = vlaneseq
        %v2507 = vshrl.u32 %v2506, 7
        %v2508 = vsub.s32 %v2505, %v2507
        %v2509 = vrot.slane %v2502, %v2508
        %2510 = vrot.lane.b32.xlu0 %v894, 112
        %v2511 = vpop.permute.xlu0 %2510
        %v2512 = vsel %vm1094, %v2495, 0
        %v2514 = vsel %vm1094, %v2509, 0
        %v2516 = vsel %vm1390, %v2511, 0
        %2518 = vmatprep.subr.mxu0 0.0
        %2519 = vmatpush1.msra.mxu0 %v2516
        %2520 = vmatprep.subr.mxu0 0.0
        %2521 = vmatpush1.msra.mxu0 0.0
        %2522 = vmatprep.subr.mxu0 0.0
        %2523 = vmatpush1.msra.mxu0 0.0
        %2524 = vmatprep.subr.mxu0 0.0
        %2525 = vmatpush1.msra.mxu0 0.0
        %2526 = vmatprep.subr.mxu0 0.0
        %2527 = vmatpush1.msra.mxu0 0.0
        %2528 = vmatprep.subr.mxu0 0.0
        %2529 = vmatpush1.msra.mxu0 0.0
        %2530 = vmatprep.subr.mxu0 0.0
        %2531 = vmatpush1.msra.mxu0 0.0
        %2532 = vmatprep.subr.mxu0 0.0
        %2533 = vmatpush1.msra.mxu0 0.0
        %2534 = vmatprep.subr.mxu0 0.0
        %2535 = vmatpush1.msra.mxu0 0.0
        %2536 = vmatprep.subr.mxu0 0.0
        %2537 = vmatpush1.msra.mxu0 0.0
        %2538 = vmatprep.subr.mxu0 0.0
        %2539 = vmatpush1.msra.mxu0 0.0
        %2540 = vmatprep.subr.mxu0 0.0
        %2541 = vmatpush1.msra.mxu0 0.0
        %2542 = vmatprep.subr.mxu0 0.0
        %2543 = vmatpush1.msra.mxu0 0.0
        %2544 = vmatprep.subr.mxu0 0.0
        %2545 = vmatpush1.msra.mxu0 0.0
        %2546 = vmatprep.subr.mxu0 0.0
        %2547 = vmatpush1.msra.mxu0 0.0
        %2548 = vmatprep.subr.mxu0 0.0
        %2549 = vmatpush1.msra.mxu0 0.0
        %2550 = vmatprep.subr.mxu0 0.0
        %2551 = vmatpush1.msra.mxu0 0.0
        %2552 = vmatprep.subr.mxu0 0.0
        %2553 = vmatpush1.msra.mxu0 0.0
        %2554 = vmatprep.subr.mxu0 0.0
        %2555 = vmatpush1.msra.mxu0 0.0
        %2556 = vmatprep.subr.mxu0 0.0
        %2557 = vmatpush1.msra.mxu0 0.0
        %2558 = vmatprep.subr.mxu0 0.0
        %2559 = vmatpush1.msra.mxu0 0.0
        %2560 = vmatprep.subr.mxu0 0.0
        %2561 = vmatpush1.msra.mxu0 0.0
        %2562 = vmatprep.subr.mxu0 0.0
        %2563 = vmatpush1.msra.mxu0 0.0
        %2564 = vmatprep.subr.mxu0 0.0
        %2565 = vmatpush1.msra.mxu0 0.0
        %2566 = vmatprep.subr.mxu0 0.0
        %2567 = vmatpush1.msra.mxu0 0.0
        %2568 = vmatprep.subr.mxu0 0.0
        %2569 = vmatpush1.msra.mxu0 0.0
        %2570 = vmatprep.subr.mxu0 0.0
        %2571 = vmatpush1.msra.mxu0 0.0
        %2572 = vmatprep.subr.mxu0 0.0
        %2573 = vmatpush1.msra.mxu0 0.0
        %2574 = vmatprep.subr.mxu0 0.0
        %2575 = vmatpush1.msra.mxu0 0.0
        %2576 = vmatprep.subr.mxu0 0.0
        %2577 = vmatpush1.msra.mxu0 0.0
        %2578 = vmatprep.subr.mxu0 0.0
        %2579 = vmatpush1.msra.mxu0 0.0
        %2580 = vmatprep.subr.mxu0 0.0
        %2581 = vmatpush1.msra.mxu0 0.0
        %2582 = vmatprep.mubr.f32.mxu0 0.0
        %2583 = vmatmul.mubr.f32.gmra.mrb[0].mxu0 %v2512
        %v2584 = vpop.f32.mrb[0].mxu0
        %v2585 = vadd.f32 0.0, %v2584
        %v2586 = vpop.f32.mrb[0].mxu0
        %2587 = vmatprep.mubr.f32.mxu0 0.0
        %2588 = vmatmul.mubr.f32.gmra.mrb[0].mxu0 %v2514
        %v2589 = vpop.f32.mrb[0].mxu0
        %v2590 = vadd.f32 0.0, %v2589
        %v2591 = vpop.f32.mrb[0].mxu0
        %2592 = vdwg.mxu0
        %2593 = vrot.lane.b32.xlu0 %v748, 104
        %v2594 = vpop.permute.xlu0 %2593
        %2595 = vrot.lane.b32.xlu0 %v821, 104
        %v2596 = vpop.permute.xlu0 %2595
        %v2597 = vsel %vm897, %v2594, 0
        %v2599 = vsel %vm897, %v2596, 0
        %2601 = vmatprep.subr.mxu0 0.0
        %2602 = vmatpush1.xpose.msra.mxu0 %v2599
        %2603 = vmatprep.subr.mxu0 0.0
        %2604 = vmatpush1.xpose.msra.mxu0 0.0
        %2605 = vmatprep.subr.mxu0 0.0
        %2606 = vmatpush1.xpose.msra.mxu0 0.0
        %2607 = vmatprep.subr.mxu0 0.0
        %2608 = vmatpush1.xpose.msra.mxu0 0.0
        %2609 = vmatprep.subr.mxu0 0.0
        %2610 = vmatpush1.xpose.msra.mxu0 0.0
        %2611 = vmatprep.subr.mxu0 0.0
        %2612 = vmatpush1.xpose.msra.mxu0 0.0
        %2613 = vmatprep.subr.mxu0 0.0
        %2614 = vmatpush1.xpose.msra.mxu0 0.0
        %2615 = vmatprep.subr.mxu0 0.0
        %2616 = vmatpush1.xpose.msra.mxu0 0.0
        %2617 = vmatprep.subr.mxu0 0.0
        %2618 = vmatpush1.xpose.msra.mxu0 0.0
        %2619 = vmatprep.subr.mxu0 0.0
        %2620 = vmatpush1.xpose.msra.mxu0 0.0
        %2621 = vmatprep.subr.mxu0 0.0
        %2622 = vmatpush1.xpose.msra.mxu0 0.0
        %2623 = vmatprep.subr.mxu0 0.0
        %2624 = vmatpush1.xpose.msra.mxu0 0.0
        %2625 = vmatprep.subr.mxu0 0.0
        %2626 = vmatpush1.xpose.msra.mxu0 0.0
        %2627 = vmatprep.subr.mxu0 0.0
        %2628 = vmatpush1.xpose.msra.mxu0 0.0
        %2629 = vmatprep.subr.mxu0 0.0
        %2630 = vmatpush1.xpose.msra.mxu0 0.0
        %2631 = vmatprep.subr.mxu0 0.0
        %2632 = vmatpush1.xpose.msra.mxu0 0.0
        %2633 = vmatprep.subr.mxu0 0.0
        %2634 = vmatpush1.xpose.msra.mxu0 0.0
        %2635 = vmatprep.subr.mxu0 0.0
        %2636 = vmatpush1.xpose.msra.mxu0 0.0
        %2637 = vmatprep.subr.mxu0 0.0
        %2638 = vmatpush1.xpose.msra.mxu0 0.0
        %2639 = vmatprep.subr.mxu0 0.0
        %2640 = vmatpush1.xpose.msra.mxu0 0.0
        %2641 = vmatprep.subr.mxu0 0.0
        %2642 = vmatpush1.xpose.msra.mxu0 0.0
        %2643 = vmatprep.subr.mxu0 0.0
        %2644 = vmatpush1.xpose.msra.mxu0 0.0
        %2645 = vmatprep.subr.mxu0 0.0
        %2646 = vmatpush1.xpose.msra.mxu0 0.0
        %2647 = vmatprep.subr.mxu0 0.0
        %2648 = vmatpush1.xpose.msra.mxu0 0.0
        %2649 = vmatprep.subr.mxu0 0.0
        %2650 = vmatpush1.xpose.msra.mxu0 0.0
        %2651 = vmatprep.subr.mxu0 0.0
        %2652 = vmatpush1.xpose.msra.mxu0 0.0
        %2653 = vmatprep.subr.mxu0 0.0
        %2654 = vmatpush1.xpose.msra.mxu0 0.0
        %2655 = vmatprep.subr.mxu0 0.0
        %2656 = vmatpush1.xpose.msra.mxu0 0.0
        %2657 = vmatprep.subr.mxu0 0.0
        %2658 = vmatpush1.xpose.msra.mxu0 0.0
        %2659 = vmatprep.subr.mxu0 0.0
        %2660 = vmatpush1.xpose.msra.mxu0 0.0
        %2661 = vmatprep.subr.mxu0 0.0
        %2662 = vmatpush1.xpose.msra.mxu0 0.0
        %2663 = vmatprep.subr.mxu0 0.0
        %2664 = vmatpush1.xpose.msra.mxu0 0.0
        %2665 = vmatprep.mubr.f32.mxu0 0.0
        %2666 = vmatmul.mubr.f32.gmra.mrb[0].mxu0 %v2597
        %v2667 = vpop.f32.mrb[0].mxu0
        %v2668 = vadd.f32 0.0, %v2667
        %v2669 = vpop.f32.mrb[0].mxu0
        %2670 = vdwg.mxu0
        %v2671 = vmul.f32 %v2668, 0.35355338
        %v2674 = vunpack.c.l.s4 1966171168
        %v2675 = vunpack.c.0.s8 %v2674
        %v2676 = vlaneseq
        %v2677 = vshrl.u32 %v2676, 7
        %v2678 = vsub.s32 %v2675, %v2677
        %v2679 = vrot.slane %v2671, %v2678
        %v2680 = vcombine.high %v2679, %v2679
        %v2682 = vunpack.c.l.s4 1966171168
        %v2683 = vunpack.c.0.s8 %v2682
        %v2684 = vlaneseq
        %v2685 = vshrl.u32 %v2684, 7
        %v2686 = vsub.s32 %v2683, %v2685
        %v2687 = vrot.slane %v2679, %v2686
        %v2689 = vunpack.c.l.s4 1966171168
        %v2690 = vunpack.c.0.s8 %v2689
        %v2691 = vlaneseq
        %v2692 = vshrl.u32 %v2691, 7
        %v2693 = vsub.s32 %v2690, %v2692
        %v2694 = vrot.slane %v2680, %v2693
        %v2695 = vcombine.high %v2687, %v2687
        %v2699 = vsel %vm1002, -1e+30, %v2687
        %v2700 = vsel %vm1003, -1e+30, %v2694
        %v2701 = vsel %vm1004, -1e+30, %v2695
        %v2702 = vsel %vm1005, -1e+30, %v2687
        %v2703 = vsel %vm1006, -1e+30, %v2694
        %v2704 = vsel %vm1007, -1e+30, %v2695
        %v2705 = vsel %vm1008, -1e+30, %v2687
        %v2706 = vsel %vm1009, -1e+30, %v2694
        %v2707 = vsel %vm1010, -1e+30, %v2695
        %v2717 = vcombine.low %v2699, %v2700
        %v2718 = vcombine.low %v2701, %v2702
        %v2719 = vcombine.low %v2703, %v2704
        %v2720 = vcombine.low %v2705, %v2706
        %v2722 = vunpack.c.l.s4 1966171168
        %v2723 = vunpack.c.0.s8 %v2722
        %v2724 = vlaneseq
        %v2725 = vshrl.u32 %v2724, 7
        %v2726 = vsub.s32 %v2723, %v2725
        %v2727 = vrot.slane %v2717, %v2726
        %v2729 = vunpack.c.l.s4 1966171168
        %v2730 = vunpack.c.0.s8 %v2729
        %v2731 = vlaneseq
        %v2732 = vshrl.u32 %v2731, 7
        %v2733 = vsub.s32 %v2730, %v2732
        %v2734 = vrot.slane %v2718, %v2733
        %v2736 = vunpack.c.l.s4 1966171168
        %v2737 = vunpack.c.0.s8 %v2736
        %v2738 = vlaneseq
        %v2739 = vshrl.u32 %v2738, 7
        %v2740 = vsub.s32 %v2737, %v2739
        %v2741 = vrot.slane %v2719, %v2740
        %v2743 = vunpack.c.l.s4 1966171168
        %v2744 = vunpack.c.0.s8 %v2743
        %v2745 = vlaneseq
        %v2746 = vshrl.u32 %v2745, 7
        %v2747 = vsub.s32 %v2744, %v2746
        %v2748 = vrot.slane %v2720, %v2747
        %v2749 = vcombine.low %v2727, %v2734
        %v2750 = vcombine.low %v2741, %v2748
        %v2752 = vunpack.c.l.s4 1966171168
        %v2753 = vunpack.c.0.s8 %v2752
        %v2754 = vlaneseq
        %v2755 = vshrl.u32 %v2754, 7
        %v2756 = vsub.s32 %v2753, %v2755
        %v2757 = vrot.slane %v2749, %v2756
        %v2759 = vunpack.c.l.s4 1966171168
        %v2760 = vunpack.c.0.s8 %v2759
        %v2761 = vlaneseq
        %v2762 = vshrl.u32 %v2761, 7
        %v2763 = vsub.s32 %v2760, %v2762
        %v2764 = vrot.slane %v2750, %v2763
        %v2765 = vcombine.low %v2757, %v2764
        %v2767 = vunpack.c.l.s4 1966171168
        %v2768 = vunpack.c.0.s8 %v2767
        %v2769 = vlaneseq
        %v2770 = vshrl.u32 %v2769, 7
        %v2771 = vsub.s32 %v2768, %v2770
        %v2772 = vrot.slane %v2707, %v2771
        %v2774 = vunpack.c.l.s4 1966171168
        %v2775 = vunpack.c.0.s8 %v2774
        %v2776 = vlaneseq
        %v2777 = vshrl.u32 %v2776, 7
        %v2778 = vsub.s32 %v2775, %v2777
        %v2779 = vrot.slane %v2772, %v2778
        %v2782 = vsel %vm1094, %v2765, -inf
        %2783 = vmax.xlane.f32.xlu0 %v2782
        %v2784 = vpop.xlane.xlu0 %2783
        %v2785 = vsel %vm1098, %v2779, -inf
        %2786 = vmax.xlane.f32.xlu0 %v2785
        %v2787 = vpop.xlane.xlu0 %2786
        %v2790 = vlaneseq
        %v2791 = vshrl.u32 %v2790, 7
        %v2792 = vsub.s32 0, %v2791
        %v2793 = vrot.slane %v2784, %v2792
        %v2794 = vlaneseq
        %v2795 = vshrl.u32 %v2794, 7
        %v2796 = vsub.s32 1, %v2795
        %v2797 = vrot.slane %v2784, %v2796
        %v2798 = vlaneseq
        %v2799 = vshrl.u32 %v2798, 7
        %v2800 = vsub.s32 2, %v2799
        %v2801 = vrot.slane %v2784, %v2800
        %v2802 = vlaneseq
        %v2803 = vshrl.u32 %v2802, 7
        %v2804 = vsub.s32 3, %v2803
        %v2805 = vrot.slane %v2784, %v2804
        %v2806 = vlaneseq
        %v2807 = vshrl.u32 %v2806, 7
        %v2808 = vsub.s32 4, %v2807
        %v2809 = vrot.slane %v2784, %v2808
        %v2810 = vlaneseq
        %v2811 = vshrl.u32 %v2810, 7
        %v2812 = vsub.s32 5, %v2811
        %v2813 = vrot.slane %v2784, %v2812
        %v2814 = vlaneseq
        %v2815 = vshrl.u32 %v2814, 7
        %v2816 = vsub.s32 6, %v2815
        %v2817 = vrot.slane %v2784, %v2816
        %v2818 = vlaneseq
        %v2819 = vshrl.u32 %v2818, 7
        %v2820 = vsub.s32 7, %v2819
        %v2821 = vrot.slane %v2784, %v2820
        %v2822 = vlaneseq
        %v2823 = vshrl.u32 %v2822, 7
        %v2824 = vsub.s32 0, %v2823
        %v2825 = vrot.slane %v2787, %v2824
        %v2835 = vsub.f32 %v2699, %v2793
        %v2836 = vsub.f32 %v2700, %v2797
        %v2837 = vsub.f32 %v2701, %v2801
        %v2838 = vsub.f32 %v2702, %v2805
        %v2839 = vsub.f32 %v2703, %v2809
        %v2840 = vsub.f32 %v2704, %v2813
        %v2841 = vsub.f32 %v2705, %v2817
        %v2842 = vsub.f32 %v2706, %v2821
        %v2843 = vsub.f32 %v2707, %v2825
        %v2844 = vmul.f32 %v2835, 1.442695
        %v2845 = vpow.pop %v2844
        %v2846 = vmul.f32 %v2836, 1.442695
        %v2847 = vpow.pop %v2846
        %v2848 = vmul.f32 %v2837, 1.442695
        %v2849 = vpow.pop %v2848
        %v2850 = vmul.f32 %v2838, 1.442695
        %v2851 = vpow.pop %v2850
        %v2852 = vmul.f32 %v2839, 1.442695
        %v2853 = vpow.pop %v2852
        %v2854 = vmul.f32 %v2840, 1.442695
        %v2855 = vpow.pop %v2854
        %v2856 = vmul.f32 %v2841, 1.442695
        %v2857 = vpow.pop %v2856
        %v2858 = vmul.f32 %v2842, 1.442695
        %v2859 = vpow.pop %v2858
        %v2860 = vmul.f32 %v2843, 1.442695
        %v2861 = vpow.pop %v2860
        %v2871 = vcombine.low %v2845, %v2847
        %v2872 = vcombine.low %v2849, %v2851
        %v2873 = vcombine.low %v2853, %v2855
        %v2874 = vcombine.low %v2857, %v2859
        %v2876 = vunpack.c.l.s4 1966171168
        %v2877 = vunpack.c.0.s8 %v2876
        %v2878 = vlaneseq
        %v2879 = vshrl.u32 %v2878, 7
        %v2880 = vsub.s32 %v2877, %v2879
        %v2881 = vrot.slane %v2871, %v2880
        %v2883 = vunpack.c.l.s4 1966171168
        %v2884 = vunpack.c.0.s8 %v2883
        %v2885 = vlaneseq
        %v2886 = vshrl.u32 %v2885, 7
        %v2887 = vsub.s32 %v2884, %v2886
        %v2888 = vrot.slane %v2872, %v2887
        %v2890 = vunpack.c.l.s4 1966171168
        %v2891 = vunpack.c.0.s8 %v2890
        %v2892 = vlaneseq
        %v2893 = vshrl.u32 %v2892, 7
        %v2894 = vsub.s32 %v2891, %v2893
        %v2895 = vrot.slane %v2873, %v2894
        %v2897 = vunpack.c.l.s4 1966171168
        %v2898 = vunpack.c.0.s8 %v2897
        %v2899 = vlaneseq
        %v2900 = vshrl.u32 %v2899, 7
        %v2901 = vsub.s32 %v2898, %v2900
        %v2902 = vrot.slane %v2874, %v2901
        %v2903 = vcombine.low %v2881, %v2888
        %v2904 = vcombine.low %v2895, %v2902
        %v2906 = vunpack.c.l.s4 1966171168
        %v2907 = vunpack.c.0.s8 %v2906
        %v2908 = vlaneseq
        %v2909 = vshrl.u32 %v2908, 7
        %v2910 = vsub.s32 %v2907, %v2909
        %v2911 = vrot.slane %v2903, %v2910
        %v2913 = vunpack.c.l.s4 1966171168
        %v2914 = vunpack.c.0.s8 %v2913
        %v2915 = vlaneseq
        %v2916 = vshrl.u32 %v2915, 7
        %v2917 = vsub.s32 %v2914, %v2916
        %v2918 = vrot.slane %v2904, %v2917
        %v2919 = vcombine.low %v2911, %v2918
        %v2921 = vunpack.c.l.s4 1966171168
        %v2922 = vunpack.c.0.s8 %v2921
        %v2923 = vlaneseq
        %v2924 = vshrl.u32 %v2923, 7
        %v2925 = vsub.s32 %v2922, %v2924
        %v2926 = vrot.slane %v2861, %v2925
        %v2928 = vunpack.c.l.s4 1966171168
        %v2929 = vunpack.c.0.s8 %v2928
        %v2930 = vlaneseq
        %v2931 = vshrl.u32 %v2930, 7
        %v2932 = vsub.s32 %v2929, %v2931
        %v2933 = vrot.slane %v2926, %v2932
        %v2936 = vsel %vm1094, %v2919, 0.0
        %2937 = vadd.xlane.f32.xlu0 %v2936
        %v2938 = vpop.xlane.xlu0 %2937
        %v2939 = vsel %vm1098, %v2933, 0.0
        %2940 = vadd.xlane.f32.xlu0 %v2939
        %v2941 = vpop.xlane.xlu0 %2940
        %v2942 = vrcp.pop %v2938
        %v2943 = vrcp.pop %v2941
        %v2946 = vlaneseq
        %v2947 = vshrl.u32 %v2946, 7
        %v2948 = vsub.s32 0, %v2947
        %v2949 = vrot.slane %v2942, %v2948
        %v2950 = vlaneseq
        %v2951 = vshrl.u32 %v2950, 7
        %v2952 = vsub.s32 1, %v2951
        %v2953 = vrot.slane %v2942, %v2952
        %v2954 = vlaneseq
        %v2955 = vshrl.u32 %v2954, 7
        %v2956 = vsub.s32 2, %v2955
        %v2957 = vrot.slane %v2942, %v2956
        %v2958 = vlaneseq
        %v2959 = vshrl.u32 %v2958, 7
        %v2960 = vsub.s32 3, %v2959
        %v2961 = vrot.slane %v2942, %v2960
        %v2962 = vlaneseq
        %v2963 = vshrl.u32 %v2962, 7
        %v2964 = vsub.s32 4, %v2963
        %v2965 = vrot.slane %v2942, %v2964
        %v2966 = vlaneseq
        %v2967 = vshrl.u32 %v2966, 7
        %v2968 = vsub.s32 5, %v2967
        %v2969 = vrot.slane %v2942, %v2968
        %v2970 = vlaneseq
        %v2971 = vshrl.u32 %v2970, 7
        %v2972 = vsub.s32 6, %v2971
        %v2973 = vrot.slane %v2942, %v2972
        %v2974 = vlaneseq
        %v2975 = vshrl.u32 %v2974, 7
        %v2976 = vsub.s32 7, %v2975
        %v2977 = vrot.slane %v2942, %v2976
        %v2978 = vlaneseq
        %v2979 = vshrl.u32 %v2978, 7
        %v2980 = vsub.s32 0, %v2979
        %v2981 = vrot.slane %v2943, %v2980
        %v2991 = vmul.f32 %v2845, %v2949
        %v2992 = vmul.f32 %v2847, %v2953
        %v2993 = vmul.f32 %v2849, %v2957
        %v2994 = vmul.f32 %v2851, %v2961
        %v2995 = vmul.f32 %v2853, %v2965
        %v2996 = vmul.f32 %v2855, %v2969
        %v2997 = vmul.f32 %v2857, %v2973
        %v2998 = vmul.f32 %v2859, %v2977
        %v2999 = vmul.f32 %v2861, %v2981
        %v3009 = vcombine.low %v2991, %v2992
        %v3010 = vcombine.low %v2993, %v2994
        %v3011 = vcombine.low %v2995, %v2996
        %v3012 = vcombine.low %v2997, %v2998
        %v3014 = vunpack.c.l.s4 1966171168
        %v3015 = vunpack.c.0.s8 %v3014
        %v3016 = vlaneseq
        %v3017 = vshrl.u32 %v3016, 7
        %v3018 = vsub.s32 %v3015, %v3017
        %v3019 = vrot.slane %v3009, %v3018
        %v3021 = vunpack.c.l.s4 1966171168
        %v3022 = vunpack.c.0.s8 %v3021
        %v3023 = vlaneseq
        %v3024 = vshrl.u32 %v3023, 7
        %v3025 = vsub.s32 %v3022, %v3024
        %v3026 = vrot.slane %v3010, %v3025
        %v3028 = vunpack.c.l.s4 1966171168
        %v3029 = vunpack.c.0.s8 %v3028
        %v3030 = vlaneseq
        %v3031 = vshrl.u32 %v3030, 7
        %v3032 = vsub.s32 %v3029, %v3031
        %v3033 = vrot.slane %v3011, %v3032
        %v3035 = vunpack.c.l.s4 1966171168
        %v3036 = vunpack.c.0.s8 %v3035
        %v3037 = vlaneseq
        %v3038 = vshrl.u32 %v3037, 7
        %v3039 = vsub.s32 %v3036, %v3038
        %v3040 = vrot.slane %v3012, %v3039
        %v3041 = vcombine.low %v3019, %v3026
        %v3042 = vcombine.low %v3033, %v3040
        %v3044 = vunpack.c.l.s4 1966171168
        %v3045 = vunpack.c.0.s8 %v3044
        %v3046 = vlaneseq
        %v3047 = vshrl.u32 %v3046, 7
        %v3048 = vsub.s32 %v3045, %v3047
        %v3049 = vrot.slane %v3041, %v3048
        %v3051 = vunpack.c.l.s4 1966171168
        %v3052 = vunpack.c.0.s8 %v3051
        %v3053 = vlaneseq
        %v3054 = vshrl.u32 %v3053, 7
        %v3055 = vsub.s32 %v3052, %v3054
        %v3056 = vrot.slane %v3042, %v3055
        %v3057 = vcombine.low %v3049, %v3056
        %v3059 = vunpack.c.l.s4 1966171168
        %v3060 = vunpack.c.0.s8 %v3059
        %v3061 = vlaneseq
        %v3062 = vshrl.u32 %v3061, 7
        %v3063 = vsub.s32 %v3060, %v3062
        %v3064 = vrot.slane %v2999, %v3063
        %v3066 = vunpack.c.l.s4 1966171168
        %v3067 = vunpack.c.0.s8 %v3066
        %v3068 = vlaneseq
        %v3069 = vshrl.u32 %v3068, 7
        %v3070 = vsub.s32 %v3067, %v3069
        %v3071 = vrot.slane %v3064, %v3070
        %3072 = vrot.lane.b32.xlu0 %v894, 104
        %v3073 = vpop.permute.xlu0 %3072
        %v3074 = vsel %vm1094, %v3057, 0
        %v3076 = vsel %vm1094, %v3071, 0
        %v3078 = vsel %vm1390, %v3073, 0
        %3080 = vmatprep.subr.mxu0 0.0
        %3081 = vmatpush1.msra.mxu0 %v3078
        %3082 = vmatprep.subr.mxu0 0.0
        %3083 = vmatpush1.msra.mxu0 0.0
        %3084 = vmatprep.subr.mxu0 0.0
        %3085 = vmatpush1.msra.mxu0 0.0
        %3086 = vmatprep.subr.mxu0 0.0
        %3087 = vmatpush1.msra.mxu0 0.0
        %3088 = vmatprep.subr.mxu0 0.0
        %3089 = vmatpush1.msra.mxu0 0.0
        %3090 = vmatprep.subr.mxu0 0.0
        %3091 = vmatpush1.msra.mxu0 0.0
        %3092 = vmatprep.subr.mxu0 0.0
        %3093 = vmatpush1.msra.mxu0 0.0
        %3094 = vmatprep.subr.mxu0 0.0
        %3095 = vmatpush1.msra.mxu0 0.0
        %3096 = vmatprep.subr.mxu0 0.0
        %3097 = vmatpush1.msra.mxu0 0.0
        %3098 = vmatprep.subr.mxu0 0.0
        %3099 = vmatpush1.msra.mxu0 0.0
        %3100 = vmatprep.subr.mxu0 0.0
        %3101 = vmatpush1.msra.mxu0 0.0
        %3102 = vmatprep.subr.mxu0 0.0
        %3103 = vmatpush1.msra.mxu0 0.0
        %3104 = vmatprep.subr.mxu0 0.0
        %3105 = vmatpush1.msra.mxu0 0.0
        %3106 = vmatprep.subr.mxu0 0.0
        %3107 = vmatpush1.msra.mxu0 0.0
        %3108 = vmatprep.subr.mxu0 0.0
        %3109 = vmatpush1.msra.mxu0 0.0
        %3110 = vmatprep.subr.mxu0 0.0
        %3111 = vmatpush1.msra.mxu0 0.0
        %3112 = vmatprep.subr.mxu0 0.0
        %3113 = vmatpush1.msra.mxu0 0.0
        %3114 = vmatprep.subr.mxu0 0.0
        %3115 = vmatpush1.msra.mxu0 0.0
        %3116 = vmatprep.subr.mxu0 0.0
        %3117 = vmatpush1.msra.mxu0 0.0
        %3118 = vmatprep.subr.mxu0 0.0
        %3119 = vmatpush1.msra.mxu0 0.0
        %3120 = vmatprep.subr.mxu0 0.0
        %3121 = vmatpush1.msra.mxu0 0.0
        %3122 = vmatprep.subr.mxu0 0.0
        %3123 = vmatpush1.msra.mxu0 0.0
        %3124 = vmatprep.subr.mxu0 0.0
        %3125 = vmatpush1.msra.mxu0 0.0
        %3126 = vmatprep.subr.mxu0 0.0
        %3127 = vmatpush1.msra.mxu0 0.0
        %3128 = vmatprep.subr.mxu0 0.0
        %3129 = vmatpush1.msra.mxu0 0.0
        %3130 = vmatprep.subr.mxu0 0.0
        %3131 = vmatpush1.msra.mxu0 0.0
        %3132 = vmatprep.subr.mxu0 0.0
        %3133 = vmatpush1.msra.mxu0 0.0
        %3134 = vmatprep.subr.mxu0 0.0
        %3135 = vmatpush1.msra.mxu0 0.0
        %3136 = vmatprep.subr.mxu0 0.0
        %3137 = vmatpush1.msra.mxu0 0.0
        %3138 = vmatprep.subr.mxu0 0.0
        %3139 = vmatpush1.msra.mxu0 0.0
        %3140 = vmatprep.subr.mxu0 0.0
        %3141 = vmatpush1.msra.mxu0 0.0
        %3142 = vmatprep.subr.mxu0 0.0
        %3143 = vmatpush1.msra.mxu0 0.0
        %3144 = vmatprep.mubr.f32.mxu0 0.0
        %3145 = vmatmul.mubr.f32.gmra.mrb[0].mxu0 %v3074
        %v3146 = vpop.f32.mrb[0].mxu0
        %v3147 = vadd.f32 0.0, %v3146
        %v3148 = vpop.f32.mrb[0].mxu0
        %3149 = vmatprep.mubr.f32.mxu0 0.0
        %3150 = vmatmul.mubr.f32.gmra.mrb[0].mxu0 %v3076
        %v3151 = vpop.f32.mrb[0].mxu0
        %v3152 = vadd.f32 0.0, %v3151
        %v3153 = vpop.f32.mrb[0].mxu0
        %3154 = vdwg.mxu0
        %3157 = vrot.lane.b32.xlu0 %v2023, 8
        %v3158 = vpop.permute.xlu0 %3157
        %3159 = vrot.lane.b32.xlu0 %v2028, 8
        %v3160 = vpop.permute.xlu0 %3159
        %3165 = vrot.lane.b32.xlu0 %v2585, 16
        %v3166 = vpop.permute.xlu0 %3165
        %3167 = vrot.lane.b32.xlu0 %v2590, 16
        %v3168 = vpop.permute.xlu0 %3167
        %3173 = vrot.lane.b32.xlu0 %v3147, 24
        %v3174 = vpop.permute.xlu0 %3173
        %3175 = vrot.lane.b32.xlu0 %v3152, 24
        %v3176 = vpop.permute.xlu0 %3175
        %v3179 = vsel %vm897, %v1461, %v3158
        %v3180 = vsel %vm897, %v1466, %v3160
        %vm3181 = vcmask 130048
        %v3182 = vsel %vm3181, %v3179, %v3166
        %v3183 = vsel %vm3181, %v3180, %v3168
        %vm3184 = vcmask 195584
        %v3185 = vsel %vm3184, %v3182, %v3174
        %v3186 = vsel %vm3184, %v3183, %v3176
        %3187 = vst.msk [vmem:[%s527] sm:$0xff] %vm677, %v3185
        %vm3188 = vcmask 253952
        %3189 = vst.msk [vmem:[%s527 + $0x8] sm:$0x1] %vm3188, %v3186
        %v3190 = vld [vmem:[#allocation2] sm:$0xff]
        %v3191 = vld [vmem:[#allocation2 + $0x8] sm:$0xff]
        %v3192 = vld [vmem:[#allocation2 + $0x10] sm:$0xff]
        %v3193 = vld [vmem:[#allocation2 + $0x18] sm:$0xff]
        %v3194 = vld [vmem:[#allocation4] sm:$0xff]
        %v3195 = vld [vmem:[#allocation4 + $0x8] sm:$0xff]
        %v3196 = vld [vmem:[#allocation4 + $0x10] sm:$0xff]
        %v3197 = vld [vmem:[#allocation4 + $0x18] sm:$0xff]
        %v3198 = vld [vmem:[#allocation6] sm:$0xff]
        %v3199 = vld [vmem:[#allocation6 + $0x8] sm:$0xff]
        %v3200 = vld [vmem:[#allocation6 + $0x10] sm:$0xff]
        %v3201 = vld [vmem:[#allocation6 + $0x18] sm:$0xff]
        %3202 = vmatprep.subr.mxu0 0.0
        %3203 = vmatpush1.msra.mxu0 %v3190
        %3204 = vmatprep.subr.mxu0 0.0
        %3205 = vmatpush1.msra.mxu0 %v3191
        %3206 = vmatprep.subr.mxu0 0.0
        %3207 = vmatpush1.msra.mxu0 %v3192
        %3208 = vmatprep.subr.mxu0 0.0
        %3209 = vmatpush1.msra.mxu0 %v3193
        %3210 = vmatprep.subr.mxu0 0.0
        %3211 = vmatpush1.msra.mxu0 0.0
        %3212 = vmatprep.subr.mxu0 0.0
        %3213 = vmatpush1.msra.mxu0 0.0
        %3214 = vmatprep.subr.mxu0 0.0
        %3215 = vmatpush1.msra.mxu0 0.0
        %3216 = vmatprep.subr.mxu0 0.0
        %3217 = vmatpush1.msra.mxu0 0.0
        %3218 = vmatprep.subr.mxu0 0.0
        %3219 = vmatpush1.msra.mxu0 0.0
        %3220 = vmatprep.subr.mxu0 0.0
        %3221 = vmatpush1.msra.mxu0 0.0
        %3222 = vmatprep.subr.mxu0 0.0
        %3223 = vmatpush1.msra.mxu0 0.0
        %3224 = vmatprep.subr.mxu0 0.0
        %3225 = vmatpush1.msra.mxu0 0.0
        %3226 = vmatprep.subr.mxu0 0.0
        %3227 = vmatpush1.msra.mxu0 0.0
        %3228 = vmatprep.subr.mxu0 0.0
        %3229 = vmatpush1.msra.mxu0 0.0
        %3230 = vmatprep.subr.mxu0 0.0
        %3231 = vmatpush1.msra.mxu0 0.0
        %3232 = vmatprep.subr.mxu0 0.0
        %3233 = vmatpush1.msra.mxu0 0.0
        %3234 = vmatprep.subr.mxu0 0.0
        %3235 = vmatpush1.msra.mxu0 0.0
        %3236 = vmatprep.subr.mxu0 0.0
        %3237 = vmatpush1.msra.mxu0 0.0
        %3238 = vmatprep.subr.mxu0 0.0
        %3239 = vmatpush1.msra.mxu0 0.0
        %3240 = vmatprep.subr.mxu0 0.0
        %3241 = vmatpush1.msra.mxu0 0.0
        %3242 = vmatprep.subr.mxu0 0.0
        %3243 = vmatpush1.msra.mxu0 0.0
        %3244 = vmatprep.subr.mxu0 0.0
        %3245 = vmatpush1.msra.mxu0 0.0
        %3246 = vmatprep.subr.mxu0 0.0
        %3247 = vmatpush1.msra.mxu0 0.0
        %3248 = vmatprep.subr.mxu0 0.0
        %3249 = vmatpush1.msra.mxu0 0.0
        %3250 = vmatprep.subr.mxu0 0.0
        %3251 = vmatpush1.msra.mxu0 0.0
        %3252 = vmatprep.subr.mxu0 0.0
        %3253 = vmatpush1.msra.mxu0 0.0
        %3254 = vmatprep.subr.mxu0 0.0
        %3255 = vmatpush1.msra.mxu0 0.0
        %3256 = vmatprep.subr.mxu0 0.0
        %3257 = vmatpush1.msra.mxu0 0.0
        %3258 = vmatprep.subr.mxu0 0.0
        %3259 = vmatpush1.msra.mxu0 0.0
        %3260 = vmatprep.subr.mxu0 0.0
        %3261 = vmatpush1.msra.mxu0 0.0
        %3262 = vmatprep.subr.mxu0 0.0
        %3263 = vmatpush1.msra.mxu0 0.0
        %3264 = vmatprep.subr.mxu0 0.0
        %3265 = vmatpush1.msra.mxu0 0.0
        %3266 = vmatprep.mubr.f32.mxu0 0.0
        %3267 = vmatmul.mubr.f32.gmra.mrb[0].mxu0 %v679
        %v3268 = vpop.f32.mrb[0].mxu0
        %v3269 = vadd.f32 0.0, %v3268
        %v3270 = vpop.f32.mrb[0].mxu0
        %3271 = vdwg.mxu0
        %3272 = vmatprep.subr.mxu0 0.0
        %3273 = vmatpush1.msra.mxu0 %v3194
        %3274 = vmatprep.subr.mxu0 0.0
        %3275 = vmatpush1.msra.mxu0 %v3195
        %3276 = vmatprep.subr.mxu0 0.0
        %3277 = vmatpush1.msra.mxu0 %v3196
        %3278 = vmatprep.subr.mxu0 0.0
        %3279 = vmatpush1.msra.mxu0 %v3197
        %3280 = vmatprep.subr.mxu0 0.0
        %3281 = vmatpush1.msra.mxu0 0.0
        %3282 = vmatprep.subr.mxu0 0.0
        %3283 = vmatpush1.msra.mxu0 0.0
        %3284 = vmatprep.subr.mxu0 0.0
        %3285 = vmatpush1.msra.mxu0 0.0
        %3286 = vmatprep.subr.mxu0 0.0
        %3287 = vmatpush1.msra.mxu0 0.0
        %3288 = vmatprep.subr.mxu0 0.0
        %3289 = vmatpush1.msra.mxu0 0.0
        %3290 = vmatprep.subr.mxu0 0.0
        %3291 = vmatpush1.msra.mxu0 0.0
        %3292 = vmatprep.subr.mxu0 0.0
        %3293 = vmatpush1.msra.mxu0 0.0
        %3294 = vmatprep.subr.mxu0 0.0
        %3295 = vmatpush1.msra.mxu0 0.0
        %3296 = vmatprep.subr.mxu0 0.0
        %3297 = vmatpush1.msra.mxu0 0.0
        %3298 = vmatprep.subr.mxu0 0.0
        %3299 = vmatpush1.msra.mxu0 0.0
        %3300 = vmatprep.subr.mxu0 0.0
        %3301 = vmatpush1.msra.mxu0 0.0
        %3302 = vmatprep.subr.mxu0 0.0
        %3303 = vmatpush1.msra.mxu0 0.0
        %3304 = vmatprep.subr.mxu0 0.0
        %3305 = vmatpush1.msra.mxu0 0.0
        %3306 = vmatprep.subr.mxu0 0.0
        %3307 = vmatpush1.msra.mxu0 0.0
        %3308 = vmatprep.subr.mxu0 0.0
        %3309 = vmatpush1.msra.mxu0 0.0
        %3310 = vmatprep.subr.mxu0 0.0
        %3311 = vmatpush1.msra.mxu0 0.0
        %3312 = vmatprep.subr.mxu0 0.0
        %3313 = vmatpush1.msra.mxu0 0.0
        %3314 = vmatprep.subr.mxu0 0.0
        %3315 = vmatpush1.msra.mxu0 0.0
        %3316 = vmatprep.subr.mxu0 0.0
        %3317 = vmatpush1.msra.mxu0 0.0
        %3318 = vmatprep.subr.mxu0 0.0
        %3319 = vmatpush1.msra.mxu0 0.0
        %3320 = vmatprep.subr.mxu0 0.0
        %3321 = vmatpush1.msra.mxu0 0.0
        %3322 = vmatprep.subr.mxu0 0.0
        %3323 = vmatpush1.msra.mxu0 0.0
        %3324 = vmatprep.subr.mxu0 0.0
        %3325 = vmatpush1.msra.mxu0 0.0
        %3326 = vmatprep.subr.mxu0 0.0
        %3327 = vmatpush1.msra.mxu0 0.0
        %3328 = vmatprep.subr.mxu0 0.0
        %3329 = vmatpush1.msra.mxu0 0.0
        %3330 = vmatprep.subr.mxu0 0.0
        %3331 = vmatpush1.msra.mxu0 0.0
        %3332 = vmatprep.subr.mxu0 0.0
        %3333 = vmatpush1.msra.mxu0 0.0
        %3334 = vmatprep.subr.mxu0 0.0
        %3335 = vmatpush1.msra.mxu0 0.0
        %3336 = vmatprep.mubr.f32.mxu0 0.0
        %3337 = vmatmul.mubr.f32.gmra.mrb[0].mxu0 %v752
        %v3338 = vpop.f32.mrb[0].mxu0
        %v3339 = vadd.f32 0.0, %v3338
        %v3340 = vpop.f32.mrb[0].mxu0
        %3341 = vdwg.mxu0
        %3342 = vmatprep.subr.mxu0 0.0
        %3343 = vmatpush1.msra.mxu0 %v3198
        %3344 = vmatprep.subr.mxu0 0.0
        %3345 = vmatpush1.msra.mxu0 %v3199
        %3346 = vmatprep.subr.mxu0 0.0
        %3347 = vmatpush1.msra.mxu0 %v3200
        %3348 = vmatprep.subr.mxu0 0.0
        %3349 = vmatpush1.msra.mxu0 %v3201
        %3350 = vmatprep.subr.mxu0 0.0
        %3351 = vmatpush1.msra.mxu0 0.0
        %3352 = vmatprep.subr.mxu0 0.0
        %3353 = vmatpush1.msra.mxu0 0.0
        %3354 = vmatprep.subr.mxu0 0.0
        %3355 = vmatpush1.msra.mxu0 0.0
        %3356 = vmatprep.subr.mxu0 0.0
        %3357 = vmatpush1.msra.mxu0 0.0
        %3358 = vmatprep.subr.mxu0 0.0
        %3359 = vmatpush1.msra.mxu0 0.0
        %3360 = vmatprep.subr.mxu0 0.0
        %3361 = vmatpush1.msra.mxu0 0.0
        %3362 = vmatprep.subr.mxu0 0.0
        %3363 = vmatpush1.msra.mxu0 0.0
        %3364 = vmatprep.subr.mxu0 0.0
        %3365 = vmatpush1.msra.mxu0 0.0
        %3366 = vmatprep.subr.mxu0 0.0
        %3367 = vmatpush1.msra.mxu0 0.0
        %3368 = vmatprep.subr.mxu0 0.0
        %3369 = vmatpush1.msra.mxu0 0.0
        %3370 = vmatprep.subr.mxu0 0.0
        %3371 = vmatpush1.msra.mxu0 0.0
        %3372 = vmatprep.subr.mxu0 0.0
        %3373 = vmatpush1.msra.mxu0 0.0
        %3374 = vmatprep.subr.mxu0 0.0
        %3375 = vmatpush1.msra.mxu0 0.0
        %3376 = vmatprep.subr.mxu0 0.0
        %3377 = vmatpush1.msra.mxu0 0.0
        %3378 = vmatprep.subr.mxu0 0.0
        %3379 = vmatpush1.msra.mxu0 0.0
        %3380 = vmatprep.subr.mxu0 0.0
        %3381 = vmatpush1.msra.mxu0 0.0
        %3382 = vmatprep.subr.mxu0 0.0
        %3383 = vmatpush1.msra.mxu0 0.0
        %3384 = vmatprep.subr.mxu0 0.0
        %3385 = vmatpush1.msra.mxu0 0.0
        %3386 = vmatprep.subr.mxu0 0.0
        %3387 = vmatpush1.msra.mxu0 0.0
        %3388 = vmatprep.subr.mxu0 0.0
        %3389 = vmatpush1.msra.mxu0 0.0
        %3390 = vmatprep.subr.mxu0 0.0
        %3391 = vmatpush1.msra.mxu0 0.0
        %3392 = vmatprep.subr.mxu0 0.0
        %3393 = vmatpush1.msra.mxu0 0.0
        %3394 = vmatprep.subr.mxu0 0.0
        %3395 = vmatpush1.msra.mxu0 0.0
        %3396 = vmatprep.subr.mxu0 0.0
        %3397 = vmatpush1.msra.mxu0 0.0
        %3398 = vmatprep.subr.mxu0 0.0
        %3399 = vmatpush1.msra.mxu0 0.0
        %3400 = vmatprep.subr.mxu0 0.0
        %3401 = vmatpush1.msra.mxu0 0.0
        %3402 = vmatprep.subr.mxu0 0.0
        %3403 = vmatpush1.msra.mxu0 0.0
        %3404 = vmatprep.subr.mxu0 0.0
        %3405 = vmatpush1.msra.mxu0 0.0
        %3406 = vmatprep.mubr.f32.mxu0 0.0
        %3407 = vmatmul.mubr.f32.gmra.mrb[0].mxu0 %v825
        %v3408 = vpop.f32.mrb[0].mxu0
        %v3409 = vadd.f32 0.0, %v3408
        %v3410 = vpop.f32.mrb[0].mxu0
        %3411 = vdwg.mxu0
        %v3413 = vsel %vm897, %v3269, 0
        %v3416 = vsel %vm897, %v3339, 0
        %3418 = vmatprep.subr.mxu0 0.0
        %3419 = vmatpush1.xpose.msra.mxu0 %v3416
        %3420 = vmatprep.subr.mxu0 0.0
        %3421 = vmatpush1.xpose.msra.mxu0 0.0
        %3422 = vmatprep.subr.mxu0 0.0
        %3423 = vmatpush1.xpose.msra.mxu0 0.0
        %3424 = vmatprep.subr.mxu0 0.0
        %3425 = vmatpush1.xpose.msra.mxu0 0.0
        %3426 = vmatprep.subr.mxu0 0.0
        %3427 = vmatpush1.xpose.msra.mxu0 0.0
        %3428 = vmatprep.subr.mxu0 0.0
        %3429 = vmatpush1.xpose.msra.mxu0 0.0
        %3430 = vmatprep.subr.mxu0 0.0
        %3431 = vmatpush1.xpose.msra.mxu0 0.0
        %3432 = vmatprep.subr.mxu0 0.0
        %3433 = vmatpush1.xpose.msra.mxu0 0.0
        %3434 = vmatprep.subr.mxu0 0.0
        %3435 = vmatpush1.xpose.msra.mxu0 0.0
        %3436 = vmatprep.subr.mxu0 0.0
        %3437 = vmatpush1.xpose.msra.mxu0 0.0
        %3438 = vmatprep.subr.mxu0 0.0
        %3439 = vmatpush1.xpose.msra.mxu0 0.0
        %3440 = vmatprep.subr.mxu0 0.0
        %3441 = vmatpush1.xpose.msra.mxu0 0.0
        %3442 = vmatprep.subr.mxu0 0.0
        %3443 = vmatpush1.xpose.msra.mxu0 0.0
        %3444 = vmatprep.subr.mxu0 0.0
        %3445 = vmatpush1.xpose.msra.mxu0 0.0
        %3446 = vmatprep.subr.mxu0 0.0
        %3447 = vmatpush1.xpose.msra.mxu0 0.0
        %3448 = vmatprep.subr.mxu0 0.0
        %3449 = vmatpush1.xpose.msra.mxu0 0.0
        %3450 = vmatprep.subr.mxu0 0.0
        %3451 = vmatpush1.xpose.msra.mxu0 0.0
        %3452 = vmatprep.subr.mxu0 0.0
        %3453 = vmatpush1.xpose.msra.mxu0 0.0
        %3454 = vmatprep.subr.mxu0 0.0
        %3455 = vmatpush1.xpose.msra.mxu0 0.0
        %3456 = vmatprep.subr.mxu0 0.0
        %3457 = vmatpush1.xpose.msra.mxu0 0.0
        %3458 = vmatprep.subr.mxu0 0.0
        %3459 = vmatpush1.xpose.msra.mxu0 0.0
        %3460 = vmatprep.subr.mxu0 0.0
        %3461 = vmatpush1.xpose.msra.mxu0 0.0
        %3462 = vmatprep.subr.mxu0 0.0
        %3463 = vmatpush1.xpose.msra.mxu0 0.0
        %3464 = vmatprep.subr.mxu0 0.0
        %3465 = vmatpush1.xpose.msra.mxu0 0.0
        %3466 = vmatprep.subr.mxu0 0.0
        %3467 = vmatpush1.xpose.msra.mxu0 0.0
        %3468 = vmatprep.subr.mxu0 0.0
        %3469 = vmatpush1.xpose.msra.mxu0 0.0
        %3470 = vmatprep.subr.mxu0 0.0
        %3471 = vmatpush1.xpose.msra.mxu0 0.0
        %3472 = vmatprep.subr.mxu0 0.0
        %3473 = vmatpush1.xpose.msra.mxu0 0.0
        %3474 = vmatprep.subr.mxu0 0.0
        %3475 = vmatpush1.xpose.msra.mxu0 0.0
        %3476 = vmatprep.subr.mxu0 0.0
        %3477 = vmatpush1.xpose.msra.mxu0 0.0
        %3478 = vmatprep.subr.mxu0 0.0
        %3479 = vmatpush1.xpose.msra.mxu0 0.0
        %3480 = vmatprep.subr.mxu0 0.0
        %3481 = vmatpush1.xpose.msra.mxu0 0.0
        %3482 = vmatprep.mubr.f32.mxu0 0.0
        %3483 = vmatmul.mubr.f32.gmra.mrb[0].mxu0 %v3413
        %v3484 = vpop.f32.mrb[0].mxu0
        %v3485 = vadd.f32 0.0, %v3484
        %v3486 = vpop.f32.mrb[0].mxu0
        %3487 = vdwg.mxu0
        %v3488 = vmul.f32 %v3485, 0.35355338
        %v3491 = vunpack.c.l.s4 1966171168
        %v3492 = vunpack.c.0.s8 %v3491
        %v3493 = vlaneseq
        %v3494 = vshrl.u32 %v3493, 7
        %v3495 = vsub.s32 %v3492, %v3494
        %v3496 = vrot.slane %v3488, %v3495
        %v3497 = vcombine.high %v3496, %v3496
        %v3499 = vunpack.c.l.s4 1966171168
        %v3500 = vunpack.c.0.s8 %v3499
        %v3501 = vlaneseq
        %v3502 = vshrl.u32 %v3501, 7
        %v3503 = vsub.s32 %v3500, %v3502
        %v3504 = vrot.slane %v3496, %v3503
        %v3506 = vunpack.c.l.s4 1966171168
        %v3507 = vunpack.c.0.s8 %v3506
        %v3508 = vlaneseq
        %v3509 = vshrl.u32 %v3508, 7
        %v3510 = vsub.s32 %v3507, %v3509
        %v3511 = vrot.slane %v3497, %v3510
        %v3512 = vcombine.high %v3504, %v3504
        %v3513 = vlaneseq
        %v3514 = vshrl.u32 %v3513, 7
        %v3515 = vsub.s32 0, %v3514
        %v3516 = vrot.slane %v3504, %v3515
        %v3517 = vlaneseq
        %v3518 = vshrl.u32 %v3517, 7
        %v3519 = vsub.s32 0, %v3518
        %v3520 = vrot.slane %v3511, %v3519
        %v3521 = vlaneseq
        %v3522 = vshrl.u32 %v3521, 7
        %v3523 = vsub.s32 0, %v3522
        %v3524 = vrot.slane %v3512, %v3523
        %v3526 = vunpack.c.l.s4 1966171168
        %v3527 = vunpack.c.0.s8 %v3526
        %v3528 = vlaneseq
        %v3529 = vshrl.u32 %v3528, 7
        %v3530 = vsub.s32 %v3527, %v3529
        %v3531 = vrot.slane %v3516, %v3530
        %v3532 = vcombine.high %v3531, %v3531
        %v3534 = vunpack.c.l.s4 1966171168
        %v3535 = vunpack.c.0.s8 %v3534
        %v3536 = vlaneseq
        %v3537 = vshrl.u32 %v3536, 7
        %v3538 = vsub.s32 %v3535, %v3537
        %v3539 = vrot.slane %v3531, %v3538
        %v3541 = vunpack.c.l.s4 1966171168
        %v3542 = vunpack.c.0.s8 %v3541
        %v3543 = vlaneseq
        %v3544 = vshrl.u32 %v3543, 7
        %v3545 = vsub.s32 %v3542, %v3544
        %v3546 = vrot.slane %v3532, %v3545
        %v3547 = vcombine.high %v3539, %v3539
        %v3549 = vunpack.c.l.s4 1966171168
        %v3550 = vunpack.c.0.s8 %v3549
        %v3551 = vlaneseq
        %v3552 = vshrl.u32 %v3551, 7
        %v3553 = vsub.s32 %v3550, %v3552
        %v3554 = vrot.slane %v3520, %v3553
        %v3555 = vcombine.high %v3554, %v3554
        %v3557 = vunpack.c.l.s4 1966171168
        %v3558 = vunpack.c.0.s8 %v3557
        %v3559 = vlaneseq
        %v3560 = vshrl.u32 %v3559, 7
        %v3561 = vsub.s32 %v3558, %v3560
        %v3562 = vrot.slane %v3554, %v3561
        %v3564 = vunpack.c.l.s4 1966171168
        %v3565 = vunpack.c.0.s8 %v3564
        %v3566 = vlaneseq
        %v3567 = vshrl.u32 %v3566, 7
        %v3568 = vsub.s32 %v3565, %v3567
        %v3569 = vrot.slane %v3555, %v3568
        %v3570 = vcombine.high %v3562, %v3562
        %v3572 = vunpack.c.l.s4 1966171168
        %v3573 = vunpack.c.0.s8 %v3572
        %v3574 = vlaneseq
        %v3575 = vshrl.u32 %v3574, 7
        %v3576 = vsub.s32 %v3573, %v3575
        %v3577 = vrot.slane %v3524, %v3576
        %v3578 = vcombine.high %v3577, %v3577
        %v3580 = vunpack.c.l.s4 1966171168
        %v3581 = vunpack.c.0.s8 %v3580
        %v3582 = vlaneseq
        %v3583 = vshrl.u32 %v3582, 7
        %v3584 = vsub.s32 %v3581, %v3583
        %v3585 = vrot.slane %v3577, %v3584
        %v3587 = vunpack.c.l.s4 1966171168
        %v3588 = vunpack.c.0.s8 %v3587
        %v3589 = vlaneseq
        %v3590 = vshrl.u32 %v3589, 7
        %v3591 = vsub.s32 %v3588, %v3590
        %v3592 = vrot.slane %v3578, %v3591
        %v3593 = vcombine.high %v3585, %v3585
        %vm3603 = vcmp.gt.f32.partialorder %v563, 0.5
        %vm3604 = vcmp.gt.f32.partialorder %v570, 0.5
        %vm3605 = vcmp.gt.f32.partialorder %v571, 0.5
        %v3606 = vsel %vm3603, -1e+30, %v3539
        %v3607 = vsel %vm3604, -1e+30, %v3546
        %v3608 = vsel %vm3605, -1e+30, %v3547
        %v3609 = vsel %vm3603, -1e+30, %v3562
        %v3610 = vsel %vm3604, -1e+30, %v3569
        %v3611 = vsel %vm3605, -1e+30, %v3570
        %v3612 = vsel %vm3603, -1e+30, %v3585
        %v3613 = vsel %vm3604, -1e+30, %v3592
        %v3614 = vsel %vm3605, -1e+30, %v3593
        %v3624 = vcombine.low %v3606, %v3607
        %v3625 = vcombine.low %v3608, %v3609
        %v3626 = vcombine.low %v3610, %v3611
        %v3627 = vcombine.low %v3612, %v3613
        %v3629 = vunpack.c.l.s4 1966171168
        %v3630 = vunpack.c.0.s8 %v3629
        %v3631 = vlaneseq
        %v3632 = vshrl.u32 %v3631, 7
        %v3633 = vsub.s32 %v3630, %v3632
        %v3634 = vrot.slane %v3624, %v3633
        %v3636 = vunpack.c.l.s4 1966171168
        %v3637 = vunpack.c.0.s8 %v3636
        %v3638 = vlaneseq
        %v3639 = vshrl.u32 %v3638, 7
        %v3640 = vsub.s32 %v3637, %v3639
        %v3641 = vrot.slane %v3625, %v3640
        %v3643 = vunpack.c.l.s4 1966171168
        %v3644 = vunpack.c.0.s8 %v3643
        %v3645 = vlaneseq
        %v3646 = vshrl.u32 %v3645, 7
        %v3647 = vsub.s32 %v3644, %v3646
        %v3648 = vrot.slane %v3626, %v3647
        %v3650 = vunpack.c.l.s4 1966171168
        %v3651 = vunpack.c.0.s8 %v3650
        %v3652 = vlaneseq
        %v3653 = vshrl.u32 %v3652, 7
        %v3654 = vsub.s32 %v3651, %v3653
        %v3655 = vrot.slane %v3627, %v3654
        %v3656 = vcombine.low %v3634, %v3641
        %v3657 = vcombine.low %v3648, %v3655
        %v3659 = vunpack.c.l.s4 1966171168
        %v3660 = vunpack.c.0.s8 %v3659
        %v3661 = vlaneseq
        %v3662 = vshrl.u32 %v3661, 7
        %v3663 = vsub.s32 %v3660, %v3662
        %v3664 = vrot.slane %v3656, %v3663
        %v3666 = vunpack.c.l.s4 1966171168
        %v3667 = vunpack.c.0.s8 %v3666
        %v3668 = vlaneseq
        %v3669 = vshrl.u32 %v3668, 7
        %v3670 = vsub.s32 %v3667, %v3669
        %v3671 = vrot.slane %v3657, %v3670
        %v3672 = vcombine.low %v3664, %v3671
        %v3674 = vunpack.c.l.s4 1966171168
        %v3675 = vunpack.c.0.s8 %v3674
        %v3676 = vlaneseq
        %v3677 = vshrl.u32 %v3676, 7
        %v3678 = vsub.s32 %v3675, %v3677
        %v3679 = vrot.slane %v3614, %v3678
        %v3681 = vunpack.c.l.s4 1966171168
        %v3682 = vunpack.c.0.s8 %v3681
        %v3683 = vlaneseq
        %v3684 = vshrl.u32 %v3683, 7
        %v3685 = vsub.s32 %v3682, %v3684
        %v3686 = vrot.slane %v3679, %v3685
        %v3689 = vsel %vm1094, %v3672, -inf
        %3690 = vmax.xlane.f32.xlu0 %v3689
        %v3691 = vpop.xlane.xlu0 %3690
        %v3692 = vsel %vm1098, %v3686, -inf
        %3693 = vmax.xlane.f32.xlu0 %v3692
        %v3694 = vpop.xlane.xlu0 %3693
        %v3697 = vlaneseq
        %v3698 = vshrl.u32 %v3697, 7
        %v3699 = vsub.s32 0, %v3698
        %v3700 = vrot.slane %v3691, %v3699
        %v3701 = vlaneseq
        %v3702 = vshrl.u32 %v3701, 7
        %v3703 = vsub.s32 1, %v3702
        %v3704 = vrot.slane %v3691, %v3703
        %v3705 = vlaneseq
        %v3706 = vshrl.u32 %v3705, 7
        %v3707 = vsub.s32 2, %v3706
        %v3708 = vrot.slane %v3691, %v3707
        %v3709 = vlaneseq
        %v3710 = vshrl.u32 %v3709, 7
        %v3711 = vsub.s32 3, %v3710
        %v3712 = vrot.slane %v3691, %v3711
        %v3713 = vlaneseq
        %v3714 = vshrl.u32 %v3713, 7
        %v3715 = vsub.s32 4, %v3714
        %v3716 = vrot.slane %v3691, %v3715
        %v3717 = vlaneseq
        %v3718 = vshrl.u32 %v3717, 7
        %v3719 = vsub.s32 5, %v3718
        %v3720 = vrot.slane %v3691, %v3719
        %v3721 = vlaneseq
        %v3722 = vshrl.u32 %v3721, 7
        %v3723 = vsub.s32 6, %v3722
        %v3724 = vrot.slane %v3691, %v3723
        %v3725 = vlaneseq
        %v3726 = vshrl.u32 %v3725, 7
        %v3727 = vsub.s32 7, %v3726
        %v3728 = vrot.slane %v3691, %v3727
        %v3729 = vlaneseq
        %v3730 = vshrl.u32 %v3729, 7
        %v3731 = vsub.s32 0, %v3730
        %v3732 = vrot.slane %v3694, %v3731
        %v3742 = vsub.f32 %v3606, %v3700
        %v3743 = vsub.f32 %v3607, %v3704
        %v3744 = vsub.f32 %v3608, %v3708
        %v3745 = vsub.f32 %v3609, %v3712
        %v3746 = vsub.f32 %v3610, %v3716
        %v3747 = vsub.f32 %v3611, %v3720
        %v3748 = vsub.f32 %v3612, %v3724
        %v3749 = vsub.f32 %v3613, %v3728
        %v3750 = vsub.f32 %v3614, %v3732
        %v3751 = vmul.f32 %v3742, 1.442695
        %v3752 = vpow.pop %v3751
        %v3753 = vmul.f32 %v3743, 1.442695
        %v3754 = vpow.pop %v3753
        %v3755 = vmul.f32 %v3744, 1.442695
        %v3756 = vpow.pop %v3755
        %v3757 = vmul.f32 %v3745, 1.442695
        %v3758 = vpow.pop %v3757
        %v3759 = vmul.f32 %v3746, 1.442695
        %v3760 = vpow.pop %v3759
        %v3761 = vmul.f32 %v3747, 1.442695
        %v3762 = vpow.pop %v3761
        %v3763 = vmul.f32 %v3748, 1.442695
        %v3764 = vpow.pop %v3763
        %v3765 = vmul.f32 %v3749, 1.442695
        %v3766 = vpow.pop %v3765
        %v3767 = vmul.f32 %v3750, 1.442695
        %v3768 = vpow.pop %v3767
        %v3778 = vcombine.low %v3752, %v3754
        %v3779 = vcombine.low %v3756, %v3758
        %v3780 = vcombine.low %v3760, %v3762
        %v3781 = vcombine.low %v3764, %v3766
        %v3783 = vunpack.c.l.s4 1966171168
        %v3784 = vunpack.c.0.s8 %v3783
        %v3785 = vlaneseq
        %v3786 = vshrl.u32 %v3785, 7
        %v3787 = vsub.s32 %v3784, %v3786
        %v3788 = vrot.slane %v3778, %v3787
        %v3790 = vunpack.c.l.s4 1966171168
        %v3791 = vunpack.c.0.s8 %v3790
        %v3792 = vlaneseq
        %v3793 = vshrl.u32 %v3792, 7
        %v3794 = vsub.s32 %v3791, %v3793
        %v3795 = vrot.slane %v3779, %v3794
        %v3797 = vunpack.c.l.s4 1966171168
        %v3798 = vunpack.c.0.s8 %v3797
        %v3799 = vlaneseq
        %v3800 = vshrl.u32 %v3799, 7
        %v3801 = vsub.s32 %v3798, %v3800
        %v3802 = vrot.slane %v3780, %v3801
        %v3804 = vunpack.c.l.s4 1966171168
        %v3805 = vunpack.c.0.s8 %v3804
        %v3806 = vlaneseq
        %v3807 = vshrl.u32 %v3806, 7
        %v3808 = vsub.s32 %v3805, %v3807
        %v3809 = vrot.slane %v3781, %v3808
        %v3810 = vcombine.low %v3788, %v3795
        %v3811 = vcombine.low %v3802, %v3809
        %v3813 = vunpack.c.l.s4 1966171168
        %v3814 = vunpack.c.0.s8 %v3813
        %v3815 = vlaneseq
        %v3816 = vshrl.u32 %v3815, 7
        %v3817 = vsub.s32 %v3814, %v3816
        %v3818 = vrot.slane %v3810, %v3817
        %v3820 = vunpack.c.l.s4 1966171168
        %v3821 = vunpack.c.0.s8 %v3820
        %v3822 = vlaneseq
        %v3823 = vshrl.u32 %v3822, 7
        %v3824 = vsub.s32 %v3821, %v3823
        %v3825 = vrot.slane %v3811, %v3824
        %v3826 = vcombine.low %v3818, %v3825
        %v3828 = vunpack.c.l.s4 1966171168
        %v3829 = vunpack.c.0.s8 %v3828
        %v3830 = vlaneseq
        %v3831 = vshrl.u32 %v3830, 7
        %v3832 = vsub.s32 %v3829, %v3831
        %v3833 = vrot.slane %v3768, %v3832
        %v3835 = vunpack.c.l.s4 1966171168
        %v3836 = vunpack.c.0.s8 %v3835
        %v3837 = vlaneseq
        %v3838 = vshrl.u32 %v3837, 7
        %v3839 = vsub.s32 %v3836, %v3838
        %v3840 = vrot.slane %v3833, %v3839
        %v3843 = vsel %vm1094, %v3826, 0.0
        %3844 = vadd.xlane.f32.xlu0 %v3843
        %v3845 = vpop.xlane.xlu0 %3844
        %v3846 = vsel %vm1098, %v3840, 0.0
        %3847 = vadd.xlane.f32.xlu0 %v3846
        %v3848 = vpop.xlane.xlu0 %3847
        %v3849 = vrcp.pop %v3845
        %v3850 = vrcp.pop %v3848
        %v3853 = vlaneseq
        %v3854 = vshrl.u32 %v3853, 7
        %v3855 = vsub.s32 0, %v3854
        %v3856 = vrot.slane %v3849, %v3855
        %v3857 = vlaneseq
        %v3858 = vshrl.u32 %v3857, 7
        %v3859 = vsub.s32 1, %v3858
        %v3860 = vrot.slane %v3849, %v3859
        %v3861 = vlaneseq
        %v3862 = vshrl.u32 %v3861, 7
        %v3863 = vsub.s32 2, %v3862
        %v3864 = vrot.slane %v3849, %v3863
        %v3865 = vlaneseq
        %v3866 = vshrl.u32 %v3865, 7
        %v3867 = vsub.s32 3, %v3866
        %v3868 = vrot.slane %v3849, %v3867
        %v3869 = vlaneseq
        %v3870 = vshrl.u32 %v3869, 7
        %v3871 = vsub.s32 4, %v3870
        %v3872 = vrot.slane %v3849, %v3871
        %v3873 = vlaneseq
        %v3874 = vshrl.u32 %v3873, 7
        %v3875 = vsub.s32 5, %v3874
        %v3876 = vrot.slane %v3849, %v3875
        %v3877 = vlaneseq
        %v3878 = vshrl.u32 %v3877, 7
        %v3879 = vsub.s32 6, %v3878
        %v3880 = vrot.slane %v3849, %v3879
        %v3881 = vlaneseq
        %v3882 = vshrl.u32 %v3881, 7
        %v3883 = vsub.s32 7, %v3882
        %v3884 = vrot.slane %v3849, %v3883
        %v3885 = vlaneseq
        %v3886 = vshrl.u32 %v3885, 7
        %v3887 = vsub.s32 0, %v3886
        %v3888 = vrot.slane %v3850, %v3887
        %v3898 = vmul.f32 %v3752, %v3856
        %v3899 = vmul.f32 %v3754, %v3860
        %v3900 = vmul.f32 %v3756, %v3864
        %v3901 = vmul.f32 %v3758, %v3868
        %v3902 = vmul.f32 %v3760, %v3872
        %v3903 = vmul.f32 %v3762, %v3876
        %v3904 = vmul.f32 %v3764, %v3880
        %v3905 = vmul.f32 %v3766, %v3884
        %v3906 = vmul.f32 %v3768, %v3888
        %v3916 = vcombine.low %v3898, %v3899
        %v3917 = vcombine.low %v3900, %v3901
        %v3918 = vcombine.low %v3902, %v3903
        %v3919 = vcombine.low %v3904, %v3905
        %v3921 = vunpack.c.l.s4 1966171168
        %v3922 = vunpack.c.0.s8 %v3921
        %v3923 = vlaneseq
        %v3924 = vshrl.u32 %v3923, 7
        %v3925 = vsub.s32 %v3922, %v3924
        %v3926 = vrot.slane %v3916, %v3925
        %v3928 = vunpack.c.l.s4 1966171168
        %v3929 = vunpack.c.0.s8 %v3928
        %v3930 = vlaneseq
        %v3931 = vshrl.u32 %v3930, 7
        %v3932 = vsub.s32 %v3929, %v3931
        %v3933 = vrot.slane %v3917, %v3932
        %v3935 = vunpack.c.l.s4 1966171168
        %v3936 = vunpack.c.0.s8 %v3935
        %v3937 = vlaneseq
        %v3938 = vshrl.u32 %v3937, 7
        %v3939 = vsub.s32 %v3936, %v3938
        %v3940 = vrot.slane %v3918, %v3939
        %v3942 = vunpack.c.l.s4 1966171168
        %v3943 = vunpack.c.0.s8 %v3942
        %v3944 = vlaneseq
        %v3945 = vshrl.u32 %v3944, 7
        %v3946 = vsub.s32 %v3943, %v3945
        %v3947 = vrot.slane %v3919, %v3946
        %v3948 = vcombine.low %v3926, %v3933
        %v3949 = vcombine.low %v3940, %v3947
        %v3951 = vunpack.c.l.s4 1966171168
        %v3952 = vunpack.c.0.s8 %v3951
        %v3953 = vlaneseq
        %v3954 = vshrl.u32 %v3953, 7
        %v3955 = vsub.s32 %v3952, %v3954
        %v3956 = vrot.slane %v3948, %v3955
        %v3958 = vunpack.c.l.s4 1966171168
        %v3959 = vunpack.c.0.s8 %v3958
        %v3960 = vlaneseq
        %v3961 = vshrl.u32 %v3960, 7
        %v3962 = vsub.s32 %v3959, %v3961
        %v3963 = vrot.slane %v3949, %v3962
        %v3964 = vcombine.low %v3956, %v3963
        %v3966 = vunpack.c.l.s4 1966171168
        %v3967 = vunpack.c.0.s8 %v3966
        %v3968 = vlaneseq
        %v3969 = vshrl.u32 %v3968, 7
        %v3970 = vsub.s32 %v3967, %v3969
        %v3971 = vrot.slane %v3906, %v3970
        %v3973 = vunpack.c.l.s4 1966171168
        %v3974 = vunpack.c.0.s8 %v3973
        %v3975 = vlaneseq
        %v3976 = vshrl.u32 %v3975, 7
        %v3977 = vsub.s32 %v3974, %v3976
        %v3978 = vrot.slane %v3971, %v3977
        %v3979 = vsel %vm1094, %v3964, 0
        %v3981 = vsel %vm1094, %v3978, 0
        %v3984 = vsel %vm1390, %v3409, 0
        %3986 = vmatprep.subr.mxu0 0.0
        %3987 = vmatpush1.msra.mxu0 %v3984
        %3988 = vmatprep.subr.mxu0 0.0
        %3989 = vmatpush1.msra.mxu0 0.0
        %3990 = vmatprep.subr.mxu0 0.0
        %3991 = vmatpush1.msra.mxu0 0.0
        %3992 = vmatprep.subr.mxu0 0.0
        %3993 = vmatpush1.msra.mxu0 0.0
        %3994 = vmatprep.subr.mxu0 0.0
        %3995 = vmatpush1.msra.mxu0 0.0
        %3996 = vmatprep.subr.mxu0 0.0
        %3997 = vmatpush1.msra.mxu0 0.0
        %3998 = vmatprep.subr.mxu0 0.0
        %3999 = vmatpush1.msra.mxu0 0.0
        %4000 = vmatprep.subr.mxu0 0.0
        %4001 = vmatpush1.msra.mxu0 0.0
        %4002 = vmatprep.subr.mxu0 0.0
        %4003 = vmatpush1.msra.mxu0 0.0
        %4004 = vmatprep.subr.mxu0 0.0
        %4005 = vmatpush1.msra.mxu0 0.0
        %4006 = vmatprep.subr.mxu0 0.0
        %4007 = vmatpush1.msra.mxu0 0.0
        %4008 = vmatprep.subr.mxu0 0.0
        %4009 = vmatpush1.msra.mxu0 0.0
        %4010 = vmatprep.subr.mxu0 0.0
        %4011 = vmatpush1.msra.mxu0 0.0
        %4012 = vmatprep.subr.mxu0 0.0
        %4013 = vmatpush1.msra.mxu0 0.0
        %4014 = vmatprep.subr.mxu0 0.0
        %4015 = vmatpush1.msra.mxu0 0.0
        %4016 = vmatprep.subr.mxu0 0.0
        %4017 = vmatpush1.msra.mxu0 0.0
        %4018 = vmatprep.subr.mxu0 0.0
        %4019 = vmatpush1.msra.mxu0 0.0
        %4020 = vmatprep.subr.mxu0 0.0
        %4021 = vmatpush1.msra.mxu0 0.0
        %4022 = vmatprep.subr.mxu0 0.0
        %4023 = vmatpush1.msra.mxu0 0.0
        %4024 = vmatprep.subr.mxu0 0.0
        %4025 = vmatpush1.msra.mxu0 0.0
        %4026 = vmatprep.subr.mxu0 0.0
        %4027 = vmatpush1.msra.mxu0 0.0
        %4028 = vmatprep.subr.mxu0 0.0
        %4029 = vmatpush1.msra.mxu0 0.0
        %4030 = vmatprep.subr.mxu0 0.0
        %4031 = vmatpush1.msra.mxu0 0.0
        %4032 = vmatprep.subr.mxu0 0.0
        %4033 = vmatpush1.msra.mxu0 0.0
        %4034 = vmatprep.subr.mxu0 0.0
        %4035 = vmatpush1.msra.mxu0 0.0
        %4036 = vmatprep.subr.mxu0 0.0
        %4037 = vmatpush1.msra.mxu0 0.0
        %4038 = vmatprep.subr.mxu0 0.0
        %4039 = vmatpush1.msra.mxu0 0.0
        %4040 = vmatprep.subr.mxu0 0.0
        %4041 = vmatpush1.msra.mxu0 0.0
        %4042 = vmatprep.subr.mxu0 0.0
        %4043 = vmatpush1.msra.mxu0 0.0
        %4044 = vmatprep.subr.mxu0 0.0
        %4045 = vmatpush1.msra.mxu0 0.0
        %4046 = vmatprep.subr.mxu0 0.0
        %4047 = vmatpush1.msra.mxu0 0.0
        %4048 = vmatprep.subr.mxu0 0.0
        %4049 = vmatpush1.msra.mxu0 0.0
        %4050 = vmatprep.mubr.f32.mxu0 0.0
        %4051 = vmatmul.mubr.f32.gmra.mrb[0].mxu0 %v3979
        %v4052 = vpop.f32.mrb[0].mxu0
        %v4053 = vadd.f32 0.0, %v4052
        %v4054 = vpop.f32.mrb[0].mxu0
        %4055 = vmatprep.mubr.f32.mxu0 0.0
        %4056 = vmatmul.mubr.f32.gmra.mrb[0].mxu0 %v3981
        %v4057 = vpop.f32.mrb[0].mxu0
        %v4058 = vadd.f32 0.0, %v4057
        %v4059 = vpop.f32.mrb[0].mxu0
        %4060 = vdwg.mxu0
        %4061 = vrot.lane.b32.xlu0 %v3269, 120
        %v4062 = vpop.permute.xlu0 %4061
        %4063 = vrot.lane.b32.xlu0 %v3339, 120
        %v4064 = vpop.permute.xlu0 %4063
        %v4065 = vsel %vm897, %v4062, 0
        %v4067 = vsel %vm897, %v4064, 0
        %4069 = vmatprep.subr.mxu0 0.0
        %4070 = vmatpush1.xpose.msra.mxu0 %v4067
        %4071 = vmatprep.subr.mxu0 0.0
        %4072 = vmatpush1.xpose.msra.mxu0 0.0
        %4073 = vmatprep.subr.mxu0 0.0
        %4074 = vmatpush1.xpose.msra.mxu0 0.0
        %4075 = vmatprep.subr.mxu0 0.0
        %4076 = vmatpush1.xpose.msra.mxu0 0.0
        %4077 = vmatprep.subr.mxu0 0.0
        %4078 = vmatpush1.xpose.msra.mxu0 0.0
        %4079 = vmatprep.subr.mxu0 0.0
        %4080 = vmatpush1.xpose.msra.mxu0 0.0
        %4081 = vmatprep.subr.mxu0 0.0
        %4082 = vmatpush1.xpose.msra.mxu0 0.0
        %4083 = vmatprep.subr.mxu0 0.0
        %4084 = vmatpush1.xpose.msra.mxu0 0.0
        %4085 = vmatprep.subr.mxu0 0.0
        %4086 = vmatpush1.xpose.msra.mxu0 0.0
        %4087 = vmatprep.subr.mxu0 0.0
        %4088 = vmatpush1.xpose.msra.mxu0 0.0
        %4089 = vmatprep.subr.mxu0 0.0
        %4090 = vmatpush1.xpose.msra.mxu0 0.0
        %4091 = vmatprep.subr.mxu0 0.0
        %4092 = vmatpush1.xpose.msra.mxu0 0.0
        %4093 = vmatprep.subr.mxu0 0.0
        %4094 = vmatpush1.xpose.msra.mxu0 0.0
        %4095 = vmatprep.subr.mxu0 0.0
        %4096 = vmatpush1.xpose.msra.mxu0 0.0
        %4097 = vmatprep.subr.mxu0 0.0
        %4098 = vmatpush1.xpose.msra.mxu0 0.0
        %4099 = vmatprep.subr.mxu0 0.0
        %4100 = vmatpush1.xpose.msra.mxu0 0.0
        %4101 = vmatprep.subr.mxu0 0.0
        %4102 = vmatpush1.xpose.msra.mxu0 0.0
        %4103 = vmatprep.subr.mxu0 0.0
        %4104 = vmatpush1.xpose.msra.mxu0 0.0
        %4105 = vmatprep.subr.mxu0 0.0
        %4106 = vmatpush1.xpose.msra.mxu0 0.0
        %4107 = vmatprep.subr.mxu0 0.0
        %4108 = vmatpush1.xpose.msra.mxu0 0.0
        %4109 = vmatprep.subr.mxu0 0.0
        %4110 = vmatpush1.xpose.msra.mxu0 0.0
        %4111 = vmatprep.subr.mxu0 0.0
        %4112 = vmatpush1.xpose.msra.mxu0 0.0
        %4113 = vmatprep.subr.mxu0 0.0
        %4114 = vmatpush1.xpose.msra.mxu0 0.0
        %4115 = vmatprep.subr.mxu0 0.0
        %4116 = vmatpush1.xpose.msra.mxu0 0.0
        %4117 = vmatprep.subr.mxu0 0.0
        %4118 = vmatpush1.xpose.msra.mxu0 0.0
        %4119 = vmatprep.subr.mxu0 0.0
        %4120 = vmatpush1.xpose.msra.mxu0 0.0
        %4121 = vmatprep.subr.mxu0 0.0
        %4122 = vmatpush1.xpose.msra.mxu0 0.0
        %4123 = vmatprep.subr.mxu0 0.0
        %4124 = vmatpush1.xpose.msra.mxu0 0.0
        %4125 = vmatprep.subr.mxu0 0.0
        %4126 = vmatpush1.xpose.msra.mxu0 0.0
        %4127 = vmatprep.subr.mxu0 0.0
        %4128 = vmatpush1.xpose.msra.mxu0 0.0
        %4129 = vmatprep.subr.mxu0 0.0
        %4130 = vmatpush1.xpose.msra.mxu0 0.0
        %4131 = vmatprep.subr.mxu0 0.0
        %4132 = vmatpush1.xpose.msra.mxu0 0.0
        %4133 = vmatprep.mubr.f32.mxu0 0.0
        %4134 = vmatmul.mubr.f32.gmra.mrb[0].mxu0 %v4065
        %v4135 = vpop.f32.mrb[0].mxu0
        %v4136 = vadd.f32 0.0, %v4135
        %v4137 = vpop.f32.mrb[0].mxu0
        %4138 = vdwg.mxu0
        %v4139 = vmul.f32 %v4136, 0.35355338
        %v4142 = vunpack.c.l.s4 1966171168
        %v4143 = vunpack.c.0.s8 %v4142
        %v4144 = vlaneseq
        %v4145 = vshrl.u32 %v4144, 7
        %v4146 = vsub.s32 %v4143, %v4145
        %v4147 = vrot.slane %v4139, %v4146
        %v4148 = vcombine.high %v4147, %v4147
        %v4150 = vunpack.c.l.s4 1966171168
        %v4151 = vunpack.c.0.s8 %v4150
        %v4152 = vlaneseq
        %v4153 = vshrl.u32 %v4152, 7
        %v4154 = vsub.s32 %v4151, %v4153
        %v4155 = vrot.slane %v4147, %v4154
        %v4157 = vunpack.c.l.s4 1966171168
        %v4158 = vunpack.c.0.s8 %v4157
        %v4159 = vlaneseq
        %v4160 = vshrl.u32 %v4159, 7
        %v4161 = vsub.s32 %v4158, %v4160
        %v4162 = vrot.slane %v4148, %v4161
        %v4163 = vcombine.high %v4155, %v4155
        %v4164 = vlaneseq
        %v4165 = vshrl.u32 %v4164, 7
        %v4166 = vsub.s32 0, %v4165
        %v4167 = vrot.slane %v4155, %v4166
        %v4168 = vlaneseq
        %v4169 = vshrl.u32 %v4168, 7
        %v4170 = vsub.s32 0, %v4169
        %v4171 = vrot.slane %v4162, %v4170
        %v4172 = vlaneseq
        %v4173 = vshrl.u32 %v4172, 7
        %v4174 = vsub.s32 0, %v4173
        %v4175 = vrot.slane %v4163, %v4174
        %v4177 = vunpack.c.l.s4 1966171168
        %v4178 = vunpack.c.0.s8 %v4177
        %v4179 = vlaneseq
        %v4180 = vshrl.u32 %v4179, 7
        %v4181 = vsub.s32 %v4178, %v4180
        %v4182 = vrot.slane %v4167, %v4181
        %v4183 = vcombine.high %v4182, %v4182
        %v4185 = vunpack.c.l.s4 1966171168
        %v4186 = vunpack.c.0.s8 %v4185
        %v4187 = vlaneseq
        %v4188 = vshrl.u32 %v4187, 7
        %v4189 = vsub.s32 %v4186, %v4188
        %v4190 = vrot.slane %v4182, %v4189
        %v4192 = vunpack.c.l.s4 1966171168
        %v4193 = vunpack.c.0.s8 %v4192
        %v4194 = vlaneseq
        %v4195 = vshrl.u32 %v4194, 7
        %v4196 = vsub.s32 %v4193, %v4195
        %v4197 = vrot.slane %v4183, %v4196
        %v4198 = vcombine.high %v4190, %v4190
        %v4200 = vunpack.c.l.s4 1966171168
        %v4201 = vunpack.c.0.s8 %v4200
        %v4202 = vlaneseq
        %v4203 = vshrl.u32 %v4202, 7
        %v4204 = vsub.s32 %v4201, %v4203
        %v4205 = vrot.slane %v4171, %v4204
        %v4206 = vcombine.high %v4205, %v4205
        %v4208 = vunpack.c.l.s4 1966171168
        %v4209 = vunpack.c.0.s8 %v4208
        %v4210 = vlaneseq
        %v4211 = vshrl.u32 %v4210, 7
        %v4212 = vsub.s32 %v4209, %v4211
        %v4213 = vrot.slane %v4205, %v4212
        %v4215 = vunpack.c.l.s4 1966171168
        %v4216 = vunpack.c.0.s8 %v4215
        %v4217 = vlaneseq
        %v4218 = vshrl.u32 %v4217, 7
        %v4219 = vsub.s32 %v4216, %v4218
        %v4220 = vrot.slane %v4206, %v4219
        %v4221 = vcombine.high %v4213, %v4213
        %v4223 = vunpack.c.l.s4 1966171168
        %v4224 = vunpack.c.0.s8 %v4223
        %v4225 = vlaneseq
        %v4226 = vshrl.u32 %v4225, 7
        %v4227 = vsub.s32 %v4224, %v4226
        %v4228 = vrot.slane %v4175, %v4227
        %v4229 = vcombine.high %v4228, %v4228
        %v4231 = vunpack.c.l.s4 1966171168
        %v4232 = vunpack.c.0.s8 %v4231
        %v4233 = vlaneseq
        %v4234 = vshrl.u32 %v4233, 7
        %v4235 = vsub.s32 %v4232, %v4234
        %v4236 = vrot.slane %v4228, %v4235
        %v4238 = vunpack.c.l.s4 1966171168
        %v4239 = vunpack.c.0.s8 %v4238
        %v4240 = vlaneseq
        %v4241 = vshrl.u32 %v4240, 7
        %v4242 = vsub.s32 %v4239, %v4241
        %v4243 = vrot.slane %v4229, %v4242
        %v4244 = vcombine.high %v4236, %v4236
        %v4254 = vsel %vm3603, -1e+30, %v4190
        %v4255 = vsel %vm3604, -1e+30, %v4197
        %v4256 = vsel %vm3605, -1e+30, %v4198
        %v4257 = vsel %vm3603, -1e+30, %v4213
        %v4258 = vsel %vm3604, -1e+30, %v4220
        %v4259 = vsel %vm3605, -1e+30, %v4221
        %v4260 = vsel %vm3603, -1e+30, %v4236
        %v4261 = vsel %vm3604, -1e+30, %v4243
        %v4262 = vsel %vm3605, -1e+30, %v4244
        %v4272 = vcombine.low %v4254, %v4255
        %v4273 = vcombine.low %v4256, %v4257
        %v4274 = vcombine.low %v4258, %v4259
        %v4275 = vcombine.low %v4260, %v4261
        %v4277 = vunpack.c.l.s4 1966171168
        %v4278 = vunpack.c.0.s8 %v4277
        %v4279 = vlaneseq
        %v4280 = vshrl.u32 %v4279, 7
        %v4281 = vsub.s32 %v4278, %v4280
        %v4282 = vrot.slane %v4272, %v4281
        %v4284 = vunpack.c.l.s4 1966171168
        %v4285 = vunpack.c.0.s8 %v4284
        %v4286 = vlaneseq
        %v4287 = vshrl.u32 %v4286, 7
        %v4288 = vsub.s32 %v4285, %v4287
        %v4289 = vrot.slane %v4273, %v4288
        %v4291 = vunpack.c.l.s4 1966171168
        %v4292 = vunpack.c.0.s8 %v4291
        %v4293 = vlaneseq
        %v4294 = vshrl.u32 %v4293, 7
        %v4295 = vsub.s32 %v4292, %v4294
        %v4296 = vrot.slane %v4274, %v4295
        %v4298 = vunpack.c.l.s4 1966171168
        %v4299 = vunpack.c.0.s8 %v4298
        %v4300 = vlaneseq
        %v4301 = vshrl.u32 %v4300, 7
        %v4302 = vsub.s32 %v4299, %v4301
        %v4303 = vrot.slane %v4275, %v4302
        %v4304 = vcombine.low %v4282, %v4289
        %v4305 = vcombine.low %v4296, %v4303
        %v4307 = vunpack.c.l.s4 1966171168
        %v4308 = vunpack.c.0.s8 %v4307
        %v4309 = vlaneseq
        %v4310 = vshrl.u32 %v4309, 7
        %v4311 = vsub.s32 %v4308, %v4310
        %v4312 = vrot.slane %v4304, %v4311
        %v4314 = vunpack.c.l.s4 1966171168
        %v4315 = vunpack.c.0.s8 %v4314
        %v4316 = vlaneseq
        %v4317 = vshrl.u32 %v4316, 7
        %v4318 = vsub.s32 %v4315, %v4317
        %v4319 = vrot.slane %v4305, %v4318
        %v4320 = vcombine.low %v4312, %v4319
        %v4322 = vunpack.c.l.s4 1966171168
        %v4323 = vunpack.c.0.s8 %v4322
        %v4324 = vlaneseq
        %v4325 = vshrl.u32 %v4324, 7
        %v4326 = vsub.s32 %v4323, %v4325
        %v4327 = vrot.slane %v4262, %v4326
        %v4329 = vunpack.c.l.s4 1966171168
        %v4330 = vunpack.c.0.s8 %v4329
        %v4331 = vlaneseq
        %v4332 = vshrl.u32 %v4331, 7
        %v4333 = vsub.s32 %v4330, %v4332
        %v4334 = vrot.slane %v4327, %v4333
        %v4337 = vsel %vm1094, %v4320, -inf
        %4338 = vmax.xlane.f32.xlu0 %v4337
        %v4339 = vpop.xlane.xlu0 %4338
        %v4340 = vsel %vm1098, %v4334, -inf
        %4341 = vmax.xlane.f32.xlu0 %v4340
        %v4342 = vpop.xlane.xlu0 %4341
        %v4345 = vlaneseq
        %v4346 = vshrl.u32 %v4345, 7
        %v4347 = vsub.s32 0, %v4346
        %v4348 = vrot.slane %v4339, %v4347
        %v4349 = vlaneseq
        %v4350 = vshrl.u32 %v4349, 7
        %v4351 = vsub.s32 1, %v4350
        %v4352 = vrot.slane %v4339, %v4351
        %v4353 = vlaneseq
        %v4354 = vshrl.u32 %v4353, 7
        %v4355 = vsub.s32 2, %v4354
        %v4356 = vrot.slane %v4339, %v4355
        %v4357 = vlaneseq
        %v4358 = vshrl.u32 %v4357, 7
        %v4359 = vsub.s32 3, %v4358
        %v4360 = vrot.slane %v4339, %v4359
        %v4361 = vlaneseq
        %v4362 = vshrl.u32 %v4361, 7
        %v4363 = vsub.s32 4, %v4362
        %v4364 = vrot.slane %v4339, %v4363
        %v4365 = vlaneseq
        %v4366 = vshrl.u32 %v4365, 7
        %v4367 = vsub.s32 5, %v4366
        %v4368 = vrot.slane %v4339, %v4367
        %v4369 = vlaneseq
        %v4370 = vshrl.u32 %v4369, 7
        %v4371 = vsub.s32 6, %v4370
        %v4372 = vrot.slane %v4339, %v4371
        %v4373 = vlaneseq
        %v4374 = vshrl.u32 %v4373, 7
        %v4375 = vsub.s32 7, %v4374
        %v4376 = vrot.slane %v4339, %v4375
        %v4377 = vlaneseq
        %v4378 = vshrl.u32 %v4377, 7
        %v4379 = vsub.s32 0, %v4378
        %v4380 = vrot.slane %v4342, %v4379
        %v4390 = vsub.f32 %v4254, %v4348
        %v4391 = vsub.f32 %v4255, %v4352
        %v4392 = vsub.f32 %v4256, %v4356
        %v4393 = vsub.f32 %v4257, %v4360
        %v4394 = vsub.f32 %v4258, %v4364
        %v4395 = vsub.f32 %v4259, %v4368
        %v4396 = vsub.f32 %v4260, %v4372
        %v4397 = vsub.f32 %v4261, %v4376
        %v4398 = vsub.f32 %v4262, %v4380
        %v4399 = vmul.f32 %v4390, 1.442695
        %v4400 = vpow.pop %v4399
        %v4401 = vmul.f32 %v4391, 1.442695
        %v4402 = vpow.pop %v4401
        %v4403 = vmul.f32 %v4392, 1.442695
        %v4404 = vpow.pop %v4403
        %v4405 = vmul.f32 %v4393, 1.442695
        %v4406 = vpow.pop %v4405
        %v4407 = vmul.f32 %v4394, 1.442695
        %v4408 = vpow.pop %v4407
        %v4409 = vmul.f32 %v4395, 1.442695
        %v4410 = vpow.pop %v4409
        %v4411 = vmul.f32 %v4396, 1.442695
        %v4412 = vpow.pop %v4411
        %v4413 = vmul.f32 %v4397, 1.442695
        %v4414 = vpow.pop %v4413
        %v4415 = vmul.f32 %v4398, 1.442695
        %v4416 = vpow.pop %v4415
        %v4426 = vcombine.low %v4400, %v4402
        %v4427 = vcombine.low %v4404, %v4406
        %v4428 = vcombine.low %v4408, %v4410
        %v4429 = vcombine.low %v4412, %v4414
        %v4431 = vunpack.c.l.s4 1966171168
        %v4432 = vunpack.c.0.s8 %v4431
        %v4433 = vlaneseq
        %v4434 = vshrl.u32 %v4433, 7
        %v4435 = vsub.s32 %v4432, %v4434
        %v4436 = vrot.slane %v4426, %v4435
        %v4438 = vunpack.c.l.s4 1966171168
        %v4439 = vunpack.c.0.s8 %v4438
        %v4440 = vlaneseq
        %v4441 = vshrl.u32 %v4440, 7
        %v4442 = vsub.s32 %v4439, %v4441
        %v4443 = vrot.slane %v4427, %v4442
        %v4445 = vunpack.c.l.s4 1966171168
        %v4446 = vunpack.c.0.s8 %v4445
        %v4447 = vlaneseq
        %v4448 = vshrl.u32 %v4447, 7
        %v4449 = vsub.s32 %v4446, %v4448
        %v4450 = vrot.slane %v4428, %v4449
        %v4452 = vunpack.c.l.s4 1966171168
        %v4453 = vunpack.c.0.s8 %v4452
        %v4454 = vlaneseq
        %v4455 = vshrl.u32 %v4454, 7
        %v4456 = vsub.s32 %v4453, %v4455
        %v4457 = vrot.slane %v4429, %v4456
        %v4458 = vcombine.low %v4436, %v4443
        %v4459 = vcombine.low %v4450, %v4457
        %v4461 = vunpack.c.l.s4 1966171168
        %v4462 = vunpack.c.0.s8 %v4461
        %v4463 = vlaneseq
        %v4464 = vshrl.u32 %v4463, 7
        %v4465 = vsub.s32 %v4462, %v4464
        %v4466 = vrot.slane %v4458, %v4465
        %v4468 = vunpack.c.l.s4 1966171168
        %v4469 = vunpack.c.0.s8 %v4468
        %v4470 = vlaneseq
        %v4471 = vshrl.u32 %v4470, 7
        %v4472 = vsub.s32 %v4469, %v4471
        %v4473 = vrot.slane %v4459, %v4472
        %v4474 = vcombine.low %v4466, %v4473
        %v4476 = vunpack.c.l.s4 1966171168
        %v4477 = vunpack.c.0.s8 %v4476
        %v4478 = vlaneseq
        %v4479 = vshrl.u32 %v4478, 7
        %v4480 = vsub.s32 %v4477, %v4479
        %v4481 = vrot.slane %v4416, %v4480
        %v4483 = vunpack.c.l.s4 1966171168
        %v4484 = vunpack.c.0.s8 %v4483
        %v4485 = vlaneseq
        %v4486 = vshrl.u32 %v4485, 7
        %v4487 = vsub.s32 %v4484, %v4486
        %v4488 = vrot.slane %v4481, %v4487
        %v4491 = vsel %vm1094, %v4474, 0.0
        %4492 = vadd.xlane.f32.xlu0 %v4491
        %v4493 = vpop.xlane.xlu0 %4492
        %v4494 = vsel %vm1098, %v4488, 0.0
        %4495 = vadd.xlane.f32.xlu0 %v4494
        %v4496 = vpop.xlane.xlu0 %4495
        %v4497 = vrcp.pop %v4493
        %v4498 = vrcp.pop %v4496
        %v4501 = vlaneseq
        %v4502 = vshrl.u32 %v4501, 7
        %v4503 = vsub.s32 0, %v4502
        %v4504 = vrot.slane %v4497, %v4503
        %v4505 = vlaneseq
        %v4506 = vshrl.u32 %v4505, 7
        %v4507 = vsub.s32 1, %v4506
        %v4508 = vrot.slane %v4497, %v4507
        %v4509 = vlaneseq
        %v4510 = vshrl.u32 %v4509, 7
        %v4511 = vsub.s32 2, %v4510
        %v4512 = vrot.slane %v4497, %v4511
        %v4513 = vlaneseq
        %v4514 = vshrl.u32 %v4513, 7
        %v4515 = vsub.s32 3, %v4514
        %v4516 = vrot.slane %v4497, %v4515
        %v4517 = vlaneseq
        %v4518 = vshrl.u32 %v4517, 7
        %v4519 = vsub.s32 4, %v4518
        %v4520 = vrot.slane %v4497, %v4519
        %v4521 = vlaneseq
        %v4522 = vshrl.u32 %v4521, 7
        %v4523 = vsub.s32 5, %v4522
        %v4524 = vrot.slane %v4497, %v4523
        %v4525 = vlaneseq
        %v4526 = vshrl.u32 %v4525, 7
        %v4527 = vsub.s32 6, %v4526
        %v4528 = vrot.slane %v4497, %v4527
        %v4529 = vlaneseq
        %v4530 = vshrl.u32 %v4529, 7
        %v4531 = vsub.s32 7, %v4530
        %v4532 = vrot.slane %v4497, %v4531
        %v4533 = vlaneseq
        %v4534 = vshrl.u32 %v4533, 7
        %v4535 = vsub.s32 0, %v4534
        %v4536 = vrot.slane %v4498, %v4535
        %v4546 = vmul.f32 %v4400, %v4504
        %v4547 = vmul.f32 %v4402, %v4508
        %v4548 = vmul.f32 %v4404, %v4512
        %v4549 = vmul.f32 %v4406, %v4516
        %v4550 = vmul.f32 %v4408, %v4520
        %v4551 = vmul.f32 %v4410, %v4524
        %v4552 = vmul.f32 %v4412, %v4528
        %v4553 = vmul.f32 %v4414, %v4532
        %v4554 = vmul.f32 %v4416, %v4536
        %v4564 = vcombine.low %v4546, %v4547
        %v4565 = vcombine.low %v4548, %v4549
        %v4566 = vcombine.low %v4550, %v4551
        %v4567 = vcombine.low %v4552, %v4553
        %v4569 = vunpack.c.l.s4 1966171168
        %v4570 = vunpack.c.0.s8 %v4569
        %v4571 = vlaneseq
        %v4572 = vshrl.u32 %v4571, 7
        %v4573 = vsub.s32 %v4570, %v4572
        %v4574 = vrot.slane %v4564, %v4573
        %v4576 = vunpack.c.l.s4 1966171168
        %v4577 = vunpack.c.0.s8 %v4576
        %v4578 = vlaneseq
        %v4579 = vshrl.u32 %v4578, 7
        %v4580 = vsub.s32 %v4577, %v4579
        %v4581 = vrot.slane %v4565, %v4580
        %v4583 = vunpack.c.l.s4 1966171168
        %v4584 = vunpack.c.0.s8 %v4583
        %v4585 = vlaneseq
        %v4586 = vshrl.u32 %v4585, 7
        %v4587 = vsub.s32 %v4584, %v4586
        %v4588 = vrot.slane %v4566, %v4587
        %v4590 = vunpack.c.l.s4 1966171168
        %v4591 = vunpack.c.0.s8 %v4590
        %v4592 = vlaneseq
        %v4593 = vshrl.u32 %v4592, 7
        %v4594 = vsub.s32 %v4591, %v4593
        %v4595 = vrot.slane %v4567, %v4594
        %v4596 = vcombine.low %v4574, %v4581
        %v4597 = vcombine.low %v4588, %v4595
        %v4599 = vunpack.c.l.s4 1966171168
        %v4600 = vunpack.c.0.s8 %v4599
        %v4601 = vlaneseq
        %v4602 = vshrl.u32 %v4601, 7
        %v4603 = vsub.s32 %v4600, %v4602
        %v4604 = vrot.slane %v4596, %v4603
        %v4606 = vunpack.c.l.s4 1966171168
        %v4607 = vunpack.c.0.s8 %v4606
        %v4608 = vlaneseq
        %v4609 = vshrl.u32 %v4608, 7
        %v4610 = vsub.s32 %v4607, %v4609
        %v4611 = vrot.slane %v4597, %v4610
        %v4612 = vcombine.low %v4604, %v4611
        %v4614 = vunpack.c.l.s4 1966171168
        %v4615 = vunpack.c.0.s8 %v4614
        %v4616 = vlaneseq
        %v4617 = vshrl.u32 %v4616, 7
        %v4618 = vsub.s32 %v4615, %v4617
        %v4619 = vrot.slane %v4554, %v4618
        %v4621 = vunpack.c.l.s4 1966171168
        %v4622 = vunpack.c.0.s8 %v4621
        %v4623 = vlaneseq
        %v4624 = vshrl.u32 %v4623, 7
        %v4625 = vsub.s32 %v4622, %v4624
        %v4626 = vrot.slane %v4619, %v4625
        %4627 = vrot.lane.b32.xlu0 %v3409, 120
        %v4628 = vpop.permute.xlu0 %4627
        %v4629 = vsel %vm1094, %v4612, 0
        %v4631 = vsel %vm1094, %v4626, 0
        %v4633 = vsel %vm1390, %v4628, 0
        %4635 = vmatprep.subr.mxu0 0.0
        %4636 = vmatpush1.msra.mxu0 %v4633
        %4637 = vmatprep.subr.mxu0 0.0
        %4638 = vmatpush1.msra.mxu0 0.0
        %4639 = vmatprep.subr.mxu0 0.0
        %4640 = vmatpush1.msra.mxu0 0.0
        %4641 = vmatprep.subr.mxu0 0.0
        %4642 = vmatpush1.msra.mxu0 0.0
        %4643 = vmatprep.subr.mxu0 0.0
        %4644 = vmatpush1.msra.mxu0 0.0
        %4645 = vmatprep.subr.mxu0 0.0
        %4646 = vmatpush1.msra.mxu0 0.0
        %4647 = vmatprep.subr.mxu0 0.0
        %4648 = vmatpush1.msra.mxu0 0.0
        %4649 = vmatprep.subr.mxu0 0.0
        %4650 = vmatpush1.msra.mxu0 0.0
        %4651 = vmatprep.subr.mxu0 0.0
        %4652 = vmatpush1.msra.mxu0 0.0
        %4653 = vmatprep.subr.mxu0 0.0
        %4654 = vmatpush1.msra.mxu0 0.0
        %4655 = vmatprep.subr.mxu0 0.0
        %4656 = vmatpush1.msra.mxu0 0.0
        %4657 = vmatprep.subr.mxu0 0.0
        %4658 = vmatpush1.msra.mxu0 0.0
        %4659 = vmatprep.subr.mxu0 0.0
        %4660 = vmatpush1.msra.mxu0 0.0
        %4661 = vmatprep.subr.mxu0 0.0
        %4662 = vmatpush1.msra.mxu0 0.0
        %4663 = vmatprep.subr.mxu0 0.0
        %4664 = vmatpush1.msra.mxu0 0.0
        %4665 = vmatprep.subr.mxu0 0.0
        %4666 = vmatpush1.msra.mxu0 0.0
        %4667 = vmatprep.subr.mxu0 0.0
        %4668 = vmatpush1.msra.mxu0 0.0
        %4669 = vmatprep.subr.mxu0 0.0
        %4670 = vmatpush1.msra.mxu0 0.0
        %4671 = vmatprep.subr.mxu0 0.0
        %4672 = vmatpush1.msra.mxu0 0.0
        %4673 = vmatprep.subr.mxu0 0.0
        %4674 = vmatpush1.msra.mxu0 0.0
        %4675 = vmatprep.subr.mxu0 0.0
        %4676 = vmatpush1.msra.mxu0 0.0
        %4677 = vmatprep.subr.mxu0 0.0
        %4678 = vmatpush1.msra.mxu0 0.0
        %4679 = vmatprep.subr.mxu0 0.0
        %4680 = vmatpush1.msra.mxu0 0.0
        %4681 = vmatprep.subr.mxu0 0.0
        %4682 = vmatpush1.msra.mxu0 0.0
        %4683 = vmatprep.subr.mxu0 0.0
        %4684 = vmatpush1.msra.mxu0 0.0
        %4685 = vmatprep.subr.mxu0 0.0
        %4686 = vmatpush1.msra.mxu0 0.0
        %4687 = vmatprep.subr.mxu0 0.0
        %4688 = vmatpush1.msra.mxu0 0.0
        %4689 = vmatprep.subr.mxu0 0.0
        %4690 = vmatpush1.msra.mxu0 0.0
        %4691 = vmatprep.subr.mxu0 0.0
        %4692 = vmatpush1.msra.mxu0 0.0
        %4693 = vmatprep.subr.mxu0 0.0
        %4694 = vmatpush1.msra.mxu0 0.0
        %4695 = vmatprep.subr.mxu0 0.0
        %4696 = vmatpush1.msra.mxu0 0.0
        %4697 = vmatprep.subr.mxu0 0.0
        %4698 = vmatpush1.msra.mxu0 0.0
        %4699 = vmatprep.mubr.f32.mxu0 0.0
        %4700 = vmatmul.mubr.f32.gmra.mrb[0].mxu0 %v4629
        %v4701 = vpop.f32.mrb[0].mxu0
        %v4702 = vadd.f32 0.0, %v4701
        %v4703 = vpop.f32.mrb[0].mxu0
        %4704 = vmatprep.mubr.f32.mxu0 0.0
        %4705 = vmatmul.mubr.f32.gmra.mrb[0].mxu0 %v4631
        %v4706 = vpop.f32.mrb[0].mxu0
        %v4707 = vadd.f32 0.0, %v4706
        %v4708 = vpop.f32.mrb[0].mxu0
        %4709 = vdwg.mxu0
        %4710 = vrot.lane.b32.xlu0 %v3269, 112
        %v4711 = vpop.permute.xlu0 %4710
        %4712 = vrot.lane.b32.xlu0 %v3339, 112
        %v4713 = vpop.permute.xlu0 %4712
        %v4714 = vsel %vm897, %v4711, 0
        %v4716 = vsel %vm897, %v4713, 0
        %4718 = vmatprep.subr.mxu0 0.0
        %4719 = vmatpush1.xpose.msra.mxu0 %v4716
        %4720 = vmatprep.subr.mxu0 0.0
        %4721 = vmatpush1.xpose.msra.mxu0 0.0
        %4722 = vmatprep.subr.mxu0 0.0
        %4723 = vmatpush1.xpose.msra.mxu0 0.0
        %4724 = vmatprep.subr.mxu0 0.0
        %4725 = vmatpush1.xpose.msra.mxu0 0.0
        %4726 = vmatprep.subr.mxu0 0.0
        %4727 = vmatpush1.xpose.msra.mxu0 0.0
        %4728 = vmatprep.subr.mxu0 0.0
        %4729 = vmatpush1.xpose.msra.mxu0 0.0
        %4730 = vmatprep.subr.mxu0 0.0
        %4731 = vmatpush1.xpose.msra.mxu0 0.0
        %4732 = vmatprep.subr.mxu0 0.0
        %4733 = vmatpush1.xpose.msra.mxu0 0.0
        %4734 = vmatprep.subr.mxu0 0.0
        %4735 = vmatpush1.xpose.msra.mxu0 0.0
        %4736 = vmatprep.subr.mxu0 0.0
        %4737 = vmatpush1.xpose.msra.mxu0 0.0
        %4738 = vmatprep.subr.mxu0 0.0
        %4739 = vmatpush1.xpose.msra.mxu0 0.0
        %4740 = vmatprep.subr.mxu0 0.0
        %4741 = vmatpush1.xpose.msra.mxu0 0.0
        %4742 = vmatprep.subr.mxu0 0.0
        %4743 = vmatpush1.xpose.msra.mxu0 0.0
        %4744 = vmatprep.subr.mxu0 0.0
        %4745 = vmatpush1.xpose.msra.mxu0 0.0
        %4746 = vmatprep.subr.mxu0 0.0
        %4747 = vmatpush1.xpose.msra.mxu0 0.0
        %4748 = vmatprep.subr.mxu0 0.0
        %4749 = vmatpush1.xpose.msra.mxu0 0.0
        %4750 = vmatprep.subr.mxu0 0.0
        %4751 = vmatpush1.xpose.msra.mxu0 0.0
        %4752 = vmatprep.subr.mxu0 0.0
        %4753 = vmatpush1.xpose.msra.mxu0 0.0
        %4754 = vmatprep.subr.mxu0 0.0
        %4755 = vmatpush1.xpose.msra.mxu0 0.0
        %4756 = vmatprep.subr.mxu0 0.0
        %4757 = vmatpush1.xpose.msra.mxu0 0.0
        %4758 = vmatprep.subr.mxu0 0.0
        %4759 = vmatpush1.xpose.msra.mxu0 0.0
        %4760 = vmatprep.subr.mxu0 0.0
        %4761 = vmatpush1.xpose.msra.mxu0 0.0
        %4762 = vmatprep.subr.mxu0 0.0
        %4763 = vmatpush1.xpose.msra.mxu0 0.0
        %4764 = vmatprep.subr.mxu0 0.0
        %4765 = vmatpush1.xpose.msra.mxu0 0.0
        %4766 = vmatprep.subr.mxu0 0.0
        %4767 = vmatpush1.xpose.msra.mxu0 0.0
        %4768 = vmatprep.subr.mxu0 0.0
        %4769 = vmatpush1.xpose.msra.mxu0 0.0
        %4770 = vmatprep.subr.mxu0 0.0
        %4771 = vmatpush1.xpose.msra.mxu0 0.0
        %4772 = vmatprep.subr.mxu0 0.0
        %4773 = vmatpush1.xpose.msra.mxu0 0.0
        %4774 = vmatprep.subr.mxu0 0.0
        %4775 = vmatpush1.xpose.msra.mxu0 0.0
        %4776 = vmatprep.subr.mxu0 0.0
        %4777 = vmatpush1.xpose.msra.mxu0 0.0
        %4778 = vmatprep.subr.mxu0 0.0
        %4779 = vmatpush1.xpose.msra.mxu0 0.0
        %4780 = vmatprep.subr.mxu0 0.0
        %4781 = vmatpush1.xpose.msra.mxu0 0.0
        %4782 = vmatprep.mubr.f32.mxu0 0.0
        %4783 = vmatmul.mubr.f32.gmra.mrb[0].mxu0 %v4714
        %v4784 = vpop.f32.mrb[0].mxu0
        %v4785 = vadd.f32 0.0, %v4784
        %v4786 = vpop.f32.mrb[0].mxu0
        %4787 = vdwg.mxu0
        %v4788 = vmul.f32 %v4785, 0.35355338
        %v4791 = vunpack.c.l.s4 1966171168
        %v4792 = vunpack.c.0.s8 %v4791
        %v4793 = vlaneseq
        %v4794 = vshrl.u32 %v4793, 7
        %v4795 = vsub.s32 %v4792, %v4794
        %v4796 = vrot.slane %v4788, %v4795
        %v4797 = vcombine.high %v4796, %v4796
        %v4799 = vunpack.c.l.s4 1966171168
        %v4800 = vunpack.c.0.s8 %v4799
        %v4801 = vlaneseq
        %v4802 = vshrl.u32 %v4801, 7
        %v4803 = vsub.s32 %v4800, %v4802
        %v4804 = vrot.slane %v4796, %v4803
        %v4806 = vunpack.c.l.s4 1966171168
        %v4807 = vunpack.c.0.s8 %v4806
        %v4808 = vlaneseq
        %v4809 = vshrl.u32 %v4808, 7
        %v4810 = vsub.s32 %v4807, %v4809
        %v4811 = vrot.slane %v4797, %v4810
        %v4812 = vcombine.high %v4804, %v4804
        %v4813 = vlaneseq
        %v4814 = vshrl.u32 %v4813, 7
        %v4815 = vsub.s32 0, %v4814
        %v4816 = vrot.slane %v4804, %v4815
        %v4817 = vlaneseq
        %v4818 = vshrl.u32 %v4817, 7
        %v4819 = vsub.s32 0, %v4818
        %v4820 = vrot.slane %v4811, %v4819
        %v4821 = vlaneseq
        %v4822 = vshrl.u32 %v4821, 7
        %v4823 = vsub.s32 0, %v4822
        %v4824 = vrot.slane %v4812, %v4823
        %v4826 = vunpack.c.l.s4 1966171168
        %v4827 = vunpack.c.0.s8 %v4826
        %v4828 = vlaneseq
        %v4829 = vshrl.u32 %v4828, 7
        %v4830 = vsub.s32 %v4827, %v4829
        %v4831 = vrot.slane %v4816, %v4830
        %v4832 = vcombine.high %v4831, %v4831
        %v4834 = vunpack.c.l.s4 1966171168
        %v4835 = vunpack.c.0.s8 %v4834
        %v4836 = vlaneseq
        %v4837 = vshrl.u32 %v4836, 7
        %v4838 = vsub.s32 %v4835, %v4837
        %v4839 = vrot.slane %v4831, %v4838
        %v4841 = vunpack.c.l.s4 1966171168
        %v4842 = vunpack.c.0.s8 %v4841
        %v4843 = vlaneseq
        %v4844 = vshrl.u32 %v4843, 7
        %v4845 = vsub.s32 %v4842, %v4844
        %v4846 = vrot.slane %v4832, %v4845
        %v4847 = vcombine.high %v4839, %v4839
        %v4849 = vunpack.c.l.s4 1966171168
        %v4850 = vunpack.c.0.s8 %v4849
        %v4851 = vlaneseq
        %v4852 = vshrl.u32 %v4851, 7
        %v4853 = vsub.s32 %v4850, %v4852
        %v4854 = vrot.slane %v4820, %v4853
        %v4855 = vcombine.high %v4854, %v4854
        %v4857 = vunpack.c.l.s4 1966171168
        %v4858 = vunpack.c.0.s8 %v4857
        %v4859 = vlaneseq
        %v4860 = vshrl.u32 %v4859, 7
        %v4861 = vsub.s32 %v4858, %v4860
        %v4862 = vrot.slane %v4854, %v4861
        %v4864 = vunpack.c.l.s4 1966171168
        %v4865 = vunpack.c.0.s8 %v4864
        %v4866 = vlaneseq
        %v4867 = vshrl.u32 %v4866, 7
        %v4868 = vsub.s32 %v4865, %v4867
        %v4869 = vrot.slane %v4855, %v4868
        %v4870 = vcombine.high %v4862, %v4862
        %v4872 = vunpack.c.l.s4 1966171168
        %v4873 = vunpack.c.0.s8 %v4872
        %v4874 = vlaneseq
        %v4875 = vshrl.u32 %v4874, 7
        %v4876 = vsub.s32 %v4873, %v4875
        %v4877 = vrot.slane %v4824, %v4876
        %v4878 = vcombine.high %v4877, %v4877
        %v4880 = vunpack.c.l.s4 1966171168
        %v4881 = vunpack.c.0.s8 %v4880
        %v4882 = vlaneseq
        %v4883 = vshrl.u32 %v4882, 7
        %v4884 = vsub.s32 %v4881, %v4883
        %v4885 = vrot.slane %v4877, %v4884
        %v4887 = vunpack.c.l.s4 1966171168
        %v4888 = vunpack.c.0.s8 %v4887
        %v4889 = vlaneseq
        %v4890 = vshrl.u32 %v4889, 7
        %v4891 = vsub.s32 %v4888, %v4890
        %v4892 = vrot.slane %v4878, %v4891
        %v4893 = vcombine.high %v4885, %v4885
        %v4903 = vsel %vm3603, -1e+30, %v4839
        %v4904 = vsel %vm3604, -1e+30, %v4846
        %v4905 = vsel %vm3605, -1e+30, %v4847
        %v4906 = vsel %vm3603, -1e+30, %v4862
        %v4907 = vsel %vm3604, -1e+30, %v4869
        %v4908 = vsel %vm3605, -1e+30, %v4870
        %v4909 = vsel %vm3603, -1e+30, %v4885
        %v4910 = vsel %vm3604, -1e+30, %v4892
        %v4911 = vsel %vm3605, -1e+30, %v4893
        %v4921 = vcombine.low %v4903, %v4904
        %v4922 = vcombine.low %v4905, %v4906
        %v4923 = vcombine.low %v4907, %v4908
        %v4924 = vcombine.low %v4909, %v4910
        %v4926 = vunpack.c.l.s4 1966171168
        %v4927 = vunpack.c.0.s8 %v4926
        %v4928 = vlaneseq
        %v4929 = vshrl.u32 %v4928, 7
        %v4930 = vsub.s32 %v4927, %v4929
        %v4931 = vrot.slane %v4921, %v4930
        %v4933 = vunpack.c.l.s4 1966171168
        %v4934 = vunpack.c.0.s8 %v4933
        %v4935 = vlaneseq
        %v4936 = vshrl.u32 %v4935, 7
        %v4937 = vsub.s32 %v4934, %v4936
        %v4938 = vrot.slane %v4922, %v4937
        %v4940 = vunpack.c.l.s4 1966171168
        %v4941 = vunpack.c.0.s8 %v4940
        %v4942 = vlaneseq
        %v4943 = vshrl.u32 %v4942, 7
        %v4944 = vsub.s32 %v4941, %v4943
        %v4945 = vrot.slane %v4923, %v4944
        %v4947 = vunpack.c.l.s4 1966171168
        %v4948 = vunpack.c.0.s8 %v4947
        %v4949 = vlaneseq
        %v4950 = vshrl.u32 %v4949, 7
        %v4951 = vsub.s32 %v4948, %v4950
        %v4952 = vrot.slane %v4924, %v4951
        %v4953 = vcombine.low %v4931, %v4938
        %v4954 = vcombine.low %v4945, %v4952
        %v4956 = vunpack.c.l.s4 1966171168
        %v4957 = vunpack.c.0.s8 %v4956
        %v4958 = vlaneseq
        %v4959 = vshrl.u32 %v4958, 7
        %v4960 = vsub.s32 %v4957, %v4959
        %v4961 = vrot.slane %v4953, %v4960
        %v4963 = vunpack.c.l.s4 1966171168
        %v4964 = vunpack.c.0.s8 %v4963
        %v4965 = vlaneseq
        %v4966 = vshrl.u32 %v4965, 7
        %v4967 = vsub.s32 %v4964, %v4966
        %v4968 = vrot.slane %v4954, %v4967
        %v4969 = vcombine.low %v4961, %v4968
        %v4971 = vunpack.c.l.s4 1966171168
        %v4972 = vunpack.c.0.s8 %v4971
        %v4973 = vlaneseq
        %v4974 = vshrl.u32 %v4973, 7
        %v4975 = vsub.s32 %v4972, %v4974
        %v4976 = vrot.slane %v4911, %v4975
        %v4978 = vunpack.c.l.s4 1966171168
        %v4979 = vunpack.c.0.s8 %v4978
        %v4980 = vlaneseq
        %v4981 = vshrl.u32 %v4980, 7
        %v4982 = vsub.s32 %v4979, %v4981
        %v4983 = vrot.slane %v4976, %v4982
        %v4986 = vsel %vm1094, %v4969, -inf
        %4987 = vmax.xlane.f32.xlu0 %v4986
        %v4988 = vpop.xlane.xlu0 %4987
        %v4989 = vsel %vm1098, %v4983, -inf
        %4990 = vmax.xlane.f32.xlu0 %v4989
        %v4991 = vpop.xlane.xlu0 %4990
        %v4994 = vlaneseq
        %v4995 = vshrl.u32 %v4994, 7
        %v4996 = vsub.s32 0, %v4995
        %v4997 = vrot.slane %v4988, %v4996
        %v4998 = vlaneseq
        %v4999 = vshrl.u32 %v4998, 7
        %v5000 = vsub.s32 1, %v4999
        %v5001 = vrot.slane %v4988, %v5000
        %v5002 = vlaneseq
        %v5003 = vshrl.u32 %v5002, 7
        %v5004 = vsub.s32 2, %v5003
        %v5005 = vrot.slane %v4988, %v5004
        %v5006 = vlaneseq
        %v5007 = vshrl.u32 %v5006, 7
        %v5008 = vsub.s32 3, %v5007
        %v5009 = vrot.slane %v4988, %v5008
        %v5010 = vlaneseq
        %v5011 = vshrl.u32 %v5010, 7
        %v5012 = vsub.s32 4, %v5011
        %v5013 = vrot.slane %v4988, %v5012
        %v5014 = vlaneseq
        %v5015 = vshrl.u32 %v5014, 7
        %v5016 = vsub.s32 5, %v5015
        %v5017 = vrot.slane %v4988, %v5016
        %v5018 = vlaneseq
        %v5019 = vshrl.u32 %v5018, 7
        %v5020 = vsub.s32 6, %v5019
        %v5021 = vrot.slane %v4988, %v5020
        %v5022 = vlaneseq
        %v5023 = vshrl.u32 %v5022, 7
        %v5024 = vsub.s32 7, %v5023
        %v5025 = vrot.slane %v4988, %v5024
        %v5026 = vlaneseq
        %v5027 = vshrl.u32 %v5026, 7
        %v5028 = vsub.s32 0, %v5027
        %v5029 = vrot.slane %v4991, %v5028
        %v5039 = vsub.f32 %v4903, %v4997
        %v5040 = vsub.f32 %v4904, %v5001
        %v5041 = vsub.f32 %v4905, %v5005
        %v5042 = vsub.f32 %v4906, %v5009
        %v5043 = vsub.f32 %v4907, %v5013
        %v5044 = vsub.f32 %v4908, %v5017
        %v5045 = vsub.f32 %v4909, %v5021
        %v5046 = vsub.f32 %v4910, %v5025
        %v5047 = vsub.f32 %v4911, %v5029
        %v5048 = vmul.f32 %v5039, 1.442695
        %v5049 = vpow.pop %v5048
        %v5050 = vmul.f32 %v5040, 1.442695
        %v5051 = vpow.pop %v5050
        %v5052 = vmul.f32 %v5041, 1.442695
        %v5053 = vpow.pop %v5052
        %v5054 = vmul.f32 %v5042, 1.442695
        %v5055 = vpow.pop %v5054
        %v5056 = vmul.f32 %v5043, 1.442695
        %v5057 = vpow.pop %v5056
        %v5058 = vmul.f32 %v5044, 1.442695
        %v5059 = vpow.pop %v5058
        %v5060 = vmul.f32 %v5045, 1.442695
        %v5061 = vpow.pop %v5060
        %v5062 = vmul.f32 %v5046, 1.442695
        %v5063 = vpow.pop %v5062
        %v5064 = vmul.f32 %v5047, 1.442695
        %v5065 = vpow.pop %v5064
        %v5075 = vcombine.low %v5049, %v5051
        %v5076 = vcombine.low %v5053, %v5055
        %v5077 = vcombine.low %v5057, %v5059
        %v5078 = vcombine.low %v5061, %v5063
        %v5080 = vunpack.c.l.s4 1966171168
        %v5081 = vunpack.c.0.s8 %v5080
        %v5082 = vlaneseq
        %v5083 = vshrl.u32 %v5082, 7
        %v5084 = vsub.s32 %v5081, %v5083
        %v5085 = vrot.slane %v5075, %v5084
        %v5087 = vunpack.c.l.s4 1966171168
        %v5088 = vunpack.c.0.s8 %v5087
        %v5089 = vlaneseq
        %v5090 = vshrl.u32 %v5089, 7
        %v5091 = vsub.s32 %v5088, %v5090
        %v5092 = vrot.slane %v5076, %v5091
        %v5094 = vunpack.c.l.s4 1966171168
        %v5095 = vunpack.c.0.s8 %v5094
        %v5096 = vlaneseq
        %v5097 = vshrl.u32 %v5096, 7
        %v5098 = vsub.s32 %v5095, %v5097
        %v5099 = vrot.slane %v5077, %v5098
        %v5101 = vunpack.c.l.s4 1966171168
        %v5102 = vunpack.c.0.s8 %v5101
        %v5103 = vlaneseq
        %v5104 = vshrl.u32 %v5103, 7
        %v5105 = vsub.s32 %v5102, %v5104
        %v5106 = vrot.slane %v5078, %v5105
        %v5107 = vcombine.low %v5085, %v5092
        %v5108 = vcombine.low %v5099, %v5106
        %v5110 = vunpack.c.l.s4 1966171168
        %v5111 = vunpack.c.0.s8 %v5110
        %v5112 = vlaneseq
        %v5113 = vshrl.u32 %v5112, 7
        %v5114 = vsub.s32 %v5111, %v5113
        %v5115 = vrot.slane %v5107, %v5114
        %v5117 = vunpack.c.l.s4 1966171168
        %v5118 = vunpack.c.0.s8 %v5117
        %v5119 = vlaneseq
        %v5120 = vshrl.u32 %v5119, 7
        %v5121 = vsub.s32 %v5118, %v5120
        %v5122 = vrot.slane %v5108, %v5121
        %v5123 = vcombine.low %v5115, %v5122
        %v5125 = vunpack.c.l.s4 1966171168
        %v5126 = vunpack.c.0.s8 %v5125
        %v5127 = vlaneseq
        %v5128 = vshrl.u32 %v5127, 7
        %v5129 = vsub.s32 %v5126, %v5128
        %v5130 = vrot.slane %v5065, %v5129
        %v5132 = vunpack.c.l.s4 1966171168
        %v5133 = vunpack.c.0.s8 %v5132
        %v5134 = vlaneseq
        %v5135 = vshrl.u32 %v5134, 7
        %v5136 = vsub.s32 %v5133, %v5135
        %v5137 = vrot.slane %v5130, %v5136
        %v5140 = vsel %vm1094, %v5123, 0.0
        %5141 = vadd.xlane.f32.xlu0 %v5140
        %v5142 = vpop.xlane.xlu0 %5141
        %v5143 = vsel %vm1098, %v5137, 0.0
        %5144 = vadd.xlane.f32.xlu0 %v5143
        %v5145 = vpop.xlane.xlu0 %5144
        %v5146 = vrcp.pop %v5142
        %v5147 = vrcp.pop %v5145
        %v5150 = vlaneseq
        %v5151 = vshrl.u32 %v5150, 7
        %v5152 = vsub.s32 0, %v5151
        %v5153 = vrot.slane %v5146, %v5152
        %v5154 = vlaneseq
        %v5155 = vshrl.u32 %v5154, 7
        %v5156 = vsub.s32 1, %v5155
        %v5157 = vrot.slane %v5146, %v5156
        %v5158 = vlaneseq
        %v5159 = vshrl.u32 %v5158, 7
        %v5160 = vsub.s32 2, %v5159
        %v5161 = vrot.slane %v5146, %v5160
        %v5162 = vlaneseq
        %v5163 = vshrl.u32 %v5162, 7
        %v5164 = vsub.s32 3, %v5163
        %v5165 = vrot.slane %v5146, %v5164
        %v5166 = vlaneseq
        %v5167 = vshrl.u32 %v5166, 7
        %v5168 = vsub.s32 4, %v5167
        %v5169 = vrot.slane %v5146, %v5168
        %v5170 = vlaneseq
        %v5171 = vshrl.u32 %v5170, 7
        %v5172 = vsub.s32 5, %v5171
        %v5173 = vrot.slane %v5146, %v5172
        %v5174 = vlaneseq
        %v5175 = vshrl.u32 %v5174, 7
        %v5176 = vsub.s32 6, %v5175
        %v5177 = vrot.slane %v5146, %v5176
        %v5178 = vlaneseq
        %v5179 = vshrl.u32 %v5178, 7
        %v5180 = vsub.s32 7, %v5179
        %v5181 = vrot.slane %v5146, %v5180
        %v5182 = vlaneseq
        %v5183 = vshrl.u32 %v5182, 7
        %v5184 = vsub.s32 0, %v5183
        %v5185 = vrot.slane %v5147, %v5184
        %v5195 = vmul.f32 %v5049, %v5153
        %v5196 = vmul.f32 %v5051, %v5157
        %v5197 = vmul.f32 %v5053, %v5161
        %v5198 = vmul.f32 %v5055, %v5165
        %v5199 = vmul.f32 %v5057, %v5169
        %v5200 = vmul.f32 %v5059, %v5173
        %v5201 = vmul.f32 %v5061, %v5177
        %v5202 = vmul.f32 %v5063, %v5181
        %v5203 = vmul.f32 %v5065, %v5185
        %v5213 = vcombine.low %v5195, %v5196
        %v5214 = vcombine.low %v5197, %v5198
        %v5215 = vcombine.low %v5199, %v5200
        %v5216 = vcombine.low %v5201, %v5202
        %v5218 = vunpack.c.l.s4 1966171168
        %v5219 = vunpack.c.0.s8 %v5218
        %v5220 = vlaneseq
        %v5221 = vshrl.u32 %v5220, 7
        %v5222 = vsub.s32 %v5219, %v5221
        %v5223 = vrot.slane %v5213, %v5222
        %v5225 = vunpack.c.l.s4 1966171168
        %v5226 = vunpack.c.0.s8 %v5225
        %v5227 = vlaneseq
        %v5228 = vshrl.u32 %v5227, 7
        %v5229 = vsub.s32 %v5226, %v5228
        %v5230 = vrot.slane %v5214, %v5229
        %v5232 = vunpack.c.l.s4 1966171168
        %v5233 = vunpack.c.0.s8 %v5232
        %v5234 = vlaneseq
        %v5235 = vshrl.u32 %v5234, 7
        %v5236 = vsub.s32 %v5233, %v5235
        %v5237 = vrot.slane %v5215, %v5236
        %v5239 = vunpack.c.l.s4 1966171168
        %v5240 = vunpack.c.0.s8 %v5239
        %v5241 = vlaneseq
        %v5242 = vshrl.u32 %v5241, 7
        %v5243 = vsub.s32 %v5240, %v5242
        %v5244 = vrot.slane %v5216, %v5243
        %v5245 = vcombine.low %v5223, %v5230
        %v5246 = vcombine.low %v5237, %v5244
        %v5248 = vunpack.c.l.s4 1966171168
        %v5249 = vunpack.c.0.s8 %v5248
        %v5250 = vlaneseq
        %v5251 = vshrl.u32 %v5250, 7
        %v5252 = vsub.s32 %v5249, %v5251
        %v5253 = vrot.slane %v5245, %v5252
        %v5255 = vunpack.c.l.s4 1966171168
        %v5256 = vunpack.c.0.s8 %v5255
        %v5257 = vlaneseq
        %v5258 = vshrl.u32 %v5257, 7
        %v5259 = vsub.s32 %v5256, %v5258
        %v5260 = vrot.slane %v5246, %v5259
        %v5261 = vcombine.low %v5253, %v5260
        %v5263 = vunpack.c.l.s4 1966171168
        %v5264 = vunpack.c.0.s8 %v5263
        %v5265 = vlaneseq
        %v5266 = vshrl.u32 %v5265, 7
        %v5267 = vsub.s32 %v5264, %v5266
        %v5268 = vrot.slane %v5203, %v5267
        %v5270 = vunpack.c.l.s4 1966171168
        %v5271 = vunpack.c.0.s8 %v5270
        %v5272 = vlaneseq
        %v5273 = vshrl.u32 %v5272, 7
        %v5274 = vsub.s32 %v5271, %v5273
        %v5275 = vrot.slane %v5268, %v5274
        %5276 = vrot.lane.b32.xlu0 %v3409, 112
        %v5277 = vpop.permute.xlu0 %5276
        %v5278 = vsel %vm1094, %v5261, 0
        %v5280 = vsel %vm1094, %v5275, 0
        %v5282 = vsel %vm1390, %v5277, 0
        %5284 = vmatprep.subr.mxu0 0.0
        %5285 = vmatpush1.msra.mxu0 %v5282
        %5286 = vmatprep.subr.mxu0 0.0
        %5287 = vmatpush1.msra.mxu0 0.0
        %5288 = vmatprep.subr.mxu0 0.0
        %5289 = vmatpush1.msra.mxu0 0.0
        %5290 = vmatprep.subr.mxu0 0.0
        %5291 = vmatpush1.msra.mxu0 0.0
        %5292 = vmatprep.subr.mxu0 0.0
        %5293 = vmatpush1.msra.mxu0 0.0
        %5294 = vmatprep.subr.mxu0 0.0
        %5295 = vmatpush1.msra.mxu0 0.0
        %5296 = vmatprep.subr.mxu0 0.0
        %5297 = vmatpush1.msra.mxu0 0.0
        %5298 = vmatprep.subr.mxu0 0.0
        %5299 = vmatpush1.msra.mxu0 0.0
        %5300 = vmatprep.subr.mxu0 0.0
        %5301 = vmatpush1.msra.mxu0 0.0
        %5302 = vmatprep.subr.mxu0 0.0
        %5303 = vmatpush1.msra.mxu0 0.0
        %5304 = vmatprep.subr.mxu0 0.0
        %5305 = vmatpush1.msra.mxu0 0.0
        %5306 = vmatprep.subr.mxu0 0.0
        %5307 = vmatpush1.msra.mxu0 0.0
        %5308 = vmatprep.subr.mxu0 0.0
        %5309 = vmatpush1.msra.mxu0 0.0
        %5310 = vmatprep.subr.mxu0 0.0
        %5311 = vmatpush1.msra.mxu0 0.0
        %5312 = vmatprep.subr.mxu0 0.0
        %5313 = vmatpush1.msra.mxu0 0.0
        %5314 = vmatprep.subr.mxu0 0.0
        %5315 = vmatpush1.msra.mxu0 0.0
        %5316 = vmatprep.subr.mxu0 0.0
        %5317 = vmatpush1.msra.mxu0 0.0
        %5318 = vmatprep.subr.mxu0 0.0
        %5319 = vmatpush1.msra.mxu0 0.0
        %5320 = vmatprep.subr.mxu0 0.0
        %5321 = vmatpush1.msra.mxu0 0.0
        %5322 = vmatprep.subr.mxu0 0.0
        %5323 = vmatpush1.msra.mxu0 0.0
        %5324 = vmatprep.subr.mxu0 0.0
        %5325 = vmatpush1.msra.mxu0 0.0
        %5326 = vmatprep.subr.mxu0 0.0
        %5327 = vmatpush1.msra.mxu0 0.0
        %5328 = vmatprep.subr.mxu0 0.0
        %5329 = vmatpush1.msra.mxu0 0.0
        %5330 = vmatprep.subr.mxu0 0.0
        %5331 = vmatpush1.msra.mxu0 0.0
        %5332 = vmatprep.subr.mxu0 0.0
        %5333 = vmatpush1.msra.mxu0 0.0
        %5334 = vmatprep.subr.mxu0 0.0
        %5335 = vmatpush1.msra.mxu0 0.0
        %5336 = vmatprep.subr.mxu0 0.0
        %5337 = vmatpush1.msra.mxu0 0.0
        %5338 = vmatprep.subr.mxu0 0.0
        %5339 = vmatpush1.msra.mxu0 0.0
        %5340 = vmatprep.subr.mxu0 0.0
        %5341 = vmatpush1.msra.mxu0 0.0
        %5342 = vmatprep.subr.mxu0 0.0
        %5343 = vmatpush1.msra.mxu0 0.0
        %5344 = vmatprep.subr.mxu0 0.0
        %5345 = vmatpush1.msra.mxu0 0.0
        %5346 = vmatprep.subr.mxu0 0.0
        %5347 = vmatpush1.msra.mxu0 0.0
        %5348 = vmatprep.mubr.f32.mxu0 0.0
        %5349 = vmatmul.mubr.f32.gmra.mrb[0].mxu0 %v5278
        %v5350 = vpop.f32.mrb[0].mxu0
        %v5351 = vadd.f32 0.0, %v5350
        %v5352 = vpop.f32.mrb[0].mxu0
        %5353 = vmatprep.mubr.f32.mxu0 0.0
        %5354 = vmatmul.mubr.f32.gmra.mrb[0].mxu0 %v5280
        %v5355 = vpop.f32.mrb[0].mxu0
        %v5356 = vadd.f32 0.0, %v5355
        %v5357 = vpop.f32.mrb[0].mxu0
        %5358 = vdwg.mxu0
        %5359 = vrot.lane.b32.xlu0 %v3269, 104
        %v5360 = vpop.permute.xlu0 %5359
        %5361 = vrot.lane.b32.xlu0 %v3339, 104
        %v5362 = vpop.permute.xlu0 %5361
        %v5363 = vsel %vm897, %v5360, 0
        %v5365 = vsel %vm897, %v5362, 0
        %5367 = vmatprep.subr.mxu0 0.0
        %5368 = vmatpush1.xpose.msra.mxu0 %v5365
        %5369 = vmatprep.subr.mxu0 0.0
        %5370 = vmatpush1.xpose.msra.mxu0 0.0
        %5371 = vmatprep.subr.mxu0 0.0
        %5372 = vmatpush1.xpose.msra.mxu0 0.0
        %5373 = vmatprep.subr.mxu0 0.0
        %5374 = vmatpush1.xpose.msra.mxu0 0.0
        %5375 = vmatprep.subr.mxu0 0.0
        %5376 = vmatpush1.xpose.msra.mxu0 0.0
        %5377 = vmatprep.subr.mxu0 0.0
        %5378 = vmatpush1.xpose.msra.mxu0 0.0
        %5379 = vmatprep.subr.mxu0 0.0
        %5380 = vmatpush1.xpose.msra.mxu0 0.0
        %5381 = vmatprep.subr.mxu0 0.0
        %5382 = vmatpush1.xpose.msra.mxu0 0.0
        %5383 = vmatprep.subr.mxu0 0.0
        %5384 = vmatpush1.xpose.msra.mxu0 0.0
        %5385 = vmatprep.subr.mxu0 0.0
        %5386 = vmatpush1.xpose.msra.mxu0 0.0
        %5387 = vmatprep.subr.mxu0 0.0
        %5388 = vmatpush1.xpose.msra.mxu0 0.0
        %5389 = vmatprep.subr.mxu0 0.0
        %5390 = vmatpush1.xpose.msra.mxu0 0.0
        %5391 = vmatprep.subr.mxu0 0.0
        %5392 = vmatpush1.xpose.msra.mxu0 0.0
        %5393 = vmatprep.subr.mxu0 0.0
        %5394 = vmatpush1.xpose.msra.mxu0 0.0
        %5395 = vmatprep.subr.mxu0 0.0
        %5396 = vmatpush1.xpose.msra.mxu0 0.0
        %5397 = vmatprep.subr.mxu0 0.0
        %5398 = vmatpush1.xpose.msra.mxu0 0.0
        %5399 = vmatprep.subr.mxu0 0.0
        %5400 = vmatpush1.xpose.msra.mxu0 0.0
        %5401 = vmatprep.subr.mxu0 0.0
        %5402 = vmatpush1.xpose.msra.mxu0 0.0
        %5403 = vmatprep.subr.mxu0 0.0
        %5404 = vmatpush1.xpose.msra.mxu0 0.0
        %5405 = vmatprep.subr.mxu0 0.0
        %5406 = vmatpush1.xpose.msra.mxu0 0.0
        %5407 = vmatprep.subr.mxu0 0.0
        %5408 = vmatpush1.xpose.msra.mxu0 0.0
        %5409 = vmatprep.subr.mxu0 0.0
        %5410 = vmatpush1.xpose.msra.mxu0 0.0
        %5411 = vmatprep.subr.mxu0 0.0
        %5412 = vmatpush1.xpose.msra.mxu0 0.0
        %5413 = vmatprep.subr.mxu0 0.0
        %5414 = vmatpush1.xpose.msra.mxu0 0.0
        %5415 = vmatprep.subr.mxu0 0.0
        %5416 = vmatpush1.xpose.msra.mxu0 0.0
        %5417 = vmatprep.subr.mxu0 0.0
        %5418 = vmatpush1.xpose.msra.mxu0 0.0
        %5419 = vmatprep.subr.mxu0 0.0
        %5420 = vmatpush1.xpose.msra.mxu0 0.0
        %5421 = vmatprep.subr.mxu0 0.0
        %5422 = vmatpush1.xpose.msra.mxu0 0.0
        %5423 = vmatprep.subr.mxu0 0.0
        %5424 = vmatpush1.xpose.msra.mxu0 0.0
        %5425 = vmatprep.subr.mxu0 0.0
        %5426 = vmatpush1.xpose.msra.mxu0 0.0
        %5427 = vmatprep.subr.mxu0 0.0
        %5428 = vmatpush1.xpose.msra.mxu0 0.0
        %5429 = vmatprep.subr.mxu0 0.0
        %5430 = vmatpush1.xpose.msra.mxu0 0.0
        %5431 = vmatprep.mubr.f32.mxu0 0.0
        %5432 = vmatmul.mubr.f32.gmra.mrb[0].mxu0 %v5363
        %v5433 = vpop.f32.mrb[0].mxu0
        %v5434 = vadd.f32 0.0, %v5433
        %v5435 = vpop.f32.mrb[0].mxu0
        %5436 = vdwg.mxu0
        %v5437 = vmul.f32 %v5434, 0.35355338
        %v5440 = vunpack.c.l.s4 1966171168
        %v5441 = vunpack.c.0.s8 %v5440
        %v5442 = vlaneseq
        %v5443 = vshrl.u32 %v5442, 7
        %v5444 = vsub.s32 %v5441, %v5443
        %v5445 = vrot.slane %v5437, %v5444
        %v5446 = vcombine.high %v5445, %v5445
        %v5448 = vunpack.c.l.s4 1966171168
        %v5449 = vunpack.c.0.s8 %v5448
        %v5450 = vlaneseq
        %v5451 = vshrl.u32 %v5450, 7
        %v5452 = vsub.s32 %v5449, %v5451
        %v5453 = vrot.slane %v5445, %v5452
        %v5455 = vunpack.c.l.s4 1966171168
        %v5456 = vunpack.c.0.s8 %v5455
        %v5457 = vlaneseq
        %v5458 = vshrl.u32 %v5457, 7
        %v5459 = vsub.s32 %v5456, %v5458
        %v5460 = vrot.slane %v5446, %v5459
        %v5461 = vcombine.high %v5453, %v5453
        %v5462 = vlaneseq
        %v5463 = vshrl.u32 %v5462, 7
        %v5464 = vsub.s32 0, %v5463
        %v5465 = vrot.slane %v5453, %v5464
        %v5466 = vlaneseq
        %v5467 = vshrl.u32 %v5466, 7
        %v5468 = vsub.s32 0, %v5467
        %v5469 = vrot.slane %v5460, %v5468
        %v5470 = vlaneseq
        %v5471 = vshrl.u32 %v5470, 7
        %v5472 = vsub.s32 0, %v5471
        %v5473 = vrot.slane %v5461, %v5472
        %v5475 = vunpack.c.l.s4 1966171168
        %v5476 = vunpack.c.0.s8 %v5475
        %v5477 = vlaneseq
        %v5478 = vshrl.u32 %v5477, 7
        %v5479 = vsub.s32 %v5476, %v5478
        %v5480 = vrot.slane %v5465, %v5479
        %v5481 = vcombine.high %v5480, %v5480
        %v5483 = vunpack.c.l.s4 1966171168
        %v5484 = vunpack.c.0.s8 %v5483
        %v5485 = vlaneseq
        %v5486 = vshrl.u32 %v5485, 7
        %v5487 = vsub.s32 %v5484, %v5486
        %v5488 = vrot.slane %v5480, %v5487
        %v5490 = vunpack.c.l.s4 1966171168
        %v5491 = vunpack.c.0.s8 %v5490
        %v5492 = vlaneseq
        %v5493 = vshrl.u32 %v5492, 7
        %v5494 = vsub.s32 %v5491, %v5493
        %v5495 = vrot.slane %v5481, %v5494
        %v5496 = vcombine.high %v5488, %v5488
        %v5498 = vunpack.c.l.s4 1966171168
        %v5499 = vunpack.c.0.s8 %v5498
        %v5500 = vlaneseq
        %v5501 = vshrl.u32 %v5500, 7
        %v5502 = vsub.s32 %v5499, %v5501
        %v5503 = vrot.slane %v5469, %v5502
        %v5504 = vcombine.high %v5503, %v5503
        %v5506 = vunpack.c.l.s4 1966171168
        %v5507 = vunpack.c.0.s8 %v5506
        %v5508 = vlaneseq
        %v5509 = vshrl.u32 %v5508, 7
        %v5510 = vsub.s32 %v5507, %v5509
        %v5511 = vrot.slane %v5503, %v5510
        %v5513 = vunpack.c.l.s4 1966171168
        %v5514 = vunpack.c.0.s8 %v5513
        %v5515 = vlaneseq
        %v5516 = vshrl.u32 %v5515, 7
        %v5517 = vsub.s32 %v5514, %v5516
        %v5518 = vrot.slane %v5504, %v5517
        %v5519 = vcombine.high %v5511, %v5511
        %v5521 = vunpack.c.l.s4 1966171168
        %v5522 = vunpack.c.0.s8 %v5521
        %v5523 = vlaneseq
        %v5524 = vshrl.u32 %v5523, 7
        %v5525 = vsub.s32 %v5522, %v5524
        %v5526 = vrot.slane %v5473, %v5525
        %v5527 = vcombine.high %v5526, %v5526
        %v5529 = vunpack.c.l.s4 1966171168
        %v5530 = vunpack.c.0.s8 %v5529
        %v5531 = vlaneseq
        %v5532 = vshrl.u32 %v5531, 7
        %v5533 = vsub.s32 %v5530, %v5532
        %v5534 = vrot.slane %v5526, %v5533
        %v5536 = vunpack.c.l.s4 1966171168
        %v5537 = vunpack.c.0.s8 %v5536
        %v5538 = vlaneseq
        %v5539 = vshrl.u32 %v5538, 7
        %v5540 = vsub.s32 %v5537, %v5539
        %v5541 = vrot.slane %v5527, %v5540
        %v5542 = vcombine.high %v5534, %v5534
        %v5552 = vsel %vm3603, -1e+30, %v5488
        %v5553 = vsel %vm3604, -1e+30, %v5495
        %v5554 = vsel %vm3605, -1e+30, %v5496
        %v5555 = vsel %vm3603, -1e+30, %v5511
        %v5556 = vsel %vm3604, -1e+30, %v5518
        %v5557 = vsel %vm3605, -1e+30, %v5519
        %v5558 = vsel %vm3603, -1e+30, %v5534
        %v5559 = vsel %vm3604, -1e+30, %v5541
        %v5560 = vsel %vm3605, -1e+30, %v5542
        %v5570 = vcombine.low %v5552, %v5553
        %v5571 = vcombine.low %v5554, %v5555
        %v5572 = vcombine.low %v5556, %v5557
        %v5573 = vcombine.low %v5558, %v5559
        %v5575 = vunpack.c.l.s4 1966171168
        %v5576 = vunpack.c.0.s8 %v5575
        %v5577 = vlaneseq
        %v5578 = vshrl.u32 %v5577, 7
        %v5579 = vsub.s32 %v5576, %v5578
        %v5580 = vrot.slane %v5570, %v5579
        %v5582 = vunpack.c.l.s4 1966171168
        %v5583 = vunpack.c.0.s8 %v5582
        %v5584 = vlaneseq
        %v5585 = vshrl.u32 %v5584, 7
        %v5586 = vsub.s32 %v5583, %v5585
        %v5587 = vrot.slane %v5571, %v5586
        %v5589 = vunpack.c.l.s4 1966171168
        %v5590 = vunpack.c.0.s8 %v5589
        %v5591 = vlaneseq
        %v5592 = vshrl.u32 %v5591, 7
        %v5593 = vsub.s32 %v5590, %v5592
        %v5594 = vrot.slane %v5572, %v5593
        %v5596 = vunpack.c.l.s4 1966171168
        %v5597 = vunpack.c.0.s8 %v5596
        %v5598 = vlaneseq
        %v5599 = vshrl.u32 %v5598, 7
        %v5600 = vsub.s32 %v5597, %v5599
        %v5601 = vrot.slane %v5573, %v5600
        %v5602 = vcombine.low %v5580, %v5587
        %v5603 = vcombine.low %v5594, %v5601
        %v5605 = vunpack.c.l.s4 1966171168
        %v5606 = vunpack.c.0.s8 %v5605
        %v5607 = vlaneseq
        %v5608 = vshrl.u32 %v5607, 7
        %v5609 = vsub.s32 %v5606, %v5608
        %v5610 = vrot.slane %v5602, %v5609
        %v5612 = vunpack.c.l.s4 1966171168
        %v5613 = vunpack.c.0.s8 %v5612
        %v5614 = vlaneseq
        %v5615 = vshrl.u32 %v5614, 7
        %v5616 = vsub.s32 %v5613, %v5615
        %v5617 = vrot.slane %v5603, %v5616
        %v5618 = vcombine.low %v5610, %v5617
        %v5620 = vunpack.c.l.s4 1966171168
        %v5621 = vunpack.c.0.s8 %v5620
        %v5622 = vlaneseq
        %v5623 = vshrl.u32 %v5622, 7
        %v5624 = vsub.s32 %v5621, %v5623
        %v5625 = vrot.slane %v5560, %v5624
        %v5627 = vunpack.c.l.s4 1966171168
        %v5628 = vunpack.c.0.s8 %v5627
        %v5629 = vlaneseq
        %v5630 = vshrl.u32 %v5629, 7
        %v5631 = vsub.s32 %v5628, %v5630
        %v5632 = vrot.slane %v5625, %v5631
        %v5635 = vsel %vm1094, %v5618, -inf
        %5636 = vmax.xlane.f32.xlu0 %v5635
        %v5637 = vpop.xlane.xlu0 %5636
        %v5638 = vsel %vm1098, %v5632, -inf
        %5639 = vmax.xlane.f32.xlu0 %v5638
        %v5640 = vpop.xlane.xlu0 %5639
        %v5643 = vlaneseq
        %v5644 = vshrl.u32 %v5643, 7
        %v5645 = vsub.s32 0, %v5644
        %v5646 = vrot.slane %v5637, %v5645
        %v5647 = vlaneseq
        %v5648 = vshrl.u32 %v5647, 7
        %v5649 = vsub.s32 1, %v5648
        %v5650 = vrot.slane %v5637, %v5649
        %v5651 = vlaneseq
        %v5652 = vshrl.u32 %v5651, 7
        %v5653 = vsub.s32 2, %v5652
        %v5654 = vrot.slane %v5637, %v5653
        %v5655 = vlaneseq
        %v5656 = vshrl.u32 %v5655, 7
        %v5657 = vsub.s32 3, %v5656
        %v5658 = vrot.slane %v5637, %v5657
        %v5659 = vlaneseq
        %v5660 = vshrl.u32 %v5659, 7
        %v5661 = vsub.s32 4, %v5660
        %v5662 = vrot.slane %v5637, %v5661
        %v5663 = vlaneseq
        %v5664 = vshrl.u32 %v5663, 7
        %v5665 = vsub.s32 5, %v5664
        %v5666 = vrot.slane %v5637, %v5665
        %v5667 = vlaneseq
        %v5668 = vshrl.u32 %v5667, 7
        %v5669 = vsub.s32 6, %v5668
        %v5670 = vrot.slane %v5637, %v5669
        %v5671 = vlaneseq
        %v5672 = vshrl.u32 %v5671, 7
        %v5673 = vsub.s32 7, %v5672
        %v5674 = vrot.slane %v5637, %v5673
        %v5675 = vlaneseq
        %v5676 = vshrl.u32 %v5675, 7
        %v5677 = vsub.s32 0, %v5676
        %v5678 = vrot.slane %v5640, %v5677
        %v5688 = vsub.f32 %v5552, %v5646
        %v5689 = vsub.f32 %v5553, %v5650
        %v5690 = vsub.f32 %v5554, %v5654
        %v5691 = vsub.f32 %v5555, %v5658
        %v5692 = vsub.f32 %v5556, %v5662
        %v5693 = vsub.f32 %v5557, %v5666
        %v5694 = vsub.f32 %v5558, %v5670
        %v5695 = vsub.f32 %v5559, %v5674
        %v5696 = vsub.f32 %v5560, %v5678
        %v5697 = vmul.f32 %v5688, 1.442695
        %v5698 = vpow.pop %v5697
        %v5699 = vmul.f32 %v5689, 1.442695
        %v5700 = vpow.pop %v5699
        %v5701 = vmul.f32 %v5690, 1.442695
        %v5702 = vpow.pop %v5701
        %v5703 = vmul.f32 %v5691, 1.442695
        %v5704 = vpow.pop %v5703
        %v5705 = vmul.f32 %v5692, 1.442695
        %v5706 = vpow.pop %v5705
        %v5707 = vmul.f32 %v5693, 1.442695
        %v5708 = vpow.pop %v5707
        %v5709 = vmul.f32 %v5694, 1.442695
        %v5710 = vpow.pop %v5709
        %v5711 = vmul.f32 %v5695, 1.442695
        %v5712 = vpow.pop %v5711
        %v5713 = vmul.f32 %v5696, 1.442695
        %v5714 = vpow.pop %v5713
        %v5724 = vcombine.low %v5698, %v5700
        %v5725 = vcombine.low %v5702, %v5704
        %v5726 = vcombine.low %v5706, %v5708
        %v5727 = vcombine.low %v5710, %v5712
        %v5729 = vunpack.c.l.s4 1966171168
        %v5730 = vunpack.c.0.s8 %v5729
        %v5731 = vlaneseq
        %v5732 = vshrl.u32 %v5731, 7
        %v5733 = vsub.s32 %v5730, %v5732
        %v5734 = vrot.slane %v5724, %v5733
        %v5736 = vunpack.c.l.s4 1966171168
        %v5737 = vunpack.c.0.s8 %v5736
        %v5738 = vlaneseq
        %v5739 = vshrl.u32 %v5738, 7
        %v5740 = vsub.s32 %v5737, %v5739
        %v5741 = vrot.slane %v5725, %v5740
        %v5743 = vunpack.c.l.s4 1966171168
        %v5744 = vunpack.c.0.s8 %v5743
        %v5745 = vlaneseq
        %v5746 = vshrl.u32 %v5745, 7
        %v5747 = vsub.s32 %v5744, %v5746
        %v5748 = vrot.slane %v5726, %v5747
        %v5750 = vunpack.c.l.s4 1966171168
        %v5751 = vunpack.c.0.s8 %v5750
        %v5752 = vlaneseq
        %v5753 = vshrl.u32 %v5752, 7
        %v5754 = vsub.s32 %v5751, %v5753
        %v5755 = vrot.slane %v5727, %v5754
        %v5756 = vcombine.low %v5734, %v5741
        %v5757 = vcombine.low %v5748, %v5755
        %v5759 = vunpack.c.l.s4 1966171168
        %v5760 = vunpack.c.0.s8 %v5759
        %v5761 = vlaneseq
        %v5762 = vshrl.u32 %v5761, 7
        %v5763 = vsub.s32 %v5760, %v5762
        %v5764 = vrot.slane %v5756, %v5763
        %v5766 = vunpack.c.l.s4 1966171168
        %v5767 = vunpack.c.0.s8 %v5766
        %v5768 = vlaneseq
        %v5769 = vshrl.u32 %v5768, 7
        %v5770 = vsub.s32 %v5767, %v5769
        %v5771 = vrot.slane %v5757, %v5770
        %v5772 = vcombine.low %v5764, %v5771
        %v5774 = vunpack.c.l.s4 1966171168
        %v5775 = vunpack.c.0.s8 %v5774
        %v5776 = vlaneseq
        %v5777 = vshrl.u32 %v5776, 7
        %v5778 = vsub.s32 %v5775, %v5777
        %v5779 = vrot.slane %v5714, %v5778
        %v5781 = vunpack.c.l.s4 1966171168
        %v5782 = vunpack.c.0.s8 %v5781
        %v5783 = vlaneseq
        %v5784 = vshrl.u32 %v5783, 7
        %v5785 = vsub.s32 %v5782, %v5784
        %v5786 = vrot.slane %v5779, %v5785
        %v5789 = vsel %vm1094, %v5772, 0.0
        %5790 = vadd.xlane.f32.xlu0 %v5789
        %v5791 = vpop.xlane.xlu0 %5790
        %v5792 = vsel %vm1098, %v5786, 0.0
        %5793 = vadd.xlane.f32.xlu0 %v5792
        %v5794 = vpop.xlane.xlu0 %5793
        %v5795 = vrcp.pop %v5791
        %v5796 = vrcp.pop %v5794
        %v5799 = vlaneseq
        %v5800 = vshrl.u32 %v5799, 7
        %v5801 = vsub.s32 0, %v5800
        %v5802 = vrot.slane %v5795, %v5801
        %v5803 = vlaneseq
        %v5804 = vshrl.u32 %v5803, 7
        %v5805 = vsub.s32 1, %v5804
        %v5806 = vrot.slane %v5795, %v5805
        %v5807 = vlaneseq
        %v5808 = vshrl.u32 %v5807, 7
        %v5809 = vsub.s32 2, %v5808
        %v5810 = vrot.slane %v5795, %v5809
        %v5811 = vlaneseq
        %v5812 = vshrl.u32 %v5811, 7
        %v5813 = vsub.s32 3, %v5812
        %v5814 = vrot.slane %v5795, %v5813
        %v5815 = vlaneseq
        %v5816 = vshrl.u32 %v5815, 7
        %v5817 = vsub.s32 4, %v5816
        %v5818 = vrot.slane %v5795, %v5817
        %v5819 = vlaneseq
        %v5820 = vshrl.u32 %v5819, 7
        %v5821 = vsub.s32 5, %v5820
        %v5822 = vrot.slane %v5795, %v5821
        %v5823 = vlaneseq
        %v5824 = vshrl.u32 %v5823, 7
        %v5825 = vsub.s32 6, %v5824
        %v5826 = vrot.slane %v5795, %v5825
        %v5827 = vlaneseq
        %v5828 = vshrl.u32 %v5827, 7
        %v5829 = vsub.s32 7, %v5828
        %v5830 = vrot.slane %v5795, %v5829
        %v5831 = vlaneseq
        %v5832 = vshrl.u32 %v5831, 7
        %v5833 = vsub.s32 0, %v5832
        %v5834 = vrot.slane %v5796, %v5833
        %v5844 = vmul.f32 %v5698, %v5802
        %v5845 = vmul.f32 %v5700, %v5806
        %v5846 = vmul.f32 %v5702, %v5810
        %v5847 = vmul.f32 %v5704, %v5814
        %v5848 = vmul.f32 %v5706, %v5818
        %v5849 = vmul.f32 %v5708, %v5822
        %v5850 = vmul.f32 %v5710, %v5826
        %v5851 = vmul.f32 %v5712, %v5830
        %v5852 = vmul.f32 %v5714, %v5834
        %v5862 = vcombine.low %v5844, %v5845
        %v5863 = vcombine.low %v5846, %v5847
        %v5864 = vcombine.low %v5848, %v5849
        %v5865 = vcombine.low %v5850, %v5851
        %v5867 = vunpack.c.l.s4 1966171168
        %v5868 = vunpack.c.0.s8 %v5867
        %v5869 = vlaneseq
        %v5870 = vshrl.u32 %v5869, 7
        %v5871 = vsub.s32 %v5868, %v5870
        %v5872 = vrot.slane %v5862, %v5871
        %v5874 = vunpack.c.l.s4 1966171168
        %v5875 = vunpack.c.0.s8 %v5874
        %v5876 = vlaneseq
        %v5877 = vshrl.u32 %v5876, 7
        %v5878 = vsub.s32 %v5875, %v5877
        %v5879 = vrot.slane %v5863, %v5878
        %v5881 = vunpack.c.l.s4 1966171168
        %v5882 = vunpack.c.0.s8 %v5881
        %v5883 = vlaneseq
        %v5884 = vshrl.u32 %v5883, 7
        %v5885 = vsub.s32 %v5882, %v5884
        %v5886 = vrot.slane %v5864, %v5885
        %v5888 = vunpack.c.l.s4 1966171168
        %v5889 = vunpack.c.0.s8 %v5888
        %v5890 = vlaneseq
        %v5891 = vshrl.u32 %v5890, 7
        %v5892 = vsub.s32 %v5889, %v5891
        %v5893 = vrot.slane %v5865, %v5892
        %v5894 = vcombine.low %v5872, %v5879
        %v5895 = vcombine.low %v5886, %v5893
        %v5897 = vunpack.c.l.s4 1966171168
        %v5898 = vunpack.c.0.s8 %v5897
        %v5899 = vlaneseq
        %v5900 = vshrl.u32 %v5899, 7
        %v5901 = vsub.s32 %v5898, %v5900
        %v5902 = vrot.slane %v5894, %v5901
        %v5904 = vunpack.c.l.s4 1966171168
        %v5905 = vunpack.c.0.s8 %v5904
        %v5906 = vlaneseq
        %v5907 = vshrl.u32 %v5906, 7
        %v5908 = vsub.s32 %v5905, %v5907
        %v5909 = vrot.slane %v5895, %v5908
        %v5910 = vcombine.low %v5902, %v5909
        %v5912 = vunpack.c.l.s4 1966171168
        %v5913 = vunpack.c.0.s8 %v5912
        %v5914 = vlaneseq
        %v5915 = vshrl.u32 %v5914, 7
        %v5916 = vsub.s32 %v5913, %v5915
        %v5917 = vrot.slane %v5852, %v5916
        %v5919 = vunpack.c.l.s4 1966171168
        %v5920 = vunpack.c.0.s8 %v5919
        %v5921 = vlaneseq
        %v5922 = vshrl.u32 %v5921, 7
        %v5923 = vsub.s32 %v5920, %v5922
        %v5924 = vrot.slane %v5917, %v5923
        %5925 = vrot.lane.b32.xlu0 %v3409, 104
        %v5926 = vpop.permute.xlu0 %5925
        %v5927 = vsel %vm1094, %v5910, 0
        %v5929 = vsel %vm1094, %v5924, 0
        %v5931 = vsel %vm1390, %v5926, 0
        %5933 = vmatprep.subr.mxu0 0.0
        %5934 = vmatpush1.msra.mxu0 %v5931
        %5935 = vmatprep.subr.mxu0 0.0
        %5936 = vmatpush1.msra.mxu0 0.0
        %5937 = vmatprep.subr.mxu0 0.0
        %5938 = vmatpush1.msra.mxu0 0.0
        %5939 = vmatprep.subr.mxu0 0.0
        %5940 = vmatpush1.msra.mxu0 0.0
        %5941 = vmatprep.subr.mxu0 0.0
        %5942 = vmatpush1.msra.mxu0 0.0
        %5943 = vmatprep.subr.mxu0 0.0
        %5944 = vmatpush1.msra.mxu0 0.0
        %5945 = vmatprep.subr.mxu0 0.0
        %5946 = vmatpush1.msra.mxu0 0.0
        %5947 = vmatprep.subr.mxu0 0.0
        %5948 = vmatpush1.msra.mxu0 0.0
        %5949 = vmatprep.subr.mxu0 0.0
        %5950 = vmatpush1.msra.mxu0 0.0
        %5951 = vmatprep.subr.mxu0 0.0
        %5952 = vmatpush1.msra.mxu0 0.0
        %5953 = vmatprep.subr.mxu0 0.0
        %5954 = vmatpush1.msra.mxu0 0.0
        %5955 = vmatprep.subr.mxu0 0.0
        %5956 = vmatpush1.msra.mxu0 0.0
        %5957 = vmatprep.subr.mxu0 0.0
        %5958 = vmatpush1.msra.mxu0 0.0
        %5959 = vmatprep.subr.mxu0 0.0
        %5960 = vmatpush1.msra.mxu0 0.0
        %5961 = vmatprep.subr.mxu0 0.0
        %5962 = vmatpush1.msra.mxu0 0.0
        %5963 = vmatprep.subr.mxu0 0.0
        %5964 = vmatpush1.msra.mxu0 0.0
        %5965 = vmatprep.subr.mxu0 0.0
        %5966 = vmatpush1.msra.mxu0 0.0
        %5967 = vmatprep.subr.mxu0 0.0
        %5968 = vmatpush1.msra.mxu0 0.0
        %5969 = vmatprep.subr.mxu0 0.0
        %5970 = vmatpush1.msra.mxu0 0.0
        %5971 = vmatprep.subr.mxu0 0.0
        %5972 = vmatpush1.msra.mxu0 0.0
        %5973 = vmatprep.subr.mxu0 0.0
        %5974 = vmatpush1.msra.mxu0 0.0
        %5975 = vmatprep.subr.mxu0 0.0
        %5976 = vmatpush1.msra.mxu0 0.0
        %5977 = vmatprep.subr.mxu0 0.0
        %5978 = vmatpush1.msra.mxu0 0.0
        %5979 = vmatprep.subr.mxu0 0.0
        %5980 = vmatpush1.msra.mxu0 0.0
        %5981 = vmatprep.subr.mxu0 0.0
        %5982 = vmatpush1.msra.mxu0 0.0
        %5983 = vmatprep.subr.mxu0 0.0
        %5984 = vmatpush1.msra.mxu0 0.0
        %5985 = vmatprep.subr.mxu0 0.0
        %5986 = vmatpush1.msra.mxu0 0.0
        %5987 = vmatprep.subr.mxu0 0.0
        %5988 = vmatpush1.msra.mxu0 0.0
        %5989 = vmatprep.subr.mxu0 0.0
        %5990 = vmatpush1.msra.mxu0 0.0
        %5991 = vmatprep.subr.mxu0 0.0
        %5992 = vmatpush1.msra.mxu0 0.0
        %5993 = vmatprep.subr.mxu0 0.0
        %5994 = vmatpush1.msra.mxu0 0.0
        %5995 = vmatprep.subr.mxu0 0.0
        %5996 = vmatpush1.msra.mxu0 0.0
        %5997 = vmatprep.mubr.f32.mxu0 0.0
        %5998 = vmatmul.mubr.f32.gmra.mrb[0].mxu0 %v5927
        %v5999 = vpop.f32.mrb[0].mxu0
        %v6000 = vadd.f32 0.0, %v5999
        %v6001 = vpop.f32.mrb[0].mxu0
        %6002 = vmatprep.mubr.f32.mxu0 0.0
        %6003 = vmatmul.mubr.f32.gmra.mrb[0].mxu0 %v5929
        %v6004 = vpop.f32.mrb[0].mxu0
        %v6005 = vadd.f32 0.0, %v6004
        %v6006 = vpop.f32.mrb[0].mxu0
        %6007 = vdwg.mxu0
        %6010 = vrot.lane.b32.xlu0 %v4702, 8
        %v6011 = vpop.permute.xlu0 %6010
        %6012 = vrot.lane.b32.xlu0 %v4707, 8
        %v6013 = vpop.permute.xlu0 %6012
        %6018 = vrot.lane.b32.xlu0 %v5351, 16
        %v6019 = vpop.permute.xlu0 %6018
        %6020 = vrot.lane.b32.xlu0 %v5356, 16
        %v6021 = vpop.permute.xlu0 %6020
        %6026 = vrot.lane.b32.xlu0 %v6000, 24
        %v6027 = vpop.permute.xlu0 %6026
        %6028 = vrot.lane.b32.xlu0 %v6005, 24
        %v6029 = vpop.permute.xlu0 %6028
        %v6032 = vsel %vm897, %v4053, %v6011
        %v6033 = vsel %vm897, %v4058, %v6013
        %v6034 = vsel %vm3181, %v6032, %v6019
        %v6035 = vsel %vm3181, %v6033, %v6021
        %v6036 = vsel %vm3184, %v6034, %v6027
        %v6037 = vsel %vm3184, %v6035, %v6029
        %6038 = vst.msk [vmem:[%s532] sm:$0xff] %vm677, %v6036
        %6039 = vst.msk [vmem:[%s532 + $0x8] sm:$0x1] %vm3188, %v6037
        %p6040 = scmp.lt.s32.totalorder %s26, 1
        %s6041 = scalar_select %p6040, %s26, 1
        %s6042 = smul.addr %s6041, 2
        %s6043 = smul.addr %s6042, 8
        %s6044 = scalar_lea.vmem %s11, %s6043
        %p6045 = scmp.lt.s32.totalorder %s26, 1
        %s6046 = scalar_select %p6045, %s26, 1
        %s6047 = smul.addr %s6046, 2
        %s6048 = smul.addr %s6047, 8
        %s6049 = scalar_lea.vmem %s12, %s6048
        // Predicated region
        $region77: #{tpu_custom_call.1} parent=63 // pred_check
          %p6050 = pneg %p300
        $region78: #{tpu_custom_call.1} parent=63 // pred_check_branch
          %6052 = sbr.rel (%p6050) target = $region80
        $region79: #{tpu_custom_call.1} parent=63 // pred_region
          _
        $region80: #{tpu_custom_call.1} parent=63 // pred_fallthru
          _
        // Predicated region
        $region81: #{tpu_custom_call.1} parent=63 // pred_check
          %p6053 = pneg %p326
        $region82: #{tpu_custom_call.1} parent=63 // pred_check_branch
          %6055 = sbr.rel (%p6053) target = $region84
        $region83: #{tpu_custom_call.1} parent=63 // pred_region
          _
        $region84: #{tpu_custom_call.1} parent=63 // pred_fallthru
          _
      $region64: #{tpu_custom_call.1} parent=5 // pred_fallthru
        _
      %p6056 = scmp.le.s32.totalorder 2, %s21
      // Predicated region
      $region85: #{tpu_custom_call.1} parent=5 // pred_check
        %p6057 = pneg %p6056
      $region86: #{tpu_custom_call.1} parent=5 // pred_check_branch
        %6059 = sbr.rel (%p6057) target = $region88
      $region87: #{tpu_custom_call.1} parent=5 // pred_region
        %s6060 = ssub.s32 %s21, 2
        // Predicated region
        $region89: #{tpu_custom_call.1} parent=87 // pred_check
          %p6061 = pneg %p306
        $region90: #{tpu_custom_call.1} parent=87 // pred_check_branch
          %6063 = sbr.rel (%p6061) target = $region92
        $region91: #{tpu_custom_call.1} parent=87 // pred_region
          %p6064 = scmp.lt.s32.totalorder %s27, 1
          %s6065 = scalar_select %p6064, %s27, 1
          %s6066 = smul.addr %s6065, 2
          %s6067 = smul.addr %s6066, 8
          %s6068 = scalar_lea.vmem %s11, %s6067
        $region92: #{tpu_custom_call.1} parent=87 // pred_fallthru
          _
        // Predicated region
        $region93: #{tpu_custom_call.1} parent=87 // pred_check
          %p6069 = pneg %p332
        $region94: #{tpu_custom_call.1} parent=87 // pred_check_branch
          %6071 = sbr.rel (%p6069) target = $region96
        $region95: #{tpu_custom_call.1} parent=87 // pred_region
          %p6072 = scmp.lt.s32.totalorder %s27, 1
          %s6073 = scalar_select %p6072, %s27, 1
          %s6074 = smul.addr %s6073, 2
          %s6075 = smul.addr %s6074, 8
          %s6076 = scalar_lea.vmem %s12, %s6075
        $region96: #{tpu_custom_call.1} parent=87 // pred_fallthru
          _
      $region88: #{tpu_custom_call.1} parent=5 // pred_fallthru
        _
    $region6: #{tpu_custom_call.1} parent=1 // loop_footer
      %s25 = sadd.s32 1, %s21
    $region7: #{tpu_custom_call.1} parent=1 // loop_footer_branch
      %20 = sbr.rel target = $region3
    $region8: #{tpu_custom_call.1} parent=1 // loop_exit
      _
    %6077 = vsyncpa [#allocation3], 1
    %s6078 = scalar_lea.sflag [#allocation3], 1
    %6079 = vsyncpa %s6078, 1
    %6080 = vsyncpa [#allocation5], 1

</llo_original>
